<compile_context>
chip_gen: v7x
topology: tpu7x:2x2x1
jax: 0.10.0
libtpu: 0.0.40
codegen_flags: <defaults>
</compile_context>

<pallas_src>
import math
import functools
import numpy as np
import jax
import jax.numpy as jnp
from jax import lax
from jax.experimental import pallas as pl
from jax.experimental.pallas import tpu as pltpu

# ---- small model dims consistent with the module's forward ----
S = 4        # document segments (LSTM time steps)
B = 2        # documents (batch)
L = 8        # tokens per segment (BERT seq len), power of two
V = 64       # vocab size
H = 32       # bert.config.hidden_size
NH = 2       # attention heads
HD = H // NH
F = 64       # BERT FFN intermediate size
D = 16       # LSTM hidden_dim
C = 4        # num_labels
LN_EPS = 1e-12

NLd = S * L                       # 32 token rows per document
LOG2_L = int(math.log2(L))
assert (1 << LOG2_L) == L

LANES = 128


def _round_up(x, m):
    return (x + m - 1) // m * m


DATA_ROWS = _round_up(NLd + 1, 8)   # 40: rows 0..31 -> token id in lane 0; row 32 -> mask


def _weight_layout():
    """8-row-aligned offsets of every parameter inside the packed weight slab."""
    off, r = {}, 0

    def add(name, rows):
        nonlocal r
        off[name] = r
        r += _round_up(rows, 8)

    add('word_emb', V)          # (V, H)
    add('pos_emb', NLd)         # (NLd, H) pre-tiled positional table
    add('ln', 6)                # rows 0..5: ln0 g/b, ln1 g/b, ln2 g/b
    for h in range(NH):         # head-major, tile-aligned attention weights
        add(f'wq{h}', H)        # (H, HD)
        add(f'wk{h}', H)
        add(f'wv{h}', H)
        add(f'wo{h}', HD)       # (HD, H)
    add('attn_b', 7)            # rows 3h..3h+2: bq/bk/bv head h; row 6: bo
    add('w1', H)                # (H, F)
    add('w2', F)                # (F, H)
    add('wih', H)               # (H, 4D), i/f/o cols pre-scaled by 0.5
    add('whh', D)               # (D, 4D), same scaling
    add('wl', D)                # (D, 128) classifier, lane-padded
    add('misc_b', 4)            # rows: b1, b2, b_lstm(scaled), bl(lane-padded)
    return off, r


W_OFF, W_ROWS = _weight_layout()
assert W_ROWS % 8 == 0


def _layernorm(x, gamma, beta):
    mu = jnp.mean(x, axis=-1, keepdims=True)
    var = jnp.mean(jnp.square(x - mu), axis=-1, keepdims=True)
    return (x - mu) * lax.rsqrt(var + LN_EPS) * gamma + beta


# ----------------------------------------------------------------------------
# Fused per-document kernel: embedding -> 1 transformer layer (block-diagonal
# attention over the document's segments) -> CLS rows -> LSTM -> ReLU -> Linear.
# ----------------------------------------------------------------------------
def docbert_kernel(data_ref, w_ref, out_ref):
    f32 = jnp.float32

    def wslice(name, rows, cols):
        o = W_OFF[name]
        return w_ref[o:o + rows, 0:cols]

    # ---- unpack per-document data ----
    ids = data_ref[0:NLd, 0:1]                                # (32, 1) int32
    mask_row = data_ref[NLd:NLd + 1, 0:NLd].astype(f32)       # (1, 32) key-axis mask

    # ---- embedding: one-hot token lookup (MXU) + pre-tiled position table ----
    tok_oh = (ids == lax.broadcasted_iota(jnp.int32, (NLd, V), 1)).astype(f32)
    x = jnp.dot(tok_oh, wslice('word_emb', V, H), preferred_element_type=f32)
    x = x + wslice('pos_emb', NLd, H)

    lnb = wslice('ln', 8, H)                                   # rows 0..5 used
    x = _layernorm(x, lnb[0:1, :], lnb[1:2, :])

    # ---- attention: block-diagonal same-segment mask over the document ----
    ri = lax.broadcasted_iota(jnp.int32, (NLd, NLd), 0) >> LOG2_L   # query segment
    ci = lax.broadcasted_iota(jnp.int32, (NLd, NLd), 1) >> LOG2_L   # key segment
    bias = jnp.where(ri == ci, (1.0 - mask_row) * (-1e9), -1e9)     # (32, 32)

    ab = wslice('attn_b', 8, H)
    scale = 1.0 / math.sqrt(HD)
    attn = jnp.zeros((NLd, H), f32)
    for h in range(NH):                                        # NH=2, static unroll
        q = jnp.dot(x, wslice(f'wq{h}', H, HD),
                    preferred_element_type=f32) + ab[3 * h + 0:3 * h + 1, 0:HD]
        k = jnp.dot(x, wslice(f'wk{h}', H, HD),
                    preferred_element_type=f32) + ab[3 * h + 1:3 * h + 2, 0:HD]
        v = jnp.dot(x, wslice(f'wv{h}', H, HD),
                    preferred_element_type=f32) + ab[3 * h + 2:3 * h + 3, 0:HD]
        # contract on last dims -> no explicit transpose through the XLU
        s = lax.dot_general(q, k, (((1,), (1,)), ((), ())),
                            preferred_element_type=f32) * scale + bias
        m = jnp.max(s, axis=-1, keepdims=True)
        e = jnp.exp(s - m)
        p = e / jnp.sum(e, axis=-1, keepdims=True)             # exact softmax
        ctx = jnp.dot(p, v, preferred_element_type=f32)        # (32, 16)
        attn = attn + jnp.dot(ctx, wslice(f'wo{h}', HD, H),
                              preferred_element_type=f32)
    attn = attn + ab[6:7, 0:H]
    x1 = _layernorm(x + attn, lnb[2:3, :], lnb[3:4, :])

    misc = w_ref[W_OFF['misc_b']:W_OFF['misc_b'] + 8, 0:LANES]  # (8, 128) biases
    ffn = jax.nn.gelu(jnp.dot(x1, wslice('w1', H, F), preferred_element_type=f32)
                      + misc[0:1, 0:F], approximate=True)
    ffn = jnp.dot(ffn, wslice('w2', F, H), preferred_element_type=f32) + misc[1:2, 0:H]
    x2 = _layernorm(x1 + ffn, lnb[4:5, :], lnb[5:6, :])         # (32, 32)

    # ---- CLS rows (0, L, 2L, ...) via a selection matmul ----
    srow = lax.broadcasted_iota(jnp.int32, (S, NLd), 0)
    scol = lax.broadcasted_iota(jnp.int32, (S, NLd), 1)
    sel = (scol == srow * L).astype(f32)
    cls = jnp.dot(sel, x2, preferred_element_type=f32)          # (4, 32)

    # ---- LSTM: hoisted input projection + unrolled recurrence.
    # i/f/o columns of wih/whh/b were pre-scaled by 0.5 at pack time so a single
    # tanh over the whole gate block yields sigmoid via 0.5*(1 + tanh(z/2)). ----
    gates_x = jnp.dot(cls, wslice('wih', H, 4 * D),
                      preferred_element_type=f32) + misc[2:3, 0:4 * D]   # (4, 64)
    whh = wslice('whh', D, 4 * D)
    h_t = jnp.zeros((1, D), f32)
    c_t = jnp.zeros((1, D), f32)
    for t in range(S):                                          # S=4, static unroll
        g = gates_x[t:t + 1, :] + jnp.dot(h_t, whh, preferred_element_type=f32)
        tg = jnp.tanh(g)                                        # one EUP pass, (1, 4D)
        ig = 0.5 * (1.0 + tg[:, 0 * D:1 * D])
        fg = 0.5 * (1.0 + tg[:, 1 * D:2 * D])
        gg = tg[:, 2 * D:3 * D]
        og = 0.5 * (1.0 + tg[:, 3 * D:4 * D])
        c_t = fg * c_t + ig * gg
        h_t = og * jnp.tanh(c_t)

    hr = jnp.maximum(h_t, 0.0)                                  # ReLU(h_n)
    # classifier weights are lane-padded to 128 -> lane-dense (1, 128) logits row
    logits = jnp.dot(hr, wslice('wl', D, LANES),
                     preferred_element_type=f32) + misc[3:4, :]
    out_ref[...] = jnp.broadcast_to(logits, (8, LANES))         # lane-dense store


# ----------------------------------------------------------------------------
# Wrapper: build slabs, run the grid-over-documents pallas_call.
# ----------------------------------------------------------------------------
def build_data_slab(ids, attn_mask):
    ids_doc = jnp.transpose(ids, (1, 0, 2)).reshape(B, NLd).astype(jnp.int32)
    mask_doc = jnp.transpose(attn_mask, (1, 0, 2)).reshape(B, NLd).astype(jnp.int32)
    data = jnp.zeros((B, DATA_ROWS, LANES), jnp.int32)
    data = data.at[:, :NLd, 0].set(ids_doc)        # token ids down the sublanes
    data = data.at[:, NLd, :NLd].set(mask_doc)     # mask across the lanes
    return data


def docbert_forward(wslab, ids, attn_mask):
    """ids: (S, B, L) int32, attn_mask: (S, B, L) {0,1} -> logits (B, C)."""
    data = build_data_slab(ids, attn_mask)
    out = pl.pallas_call(
        docbert_kernel,
        grid=(B,),
        in_specs=[
            pl.BlockSpec((None, DATA_ROWS, LANES), lambda b: (b, 0, 0)),
            pl.BlockSpec((W_ROWS, LANES), lambda b: (0, 0)),   # weights resident
        ],
        out_specs=pl.BlockSpec((None, 8, LANES), lambda b: (b, 0, 0)),
        out_shape=jax.ShapeDtypeStruct((B, 8, LANES), jnp.float32),
        compiler_params=pltpu.CompilerParams(
            dimension_semantics=("parallel",)),
    )(data, wslab)
    return out[:, 0, :C]


# ----------------------------------------------------------------------------
# Parameters (deterministic, synthetic) + slab packing
# ----------------------------------------------------------------------------
def init_params(key):
    ks = jax.random.split(key, 18)
    bound = 1.0 / math.sqrt(D)

    def ln_p(k):
        k1, k2 = jax.random.split(k)
        return jnp.stack([1.0 + 0.1 * jax.random.normal(k1, (H,)),
                          0.1 * jax.random.normal(k2, (H,))]).astype(jnp.float32)

    def n(k, s, sc=0.05):
        return (jax.random.normal(k, s) * sc).astype(jnp.float32)

    def u(k, s):
        return jax.random.uniform(k, s, jnp.float32, -bound, bound)

    return {
        # synthetic frozen "bert"
        'word_emb': n(ks[0], (V, H)),
        'pos_emb':  n(ks[1], (L, H)),
        'ln0': ln_p(ks[2]),
        'wqkv': n(ks[3], (H, 3 * H)),
        'bqkv': n(ks[4], (1, 3 * H), 0.02),
        'wo':   n(ks[5], (H, H)),
        'bo':   n(ks[6], (1, H), 0.02),
        'ln1': ln_p(ks[7]),
        'w1': n(ks[8], (H, F)),
        'b1': n(ks[9], (1, F), 0.02),
        'w2': n(ks[10], (F, H)),
        'b2': n(ks[11], (1, H), 0.02),
        'ln2': ln_p(ks[12]),
        # LSTM (PyTorch weight_ih/weight_hh transposed for right-multiply,
        # bias_ih + bias_hh folded into 'b'), classifier Linear
        'wih': u(ks[13], (H, 4 * D)),
        'whh': u(ks[14], (D, 4 * D)),
        'b':   u(ks[15], (1, 4 * D)),
        'wl':  u(ks[16], (D, C)),
        'bl':  u(ks[17], (1, C)),
    }


def pack_params(p):
    """Pack all parameters into one lane-dense f32 (W_ROWS, 128) slab."""
    slab = np.zeros((W_ROWS, LANES), np.float32)

    def put(name, arr):
        arr = np.asarray(arr, np.float32)
        r, c = arr.shape
        slab[W_OFF[name]:W_OFF[name] + r, :c] = arr

    put('word_emb', p['word_emb'])
    put('pos_emb', np.tile(np.asarray(p['pos_emb']), (S, 1)))        # row n -> pos n % L
    put('ln', np.concatenate([np.asarray(p['ln0']), np.asarray(p['ln1']),
                              np.asarray(p['ln2'])], axis=0))

    wqkv = np.asarray(p['wqkv'])
    bqkv = np.asarray(p['bqkv'])[0]
    wo = np.asarray(p['wo'])
    attn_b = np.zeros((7, LANES), np.float32)
    for h in range(NH):
        cols = slice(h * HD, (h + 1) * HD)
        put(f'wq{h}', wqkv[:, 0 * H:1 * H][:, cols])
        put(f'wk{h}', wqkv[:, 1 * H:2 * H][:, cols])
        put(f'wv{h}', wqkv[:, 2 * H:3 * H][:, cols])
        put(f'wo{h}', wo[cols, :])
        attn_b[3 * h + 0, :HD] = bqkv[0 * H:1 * H][cols]
        attn_b[3 * h + 1, :HD] = bqkv[1 * H:2 * H][cols]
        attn_b[3 * h + 2, :HD] = bqkv[2 * H:3 * H][cols]
    attn_b[6, :H] = np.asarray(p['bo'])[0]
    put('attn_b', attn_b)

    put('w1', p['w1'])
    put('w2', p['w2'])

    # sigmoid(z) = 0.5*(1 + tanh(z/2)): fold the 0.5 pre-scale into i/f/o columns.
    gscale = np.ones((4 * D,), np.float32)
    gscale[0:2 * D] = 0.5       # i, f
    gscale[3 * D:4 * D] = 0.5   # o
    put('wih', np.asarray(p['wih']) * gscale)
    put('whh', np.asarray(p['whh']) * gscale)

    wl_pad = np.zeros((D, LANES), np.float32)
    wl_pad[:, :C] = np.asarray(p['wl'])
    put('wl', wl_pad)

    misc = np.zeros((4, LANES), np.float32)
    misc[0, :F] = np.asarray(p['b1'])[0]
    misc[1, :H] = np.asarray(p['b2'])[0]
    misc[2, :4 * D] = np.asarray(p['b'])[0] * gscale
    misc[3, :C] = np.asarray(p['bl'])[0]
    put('misc_b', misc)

    return jnp.asarray(slab)


# ----------------------------------------------------------------------------
# Pure-JAX reference for validation (mirrors the PyTorch module's math)
# ----------------------------------------------------------------------------
def ref_forward(params, ids, attn_mask):
    def ln(x, g, b):
        mu = x.mean(-1, keepdims=True)
        var = ((x - mu) ** 2).mean(-1, keepdims=True)
        return (x - mu) * lax.rsqrt(var + LN_EPS) * g + b

    x = params['word_emb'][ids] + params['pos_emb'][None, None]          # (S,B,L,H)
    x = ln(x, params['ln0'][0], params['ln0'][1])
    qkv = x @ params['wqkv'] + params['bqkv'][0]
    q, k, v = qkv[..., :H], qkv[..., H:2 * H], qkv[..., 2 * H:]
    bias = (1.0 - attn_mask)[:, :, None, :] * (-1e9)
    heads = []
    for h in range(NH):
        sl = slice(h * HD, (h + 1) * HD)
        s = jnp.einsum('sbqd,sbkd->sbqk', q[..., sl], k[..., sl]) / math.sqrt(HD) + bias
        p = jax.nn.softmax(s, axis=-1)
        heads.append(jnp.einsum('sbqk,sbkd->sbqd', p, v[..., sl]))
    attn = jnp.concatenate(heads, -1) @ params['wo'] + params['bo'][0]
    x1 = ln(x + attn, params['ln1'][0], params['ln1'][1])
    ffn = jax.nn.gelu(x1 @ params['w1'] + params['b1'][0], approximate=True)
    ffn = ffn @ params['w2'] + params['b2'][0]
    x2 = ln(x1 + ffn, params['ln2'][0], params['ln2'][1])
    cls = x2[:, :, 0, :]                                                 # (S, B, H)

    h = jnp.zeros((B, D), jnp.float32)
    c = jnp.zeros((B, D), jnp.float32)
    for t in range(S):
        gates = cls[t] @ params['wih'] + h @ params['whh'] + params['b'][0]
        i = jax.nn.sigmoid(gates[:, :D])
        f = jax.nn.sigmoid(gates[:, D:2 * D])
        g = jnp.tanh(gates[:, 2 * D:3 * D])
        o = jax.nn.sigmoid(gates[:, 3 * D:])
        c = f * c + i * g
        h = o * jnp.tanh(c)
    hr = jnp.maximum(h, 0.0)
    return hr @ params['wl'] + params['bl'][0]


if __name__ == "__main__":
    key = jax.random.PRNGKey(0)
    pkey, ikey, mkey = jax.random.split(key, 3)
    params = init_params(pkey)
    wslab = pack_params(params)

    ids = jax.random.randint(ikey, (S, B, L), 0, V, dtype=jnp.int32)
    lens = jax.random.randint(mkey, (S, B), 4, L + 1)                    # >=4 valid tokens
    attn_mask = (jnp.arange(L)[None, None, :] < lens[..., None]).astype(jnp.float32)

    fwd = jax.jit(functools.partial(docbert_forward, wslab))
    logits = jax.block_until_ready(fwd(ids, attn_mask))

    ref = ref_forward(params, ids, attn_mask)
    np.testing.assert_allclose(np.asarray(logits), np.asarray(ref), rtol=2e-3, atol=2e-3)
    print("KERNEL_OK")
</pallas_src>

<mosaic_0001>
module attributes {stable_mosaic.version = 11 : i64} {
  func.func @docbert_kernel(%arg0: i32, %arg1: memref<1x40x128xi32, #tpu.memory_space<vmem>>, %arg2: memref<504x128xf32, #tpu.memory_space<vmem>>, %arg3: memref<1x8x128xf32, #tpu.memory_space<vmem>>) attributes {dimension_semantics = [#tpu.dimension_semantics<parallel>], iteration_bounds = array<i64: 2>, scalar_prefetch = 0 : i64, scratch_operands = 0 : i64, tpu.core_type = #tpu.core_type<tc>, window_params = [{transform_indices = @transform_0, window_bounds = array<i64: 1, 40, 128>}, {pipeline_mode = #tpu.pipeline_mode<synchronous>, transform_indices = @transform_1, window_bounds = array<i64: 504, 128>}, {transform_indices = @transform_2, window_bounds = array<i64: 1, 8, 128>}]} {
    %c0 = arith.constant 0 : index
    %c0_0 = arith.constant 0 : index
    %c0_1 = arith.constant 0 : index
    %0 = vector.load %arg1[%c0, %c0_0, %c0_1] : memref<1x40x128xi32, #tpu.memory_space<vmem>>, vector<1x32x1xi32>
    %1 = vector.shape_cast %0 : vector<1x32x1xi32> to vector<32x1xi32>
    %c0_2 = arith.constant 0 : index
    %c32 = arith.constant 32 : index
    %c0_3 = arith.constant 0 : index
    %2 = vector.load %arg1[%c0_2, %c32, %c0_3] : memref<1x40x128xi32, #tpu.memory_space<vmem>>, vector<1x1x32xi32>
    %3 = vector.shape_cast %2 : vector<1x1x32xi32> to vector<1x32xi32>
    %4 = arith.sitofp %3 : vector<1x32xi32> to vector<1x32xf32>
    %5 = tpu.iota {dimensions = array<i32: 1>} : vector<32x64xi32>
    %6 = vector.broadcast %1 : vector<32x1xi32> to vector<32x64xi32>
    %7 = arith.cmpi eq, %6, %5 : vector<32x64xi32>
    %8 = arith.extui %7 : vector<32x64xi1> to vector<32x64xi32>
    %9 = arith.sitofp %8 : vector<32x64xi32> to vector<32x64xf32>
    %c0_4 = arith.constant 0 : index
    %c0_5 = arith.constant 0 : index
    %10 = vector.load %arg2[%c0_4, %c0_5] : memref<504x128xf32, #tpu.memory_space<vmem>>, vector<64x32xf32>
    %cst = arith.constant dense<0.000000e+00> : vector<32x32xf32>
    %11 = tpu.matmul %9, %10, %cst {dimension_numbers = #tpu.dot_dimension_numbers<[1], [0], [0], [1], [0, 0, 1, 1], [], []>} : vector<32x64xf32>, vector<64x32xf32>, vector<32x32xf32> -> vector<32x32xf32>
    %c64 = arith.constant 64 : index
    %c0_6 = arith.constant 0 : index
    %12 = vector.load %arg2[%c64, %c0_6] : memref<504x128xf32, #tpu.memory_space<vmem>>, vector<32x32xf32>
    %13 = arith.addf %11, %12 : vector<32x32xf32>
    %c96 = arith.constant 96 : index
    %c0_7 = arith.constant 0 : index
    %14 = vector.load %arg2[%c96, %c0_7] : memref<504x128xf32, #tpu.memory_space<vmem>>, vector<8x32xf32>
    %15 = vector.extract_strided_slice %14 {offsets = [0, 0], sizes = [1, 32], strides = [1, 1]} : vector<8x32xf32> to vector<1x32xf32>
    %16 = vector.extract_strided_slice %14 {offsets = [1, 0], sizes = [1, 32], strides = [1, 1]} : vector<8x32xf32> to vector<1x32xf32>
    %cst_8 = arith.constant dense<0.000000e+00> : vector<32xf32>
    %17 = vector.multi_reduction <add>, %13, %cst_8 [1] : vector<32x32xf32> to vector<32xf32>
    %18 = vector.shape_cast %17 : vector<32xf32> to vector<32x1xf32>
    %cst_9 = arith.constant 3.200000e+01 : f32
    %19 = vector.broadcast %cst_9 : f32 to vector<32x1xf32>
    %20 = arith.divf %18, %19 : vector<32x1xf32>
    %21 = vector.broadcast %20 : vector<32x1xf32> to vector<32x32xf32>
    %22 = arith.subf %13, %21 : vector<32x32xf32>
    %23 = arith.mulf %22, %22 : vector<32x32xf32>
    %cst_10 = arith.constant dense<0.000000e+00> : vector<32xf32>
    %24 = vector.multi_reduction <add>, %23, %cst_10 [1] : vector<32x32xf32> to vector<32xf32>
    %25 = vector.shape_cast %24 : vector<32xf32> to vector<32x1xf32>
    %cst_11 = arith.constant 3.200000e+01 : f32
    %26 = vector.broadcast %cst_11 : f32 to vector<32x1xf32>
    %27 = arith.divf %25, %26 : vector<32x1xf32>
    %28 = vector.broadcast %20 : vector<32x1xf32> to vector<32x32xf32>
    %29 = arith.subf %13, %28 : vector<32x32xf32>
    %cst_12 = arith.constant 9.99999996E-13 : f32
    %30 = vector.broadcast %cst_12 : f32 to vector<32x1xf32>
    %31 = arith.addf %27, %30 : vector<32x1xf32>
    %32 = math.rsqrt %31 : vector<32x1xf32>
    %33 = vector.broadcast %32 : vector<32x1xf32> to vector<32x32xf32>
    %34 = arith.mulf %29, %33 : vector<32x32xf32>
    %35 = vector.broadcast %15 : vector<1x32xf32> to vector<32x32xf32>
    %36 = arith.mulf %34, %35 : vector<32x32xf32>
    %37 = vector.broadcast %16 : vector<1x32xf32> to vector<32x32xf32>
    %38 = arith.addf %36, %37 : vector<32x32xf32>
    %39 = tpu.iota {dimensions = array<i32: 0>} : vector<32x32xi32>
    %c3_i32 = arith.constant 3 : i32
    %40 = vector.broadcast %c3_i32 : i32 to vector<32x32xi32>
    %41 = arith.shrsi %39, %40 : vector<32x32xi32>
    %42 = tpu.iota {dimensions = array<i32: 1>} : vector<32x32xi32>
    %c3_i32_13 = arith.constant 3 : i32
    %43 = vector.broadcast %c3_i32_13 : i32 to vector<32x32xi32>
    %44 = arith.shrsi %42, %43 : vector<32x32xi32>
    %45 = arith.cmpi eq, %41, %44 : vector<32x32xi32>
    %cst_14 = arith.constant 1.000000e+00 : f32
    %46 = vector.broadcast %cst_14 : f32 to vector<1x32xf32>
    %47 = arith.subf %46, %4 : vector<1x32xf32>
    %cst_15 = arith.constant -1.000000e+09 : f32
    %48 = vector.broadcast %cst_15 : f32 to vector<1x32xf32>
    %49 = arith.mulf %47, %48 : vector<1x32xf32>
    %cst_16 = arith.constant -1.000000e+09 : f32
    %50 = vector.shape_cast %49 : vector<1x32xf32> to vector<1x32xf32>
    %51 = vector.broadcast %50 : vector<1x32xf32> to vector<32x32xf32>
    %52 = vector.broadcast %cst_16 : f32 to vector<32x32xf32>
    %53 = arith.select %45, %51, %52 : vector<32x32xi1>, vector<32x32xf32>
    %c328 = arith.constant 328 : index
    %c0_17 = arith.constant 0 : index
    %54 = vector.load %arg2[%c328, %c0_17] : memref<504x128xf32, #tpu.memory_space<vmem>>, vector<8x32xf32>
    %cst_18 = arith.constant 0.000000e+00 : f32
    %55 = vector.broadcast %cst_18 : f32 to vector<32x32xf32>
    %c104 = arith.constant 104 : index
    %c0_19 = arith.constant 0 : index
    %56 = vector.load %arg2[%c104, %c0_19] : memref<504x128xf32, #tpu.memory_space<vmem>>, vector<32x16xf32>
    %cst_20 = arith.constant dense<0.000000e+00> : vector<32x16xf32>
    %57 = tpu.matmul %38, %56, %cst_20 {dimension_numbers = #tpu.dot_dimension_numbers<[1], [0], [0], [1], [0, 0, 1, 1], [], []>} : vector<32x32xf32>, vector<32x16xf32>, vector<32x16xf32> -> vector<32x16xf32>
    %58 = vector.extract_strided_slice %54 {offsets = [0, 0], sizes = [1, 16], strides = [1, 1]} : vector<8x32xf32> to vector<1x16xf32>
    %59 = vector.broadcast %58 : vector<1x16xf32> to vector<32x16xf32>
    %60 = arith.addf %57, %59 : vector<32x16xf32>
    %c136 = arith.constant 136 : index
    %c0_21 = arith.constant 0 : index
    %61 = vector.load %arg2[%c136, %c0_21] : memref<504x128xf32, #tpu.memory_space<vmem>>, vector<32x16xf32>
    %cst_22 = arith.constant dense<0.000000e+00> : vector<32x16xf32>
    %62 = tpu.matmul %38, %61, %cst_22 {dimension_numbers = #tpu.dot_dimension_numbers<[1], [0], [0], [1], [0, 0, 1, 1], [], []>} : vector<32x32xf32>, vector<32x16xf32>, vector<32x16xf32> -> vector<32x16xf32>
    %63 = vector.extract_strided_slice %54 {offsets = [1, 0], sizes = [1, 16], strides = [1, 1]} : vector<8x32xf32> to vector<1x16xf32>
    %64 = vector.broadcast %63 : vector<1x16xf32> to vector<32x16xf32>
    %65 = arith.addf %62, %64 : vector<32x16xf32>
    %c168 = arith.constant 168 : index
    %c0_23 = arith.constant 0 : index
    %66 = vector.load %arg2[%c168, %c0_23] : memref<504x128xf32, #tpu.memory_space<vmem>>, vector<32x16xf32>
    %cst_24 = arith.constant dense<0.000000e+00> : vector<32x16xf32>
    %67 = tpu.matmul %38, %66, %cst_24 {dimension_numbers = #tpu.dot_dimension_numbers<[1], [0], [0], [1], [0, 0, 1, 1], [], []>} : vector<32x32xf32>, vector<32x16xf32>, vector<32x16xf32> -> vector<32x16xf32>
    %68 = vector.extract_strided_slice %54 {offsets = [2, 0], sizes = [1, 16], strides = [1, 1]} : vector<8x32xf32> to vector<1x16xf32>
    %69 = vector.broadcast %68 : vector<1x16xf32> to vector<32x16xf32>
    %70 = arith.addf %67, %69 : vector<32x16xf32>
    %cst_25 = arith.constant dense<0.000000e+00> : vector<32x32xf32>
    %71 = tpu.matmul %60, %65, %cst_25 {dimension_numbers = #tpu.dot_dimension_numbers<[1], [1], [0], [0], [0, 0, 1, 0], [], []>} : vector<32x16xf32>, vector<32x16xf32>, vector<32x32xf32> -> vector<32x32xf32>
    %cst_26 = arith.constant 2.500000e-01 : f32
    %72 = vector.broadcast %cst_26 : f32 to vector<32x32xf32>
    %73 = arith.mulf %71, %72 : vector<32x32xf32>
    %74 = arith.addf %73, %53 : vector<32x32xf32>
    %cst_27 = arith.constant dense<0xFF800000> : vector<32xf32>
    %75 = vector.multi_reduction <maximumf>, %74, %cst_27 [1] : vector<32x32xf32> to vector<32xf32>
    %76 = vector.shape_cast %75 : vector<32xf32> to vector<32x1xf32>
    %77 = vector.broadcast %76 : vector<32x1xf32> to vector<32x32xf32>
    %78 = arith.subf %74, %77 : vector<32x32xf32>
    %79 = math.exp %78 : vector<32x32xf32>
    %cst_28 = arith.constant dense<0.000000e+00> : vector<32xf32>
    %80 = vector.multi_reduction <add>, %79, %cst_28 [1] : vector<32x32xf32> to vector<32xf32>
    %81 = vector.shape_cast %80 : vector<32xf32> to vector<32x1xf32>
    %82 = vector.broadcast %81 : vector<32x1xf32> to vector<32x32xf32>
    %83 = arith.divf %79, %82 : vector<32x32xf32>
    %cst_29 = arith.constant dense<0.000000e+00> : vector<32x16xf32>
    %84 = tpu.matmul %83, %70, %cst_29 {dimension_numbers = #tpu.dot_dimension_numbers<[1], [0], [0], [1], [0, 0, 1, 1], [], []>} : vector<32x32xf32>, vector<32x16xf32>, vector<32x16xf32> -> vector<32x16xf32>
    %c200 = arith.constant 200 : index
    %c0_30 = arith.constant 0 : index
    %85 = vector.load %arg2[%c200, %c0_30] : memref<504x128xf32, #tpu.memory_space<vmem>>, vector<16x32xf32>
    %cst_31 = arith.constant dense<0.000000e+00> : vector<32x32xf32>
    %86 = tpu.matmul %84, %85, %cst_31 {dimension_numbers = #tpu.dot_dimension_numbers<[1], [0], [0], [1], [0, 0, 1, 1], [], []>} : vector<32x16xf32>, vector<16x32xf32>, vector<32x32xf32> -> vector<32x32xf32>
    %87 = arith.addf %55, %86 : vector<32x32xf32>
    %c216 = arith.constant 216 : index
    %c0_32 = arith.constant 0 : index
    %88 = vector.load %arg2[%c216, %c0_32] : memref<504x128xf32, #tpu.memory_space<vmem>>, vector<32x16xf32>
    %cst_33 = arith.constant dense<0.000000e+00> : vector<32x16xf32>
    %89 = tpu.matmul %38, %88, %cst_33 {dimension_numbers = #tpu.dot_dimension_numbers<[1], [0], [0], [1], [0, 0, 1, 1], [], []>} : vector<32x32xf32>, vector<32x16xf32>, vector<32x16xf32> -> vector<32x16xf32>
    %90 = vector.extract_strided_slice %54 {offsets = [3, 0], sizes = [1, 16], strides = [1, 1]} : vector<8x32xf32> to vector<1x16xf32>
    %91 = vector.broadcast %90 : vector<1x16xf32> to vector<32x16xf32>
    %92 = arith.addf %89, %91 : vector<32x16xf32>
    %c248 = arith.constant 248 : index
    %c0_34 = arith.constant 0 : index
    %93 = vector.load %arg2[%c248, %c0_34] : memref<504x128xf32, #tpu.memory_space<vmem>>, vector<32x16xf32>
    %cst_35 = arith.constant dense<0.000000e+00> : vector<32x16xf32>
    %94 = tpu.matmul %38, %93, %cst_35 {dimension_numbers = #tpu.dot_dimension_numbers<[1], [0], [0], [1], [0, 0, 1, 1], [], []>} : vector<32x32xf32>, vector<32x16xf32>, vector<32x16xf32> -> vector<32x16xf32>
    %95 = vector.extract_strided_slice %54 {offsets = [4, 0], sizes = [1, 16], strides = [1, 1]} : vector<8x32xf32> to vector<1x16xf32>
    %96 = vector.broadcast %95 : vector<1x16xf32> to vector<32x16xf32>
    %97 = arith.addf %94, %96 : vector<32x16xf32>
    %c280 = arith.constant 280 : index
    %c0_36 = arith.constant 0 : index
    %98 = vector.load %arg2[%c280, %c0_36] : memref<504x128xf32, #tpu.memory_space<vmem>>, vector<32x16xf32>
    %cst_37 = arith.constant dense<0.000000e+00> : vector<32x16xf32>
    %99 = tpu.matmul %38, %98, %cst_37 {dimension_numbers = #tpu.dot_dimension_numbers<[1], [0], [0], [1], [0, 0, 1, 1], [], []>} : vector<32x32xf32>, vector<32x16xf32>, vector<32x16xf32> -> vector<32x16xf32>
    %100 = vector.extract_strided_slice %54 {offsets = [5, 0], sizes = [1, 16], strides = [1, 1]} : vector<8x32xf32> to vector<1x16xf32>
    %101 = vector.broadcast %100 : vector<1x16xf32> to vector<32x16xf32>
    %102 = arith.addf %99, %101 : vector<32x16xf32>
    %cst_38 = arith.constant dense<0.000000e+00> : vector<32x32xf32>
    %103 = tpu.matmul %92, %97, %cst_38 {dimension_numbers = #tpu.dot_dimension_numbers<[1], [1], [0], [0], [0, 0, 1, 0], [], []>} : vector<32x16xf32>, vector<32x16xf32>, vector<32x32xf32> -> vector<32x32xf32>
    %cst_39 = arith.constant 2.500000e-01 : f32
    %104 = vector.broadcast %cst_39 : f32 to vector<32x32xf32>
    %105 = arith.mulf %103, %104 : vector<32x32xf32>
    %106 = arith.addf %105, %53 : vector<32x32xf32>
    %cst_40 = arith.constant dense<0xFF800000> : vector<32xf32>
    %107 = vector.multi_reduction <maximumf>, %106, %cst_40 [1] : vector<32x32xf32> to vector<32xf32>
    %108 = vector.shape_cast %107 : vector<32xf32> to vector<32x1xf32>
    %109 = vector.broadcast %108 : vector<32x1xf32> to vector<32x32xf32>
    %110 = arith.subf %106, %109 : vector<32x32xf32>
    %111 = math.exp %110 : vector<32x32xf32>
    %cst_41 = arith.constant dense<0.000000e+00> : vector<32xf32>
    %112 = vector.multi_reduction <add>, %111, %cst_41 [1] : vector<32x32xf32> to vector<32xf32>
    %113 = vector.shape_cast %112 : vector<32xf32> to vector<32x1xf32>
    %114 = vector.broadcast %113 : vector<32x1xf32> to vector<32x32xf32>
    %115 = arith.divf %111, %114 : vector<32x32xf32>
    %cst_42 = arith.constant dense<0.000000e+00> : vector<32x16xf32>
    %116 = tpu.matmul %115, %102, %cst_42 {dimension_numbers = #tpu.dot_dimension_numbers<[1], [0], [0], [1], [0, 0, 1, 1], [], []>} : vector<32x32xf32>, vector<32x16xf32>, vector<32x16xf32> -> vector<32x16xf32>
    %c312 = arith.constant 312 : index
    %c0_43 = arith.constant 0 : index
    %117 = vector.load %arg2[%c312, %c0_43] : memref<504x128xf32, #tpu.memory_space<vmem>>, vector<16x32xf32>
    %cst_44 = arith.constant dense<0.000000e+00> : vector<32x32xf32>
    %118 = tpu.matmul %116, %117, %cst_44 {dimension_numbers = #tpu.dot_dimension_numbers<[1], [0], [0], [1], [0, 0, 1, 1], [], []>} : vector<32x16xf32>, vector<16x32xf32>, vector<32x32xf32> -> vector<32x32xf32>
    %119 = arith.addf %87, %118 : vector<32x32xf32>
    %120 = vector.extract_strided_slice %54 {offsets = [6, 0], sizes = [1, 32], strides = [1, 1]} : vector<8x32xf32> to vector<1x32xf32>
    %121 = vector.broadcast %120 : vector<1x32xf32> to vector<32x32xf32>
    %122 = arith.addf %119, %121 : vector<32x32xf32>
    %123 = arith.addf %38, %122 : vector<32x32xf32>
    %124 = vector.extract_strided_slice %14 {offsets = [2, 0], sizes = [1, 32], strides = [1, 1]} : vector<8x32xf32> to vector<1x32xf32>
    %125 = vector.extract_strided_slice %14 {offsets = [3, 0], sizes = [1, 32], strides = [1, 1]} : vector<8x32xf32> to vector<1x32xf32>
    %cst_45 = arith.constant dense<0.000000e+00> : vector<32xf32>
    %126 = vector.multi_reduction <add>, %123, %cst_45 [1] : vector<32x32xf32> to vector<32xf32>
    %127 = vector.shape_cast %126 : vector<32xf32> to vector<32x1xf32>
    %cst_46 = arith.constant 3.200000e+01 : f32
    %128 = vector.broadcast %cst_46 : f32 to vector<32x1xf32>
    %129 = arith.divf %127, %128 : vector<32x1xf32>
    %130 = vector.broadcast %129 : vector<32x1xf32> to vector<32x32xf32>
    %131 = arith.subf %123, %130 : vector<32x32xf32>
    %132 = arith.mulf %131, %131 : vector<32x32xf32>
    %cst_47 = arith.constant dense<0.000000e+00> : vector<32xf32>
    %133 = vector.multi_reduction <add>, %132, %cst_47 [1] : vector<32x32xf32> to vector<32xf32>
    %134 = vector.shape_cast %133 : vector<32xf32> to vector<32x1xf32>
    %cst_48 = arith.constant 3.200000e+01 : f32
    %135 = vector.broadcast %cst_48 : f32 to vector<32x1xf32>
    %136 = arith.divf %134, %135 : vector<32x1xf32>
    %137 = vector.broadcast %129 : vector<32x1xf32> to vector<32x32xf32>
    %138 = arith.subf %123, %137 : vector<32x32xf32>
    %cst_49 = arith.constant 9.99999996E-13 : f32
    %139 = vector.broadcast %cst_49 : f32 to vector<32x1xf32>
    %140 = arith.addf %136, %139 : vector<32x1xf32>
    %141 = math.rsqrt %140 : vector<32x1xf32>
    %142 = vector.broadcast %141 : vector<32x1xf32> to vector<32x32xf32>
    %143 = arith.mulf %138, %142 : vector<32x32xf32>
    %144 = vector.broadcast %124 : vector<1x32xf32> to vector<32x32xf32>
    %145 = arith.mulf %143, %144 : vector<32x32xf32>
    %146 = vector.broadcast %125 : vector<1x32xf32> to vector<32x32xf32>
    %147 = arith.addf %145, %146 : vector<32x32xf32>
    %c496 = arith.constant 496 : index
    %c0_50 = arith.constant 0 : index
    %148 = vector.load %arg2[%c496, %c0_50] : memref<504x128xf32, #tpu.memory_space<vmem>>, vector<8x128xf32>
    %c336 = arith.constant 336 : index
    %c0_51 = arith.constant 0 : index
    %149 = vector.load %arg2[%c336, %c0_51] : memref<504x128xf32, #tpu.memory_space<vmem>>, vector<32x64xf32>
    %cst_52 = arith.constant dense<0.000000e+00> : vector<32x64xf32>
    %150 = tpu.matmul %147, %149, %cst_52 {dimension_numbers = #tpu.dot_dimension_numbers<[1], [0], [0], [1], [0, 0, 1, 1], [], []>} : vector<32x32xf32>, vector<32x64xf32>, vector<32x64xf32> -> vector<32x64xf32>
    %151 = vector.extract_strided_slice %148 {offsets = [0, 0], sizes = [1, 64], strides = [1, 1]} : vector<8x128xf32> to vector<1x64xf32>
    %152 = vector.broadcast %151 : vector<1x64xf32> to vector<32x64xf32>
    %153 = arith.addf %150, %152 : vector<32x64xf32>
    %154 = arith.mulf %153, %153 : vector<32x64xf32>
    %155 = arith.mulf %153, %154 : vector<32x64xf32>
    %cst_53 = arith.constant 4.471500e-02 : f32
    %156 = vector.broadcast %cst_53 : f32 to vector<32x64xf32>
    %157 = arith.mulf %156, %155 : vector<32x64xf32>
    %158 = arith.addf %153, %157 : vector<32x64xf32>
    %cst_54 = arith.constant 0.797884583 : f32
    %159 = vector.broadcast %cst_54 : f32 to vector<32x64xf32>
    %160 = arith.mulf %159, %158 : vector<32x64xf32>
    %161 = math.tanh %160 : vector<32x64xf32>
    %cst_55 = arith.constant 1.000000e+00 : f32
    %162 = vector.broadcast %cst_55 : f32 to vector<32x64xf32>
    %163 = arith.addf %162, %161 : vector<32x64xf32>
    %cst_56 = arith.constant 5.000000e-01 : f32
    %164 = vector.broadcast %cst_56 : f32 to vector<32x64xf32>
    %165 = arith.mulf %164, %163 : vector<32x64xf32>
    %166 = arith.mulf %153, %165 : vector<32x64xf32>
    %c368 = arith.constant 368 : index
    %c0_57 = arith.constant 0 : index
    %167 = vector.load %arg2[%c368, %c0_57] : memref<504x128xf32, #tpu.memory_space<vmem>>, vector<64x32xf32>
    %cst_58 = arith.constant dense<0.000000e+00> : vector<32x32xf32>
    %168 = tpu.matmul %166, %167, %cst_58 {dimension_numbers = #tpu.dot_dimension_numbers<[1], [0], [0], [1], [0, 0, 1, 1], [], []>} : vector<32x64xf32>, vector<64x32xf32>, vector<32x32xf32> -> vector<32x32xf32>
    %169 = vector.extract_strided_slice %148 {offsets = [1, 0], sizes = [1, 32], strides = [1, 1]} : vector<8x128xf32> to vector<1x32xf32>
    %170 = vector.broadcast %169 : vector<1x32xf32> to vector<32x32xf32>
    %171 = arith.addf %168, %170 : vector<32x32xf32>
    %172 = arith.addf %147, %171 : vector<32x32xf32>
    %173 = vector.extract_strided_slice %14 {offsets = [4, 0], sizes = [1, 32], strides = [1, 1]} : vector<8x32xf32> to vector<1x32xf32>
    %174 = vector.extract_strided_slice %14 {offsets = [5, 0], sizes = [1, 32], strides = [1, 1]} : vector<8x32xf32> to vector<1x32xf32>
    %cst_59 = arith.constant dense<0.000000e+00> : vector<32xf32>
    %175 = vector.multi_reduction <add>, %172, %cst_59 [1] : vector<32x32xf32> to vector<32xf32>
    %176 = vector.shape_cast %175 : vector<32xf32> to vector<32x1xf32>
    %cst_60 = arith.constant 3.200000e+01 : f32
    %177 = vector.broadcast %cst_60 : f32 to vector<32x1xf32>
    %178 = arith.divf %176, %177 : vector<32x1xf32>
    %179 = vector.broadcast %178 : vector<32x1xf32> to vector<32x32xf32>
    %180 = arith.subf %172, %179 : vector<32x32xf32>
    %181 = arith.mulf %180, %180 : vector<32x32xf32>
    %cst_61 = arith.constant dense<0.000000e+00> : vector<32xf32>
    %182 = vector.multi_reduction <add>, %181, %cst_61 [1] : vector<32x32xf32> to vector<32xf32>
    %183 = vector.shape_cast %182 : vector<32xf32> to vector<32x1xf32>
    %cst_62 = arith.constant 3.200000e+01 : f32
    %184 = vector.broadcast %cst_62 : f32 to vector<32x1xf32>
    %185 = arith.divf %183, %184 : vector<32x1xf32>
    %186 = vector.broadcast %178 : vector<32x1xf32> to vector<32x32xf32>
    %187 = arith.subf %172, %186 : vector<32x32xf32>
    %cst_63 = arith.constant 9.99999996E-13 : f32
    %188 = vector.broadcast %cst_63 : f32 to vector<32x1xf32>
    %189 = arith.addf %185, %188 : vector<32x1xf32>
    %190 = math.rsqrt %189 : vector<32x1xf32>
    %191 = vector.broadcast %190 : vector<32x1xf32> to vector<32x32xf32>
    %192 = arith.mulf %187, %191 : vector<32x32xf32>
    %193 = vector.broadcast %173 : vector<1x32xf32> to vector<32x32xf32>
    %194 = arith.mulf %192, %193 : vector<32x32xf32>
    %195 = vector.broadcast %174 : vector<1x32xf32> to vector<32x32xf32>
    %196 = arith.addf %194, %195 : vector<32x32xf32>
    %197 = tpu.iota {dimensions = array<i32: 0>} : vector<4x32xi32>
    %198 = tpu.iota {dimensions = array<i32: 1>} : vector<4x32xi32>
    %c8_i32 = arith.constant 8 : i32
    %199 = vector.broadcast %c8_i32 : i32 to vector<4x32xi32>
    %200 = arith.muli %197, %199 : vector<4x32xi32>
    %201 = arith.cmpi eq, %198, %200 : vector<4x32xi32>
    %202 = arith.extui %201 : vector<4x32xi1> to vector<4x32xi32>
    %203 = arith.sitofp %202 : vector<4x32xi32> to vector<4x32xf32>
    %cst_64 = arith.constant dense<0.000000e+00> : vector<4x32xf32>
    %204 = tpu.matmul %203, %196, %cst_64 {dimension_numbers = #tpu.dot_dimension_numbers<[1], [0], [0], [1], [0, 0, 1, 1], [], []>} : vector<4x32xf32>, vector<32x32xf32>, vector<4x32xf32> -> vector<4x32xf32>
    %c432 = arith.constant 432 : index
    %c0_65 = arith.constant 0 : index
    %205 = vector.load %arg2[%c432, %c0_65] : memref<504x128xf32, #tpu.memory_space<vmem>>, vector<32x64xf32>
    %cst_66 = arith.constant dense<0.000000e+00> : vector<4x64xf32>
    %206 = tpu.matmul %204, %205, %cst_66 {dimension_numbers = #tpu.dot_dimension_numbers<[1], [0], [0], [1], [0, 0, 1, 1], [], []>} : vector<4x32xf32>, vector<32x64xf32>, vector<4x64xf32> -> vector<4x64xf32>
    %207 = vector.extract_strided_slice %148 {offsets = [2, 0], sizes = [1, 64], strides = [1, 1]} : vector<8x128xf32> to vector<1x64xf32>
    %208 = vector.broadcast %207 : vector<1x64xf32> to vector<4x64xf32>
    %209 = arith.addf %206, %208 : vector<4x64xf32>
    %c464 = arith.constant 464 : index
    %c0_67 = arith.constant 0 : index
    %210 = vector.load %arg2[%c464, %c0_67] : memref<504x128xf32, #tpu.memory_space<vmem>>, vector<16x64xf32>
    %cst_68 = arith.constant 0.000000e+00 : f32
    %211 = vector.broadcast %cst_68 : f32 to vector<1x16xf32>
    %cst_69 = arith.constant 0.000000e+00 : f32
    %212 = vector.broadcast %cst_69 : f32 to vector<1x16xf32>
    %213 = vector.extract_strided_slice %209 {offsets = [0, 0], sizes = [1, 64], strides = [1, 1]} : vector<4x64xf32> to vector<1x64xf32>
    %cst_70 = arith.constant dense<0.000000e+00> : vector<1x64xf32>
    %214 = tpu.matmul %211, %210, %cst_70 {dimension_numbers = #tpu.dot_dimension_numbers<[1], [0], [0], [1], [0, 0, 1, 1], [], []>} : vector<1x16xf32>, vector<16x64xf32>, vector<1x64xf32> -> vector<1x64xf32>
    %215 = arith.addf %213, %214 : vector<1x64xf32>
    %216 = math.tanh %215 : vector<1x64xf32>
    %217 = vector.extract_strided_slice %216 {offsets = [0, 0], sizes = [1, 16], strides = [1, 1]} : vector<1x64xf32> to vector<1x16xf32>
    %cst_71 = arith.constant 1.000000e+00 : f32
    %218 = vector.broadcast %cst_71 : f32 to vector<1x16xf32>
    %219 = arith.addf %218, %217 : vector<1x16xf32>
    %cst_72 = arith.constant 5.000000e-01 : f32
    %220 = vector.broadcast %cst_72 : f32 to vector<1x16xf32>
    %221 = arith.mulf %220, %219 : vector<1x16xf32>
    %222 = vector.extract_strided_slice %216 {offsets = [0, 16], sizes = [1, 16], strides = [1, 1]} : vector<1x64xf32> to vector<1x16xf32>
    %cst_73 = arith.constant 1.000000e+00 : f32
    %223 = vector.broadcast %cst_73 : f32 to vector<1x16xf32>
    %224 = arith.addf %223, %222 : vector<1x16xf32>
    %cst_74 = arith.constant 5.000000e-01 : f32
    %225 = vector.broadcast %cst_74 : f32 to vector<1x16xf32>
    %226 = arith.mulf %225, %224 : vector<1x16xf32>
    %227 = vector.extract_strided_slice %216 {offsets = [0, 32], sizes = [1, 16], strides = [1, 1]} : vector<1x64xf32> to vector<1x16xf32>
    %228 = vector.extract_strided_slice %216 {offsets = [0, 48], sizes = [1, 16], strides = [1, 1]} : vector<1x64xf32> to vector<1x16xf32>
    %cst_75 = arith.constant 1.000000e+00 : f32
    %229 = vector.broadcast %cst_75 : f32 to vector<1x16xf32>
    %230 = arith.addf %229, %228 : vector<1x16xf32>
    %cst_76 = arith.constant 5.000000e-01 : f32
    %231 = vector.broadcast %cst_76 : f32 to vector<1x16xf32>
    %232 = arith.mulf %231, %230 : vector<1x16xf32>
    %233 = arith.mulf %226, %212 : vector<1x16xf32>
    %234 = arith.mulf %221, %227 : vector<1x16xf32>
    %235 = arith.addf %233, %234 : vector<1x16xf32>
    %236 = math.tanh %235 : vector<1x16xf32>
    %237 = arith.mulf %232, %236 : vector<1x16xf32>
    %238 = vector.extract_strided_slice %209 {offsets = [1, 0], sizes = [1, 64], strides = [1, 1]} : vector<4x64xf32> to vector<1x64xf32>
    %cst_77 = arith.constant dense<0.000000e+00> : vector<1x64xf32>
    %239 = tpu.matmul %237, %210, %cst_77 {dimension_numbers = #tpu.dot_dimension_numbers<[1], [0], [0], [1], [0, 0, 1, 1], [], []>} : vector<1x16xf32>, vector<16x64xf32>, vector<1x64xf32> -> vector<1x64xf32>
    %240 = arith.addf %238, %239 : vector<1x64xf32>
    %241 = math.tanh %240 : vector<1x64xf32>
    %242 = vector.extract_strided_slice %241 {offsets = [0, 0], sizes = [1, 16], strides = [1, 1]} : vector<1x64xf32> to vector<1x16xf32>
    %cst_78 = arith.constant 1.000000e+00 : f32
    %243 = vector.broadcast %cst_78 : f32 to vector<1x16xf32>
    %244 = arith.addf %243, %242 : vector<1x16xf32>
    %cst_79 = arith.constant 5.000000e-01 : f32
    %245 = vector.broadcast %cst_79 : f32 to vector<1x16xf32>
    %246 = arith.mulf %245, %244 : vector<1x16xf32>
    %247 = vector.extract_strided_slice %241 {offsets = [0, 16], sizes = [1, 16], strides = [1, 1]} : vector<1x64xf32> to vector<1x16xf32>
    %cst_80 = arith.constant 1.000000e+00 : f32
    %248 = vector.broadcast %cst_80 : f32 to vector<1x16xf32>
    %249 = arith.addf %248, %247 : vector<1x16xf32>
    %cst_81 = arith.constant 5.000000e-01 : f32
    %250 = vector.broadcast %cst_81 : f32 to vector<1x16xf32>
    %251 = arith.mulf %250, %249 : vector<1x16xf32>
    %252 = vector.extract_strided_slice %241 {offsets = [0, 32], sizes = [1, 16], strides = [1, 1]} : vector<1x64xf32> to vector<1x16xf32>
    %253 = vector.extract_strided_slice %241 {offsets = [0, 48], sizes = [1, 16], strides = [1, 1]} : vector<1x64xf32> to vector<1x16xf32>
    %cst_82 = arith.constant 1.000000e+00 : f32
    %254 = vector.broadcast %cst_82 : f32 to vector<1x16xf32>
    %255 = arith.addf %254, %253 : vector<1x16xf32>
    %cst_83 = arith.constant 5.000000e-01 : f32
    %256 = vector.broadcast %cst_83 : f32 to vector<1x16xf32>
    %257 = arith.mulf %256, %255 : vector<1x16xf32>
    %258 = arith.mulf %251, %235 : vector<1x16xf32>
    %259 = arith.mulf %246, %252 : vector<1x16xf32>
    %260 = arith.addf %258, %259 : vector<1x16xf32>
    %261 = math.tanh %260 : vector<1x16xf32>
    %262 = arith.mulf %257, %261 : vector<1x16xf32>
    %263 = vector.extract_strided_slice %209 {offsets = [2, 0], sizes = [1, 64], strides = [1, 1]} : vector<4x64xf32> to vector<1x64xf32>
    %cst_84 = arith.constant dense<0.000000e+00> : vector<1x64xf32>
    %264 = tpu.matmul %262, %210, %cst_84 {dimension_numbers = #tpu.dot_dimension_numbers<[1], [0], [0], [1], [0, 0, 1, 1], [], []>} : vector<1x16xf32>, vector<16x64xf32>, vector<1x64xf32> -> vector<1x64xf32>
    %265 = arith.addf %263, %264 : vector<1x64xf32>
    %266 = math.tanh %265 : vector<1x64xf32>
    %267 = vector.extract_strided_slice %266 {offsets = [0, 0], sizes = [1, 16], strides = [1, 1]} : vector<1x64xf32> to vector<1x16xf32>
    %cst_85 = arith.constant 1.000000e+00 : f32
    %268 = vector.broadcast %cst_85 : f32 to vector<1x16xf32>
    %269 = arith.addf %268, %267 : vector<1x16xf32>
    %cst_86 = arith.constant 5.000000e-01 : f32
    %270 = vector.broadcast %cst_86 : f32 to vector<1x16xf32>
    %271 = arith.mulf %270, %269 : vector<1x16xf32>
    %272 = vector.extract_strided_slice %266 {offsets = [0, 16], sizes = [1, 16], strides = [1, 1]} : vector<1x64xf32> to vector<1x16xf32>
    %cst_87 = arith.constant 1.000000e+00 : f32
    %273 = vector.broadcast %cst_87 : f32 to vector<1x16xf32>
    %274 = arith.addf %273, %272 : vector<1x16xf32>
    %cst_88 = arith.constant 5.000000e-01 : f32
    %275 = vector.broadcast %cst_88 : f32 to vector<1x16xf32>
    %276 = arith.mulf %275, %274 : vector<1x16xf32>
    %277 = vector.extract_strided_slice %266 {offsets = [0, 32], sizes = [1, 16], strides = [1, 1]} : vector<1x64xf32> to vector<1x16xf32>
    %278 = vector.extract_strided_slice %266 {offsets = [0, 48], sizes = [1, 16], strides = [1, 1]} : vector<1x64xf32> to vector<1x16xf32>
    %cst_89 = arith.constant 1.000000e+00 : f32
    %279 = vector.broadcast %cst_89 : f32 to vector<1x16xf32>
    %280 = arith.addf %279, %278 : vector<1x16xf32>
    %cst_90 = arith.constant 5.000000e-01 : f32
    %281 = vector.broadcast %cst_90 : f32 to vector<1x16xf32>
    %282 = arith.mulf %281, %280 : vector<1x16xf32>
    %283 = arith.mulf %276, %260 : vector<1x16xf32>
    %284 = arith.mulf %271, %277 : vector<1x16xf32>
    %285 = arith.addf %283, %284 : vector<1x16xf32>
    %286 = math.tanh %285 : vector<1x16xf32>
    %287 = arith.mulf %282, %286 : vector<1x16xf32>
    %288 = vector.extract_strided_slice %209 {offsets = [3, 0], sizes = [1, 64], strides = [1, 1]} : vector<4x64xf32> to vector<1x64xf32>
    %cst_91 = arith.constant dense<0.000000e+00> : vector<1x64xf32>
    %289 = tpu.matmul %287, %210, %cst_91 {dimension_numbers = #tpu.dot_dimension_numbers<[1], [0], [0], [1], [0, 0, 1, 1], [], []>} : vector<1x16xf32>, vector<16x64xf32>, vector<1x64xf32> -> vector<1x64xf32>
    %290 = arith.addf %288, %289 : vector<1x64xf32>
    %291 = math.tanh %290 : vector<1x64xf32>
    %292 = vector.extract_strided_slice %291 {offsets = [0, 0], sizes = [1, 16], strides = [1, 1]} : vector<1x64xf32> to vector<1x16xf32>
    %cst_92 = arith.constant 1.000000e+00 : f32
    %293 = vector.broadcast %cst_92 : f32 to vector<1x16xf32>
    %294 = arith.addf %293, %292 : vector<1x16xf32>
    %cst_93 = arith.constant 5.000000e-01 : f32
    %295 = vector.broadcast %cst_93 : f32 to vector<1x16xf32>
    %296 = arith.mulf %295, %294 : vector<1x16xf32>
    %297 = vector.extract_strided_slice %291 {offsets = [0, 16], sizes = [1, 16], strides = [1, 1]} : vector<1x64xf32> to vector<1x16xf32>
    %cst_94 = arith.constant 1.000000e+00 : f32
    %298 = vector.broadcast %cst_94 : f32 to vector<1x16xf32>
    %299 = arith.addf %298, %297 : vector<1x16xf32>
    %cst_95 = arith.constant 5.000000e-01 : f32
    %300 = vector.broadcast %cst_95 : f32 to vector<1x16xf32>
    %301 = arith.mulf %300, %299 : vector<1x16xf32>
    %302 = vector.extract_strided_slice %291 {offsets = [0, 32], sizes = [1, 16], strides = [1, 1]} : vector<1x64xf32> to vector<1x16xf32>
    %303 = vector.extract_strided_slice %291 {offsets = [0, 48], sizes = [1, 16], strides = [1, 1]} : vector<1x64xf32> to vector<1x16xf32>
    %cst_96 = arith.constant 1.000000e+00 : f32
    %304 = vector.broadcast %cst_96 : f32 to vector<1x16xf32>
    %305 = arith.addf %304, %303 : vector<1x16xf32>
    %cst_97 = arith.constant 5.000000e-01 : f32
    %306 = vector.broadcast %cst_97 : f32 to vector<1x16xf32>
    %307 = arith.mulf %306, %305 : vector<1x16xf32>
    %308 = arith.mulf %301, %285 : vector<1x16xf32>
    %309 = arith.mulf %296, %302 : vector<1x16xf32>
    %310 = arith.addf %308, %309 : vector<1x16xf32>
    %311 = math.tanh %310 : vector<1x16xf32>
    %312 = arith.mulf %307, %311 : vector<1x16xf32>
    %cst_98 = arith.constant 0.000000e+00 : f32
    %313 = vector.broadcast %cst_98 : f32 to vector<1x16xf32>
    %314 = arith.maximumf %312, %313 : vector<1x16xf32>
    %c480 = arith.constant 480 : index
    %c0_99 = arith.constant 0 : index
    %315 = vector.load %arg2[%c480, %c0_99] : memref<504x128xf32, #tpu.memory_space<vmem>>, vector<16x128xf32>
    %cst_100 = arith.constant dense<0.000000e+00> : vector<1x128xf32>
    %316 = tpu.matmul %314, %315, %cst_100 {dimension_numbers = #tpu.dot_dimension_numbers<[1], [0], [0], [1], [0, 0, 1, 1], [], []>} : vector<1x16xf32>, vector<16x128xf32>, vector<1x128xf32> -> vector<1x128xf32>
    %317 = vector.extract_strided_slice %148 {offsets = [3, 0], sizes = [1, 128], strides = [1, 1]} : vector<8x128xf32> to vector<1x128xf32>
    %318 = arith.addf %316, %317 : vector<1x128xf32>
    %319 = vector.shape_cast %318 : vector<1x128xf32> to vector<1x128xf32>
    %320 = vector.broadcast %319 : vector<1x128xf32> to vector<8x128xf32>
    %c0_101 = arith.constant 0 : index
    %c0_102 = arith.constant 0 : index
    %c0_103 = arith.constant 0 : index
    %321 = vector.load %arg3[%c0_101, %c0_102, %c0_103] : memref<1x8x128xf32, #tpu.memory_space<vmem>>, vector<1x8x128xf32>
    %322 = vector.shape_cast %321 : vector<1x8x128xf32> to vector<8x128xf32>
    %323 = vector.shape_cast %320 : vector<8x128xf32> to vector<1x8x128xf32>
    tpu.vector_store %arg3[%c0_101, %c0_102, %c0_103], %323 {strides = array<i32>} : memref<1x8x128xf32, #tpu.memory_space<vmem>>, vector<1x8x128xf32>,
    return
  }
  func.func @transform_0(%arg0: i32) -> (i32, i32, i32) {
    %c0_i32 = arith.constant 0 : i32
    %c0_i32_0 = arith.constant 0 : i32
    %c0_i32_1 = arith.constant 0 : i32
    return %arg0, %c0_i32, %c0_i32_0 : i32, i32, i32
  }
  func.func @transform_1(%arg0: i32) -> (i32, i32) {
    %c0_i32 = arith.constant 0 : i32
    %c0_i32_0 = arith.constant 0 : i32
    %c0_i32_1 = arith.constant 0 : i32
    return %c0_i32, %c0_i32_0 : i32, i32
  }
  func.func @transform_2(%arg0: i32) -> (i32, i32, i32) {
    %c0_i32 = arith.constant 0 : i32
    %c0_i32_0 = arith.constant 0 : i32
    %c0_i32_1 = arith.constant 0 : i32
    return %arg0, %c0_i32, %c0_i32_0 : i32, i32, i32
  }
}

</mosaic_0001>

<llo_original>
// kernel: docbert_forward.1
$region0: #{docbert_forward.1}
  #allocation0 [shape = 'u32[]', space=smem, size = 0x4, offset = 0x4, fixed_abs, tag = 'smem constant byte address 0x4 - core index']
  #allocation1 [shape = 'u32[144,128]{1,0:T(1,128)}', space=vmem, size = 0x12000, scoped, tag = 'internal scratch']
  %s0 = inlined_call_operand.vmem [shape: s32[2,40,128], index: 0, kind: input, shape index: {}]
  %s1 = inlined_call_operand.hbm [shape: f32[504,128], index: 1, kind: input, shape index: {}]
  %s2 = inlined_call_operand.vmem [shape: f32[2,8,128], index: 2, kind: output, shape index: {}]
  %s3 = sld [smem:[#allocation0]]
  $region45: #{docbert_forward.1} parent=0
    _
  %s5 = ssub.s32 1, %s3
  %s6 = scalar_select 0, %s5, %s3
  $region1: #{docbert_forward.1} parent=0
    #allocation2 [shape = 'u8[258048]{0}', space=vmem, size = 0x3f000, scoped, tag = 'input window, operand 1, single buffered']
    #allocation3 [shape = 's32[2]{0}', space=sflag, size = 0x8, scoped, tag = 'scoped memory for docbert_forward.1']
    %7 = vsyncpa [#allocation3], 0
    loop: start=0, step=1, limit=4
    $region2: #{docbert_forward.1} parent=1 // loop_pre_header
      _
    $region3: #{docbert_forward.1} parent=1 // loop_header
      %s9 = sphi 0, %s13
      %p10 = scmp.ge.s32.totalorder %s9, 4
      %s19 = sphi 0, %s21
      %s22 = sphi 0, %s19
      %s23 = sphi 0, %s22
      %s39 = sphi 0, %s23
      %s43 = sphi 0, %s43
      %s45 = sphi 0, %s43
      %s46 = sphi 0, %s45
      %s60 = sphi 0, %s46
      %s66 = sphi 0, %s68
      %s69 = sphi 0, %s66
      %s70 = sphi 0, %s69
      %s86 = sphi 0, %s70
    $region4: #{docbert_forward.1} parent=1 // loop_header_branch
      %12 = sbr.rel (%p10) target = $region8
    $region5: #{docbert_forward.1} parent=1 // loop_body
      %s14 = ssub.s32 %s9, 1
      %s15 = ssub.s32 %s9, 2
      %s16 = sadd.s32 %s9, 1
      %s17 = ssub.s32 %s9, %s16
      %p18 = scmp.eq.s32.totalorder %s17, 0
      %s20 = sadd.s32 %s19, 1
      %s21 = scalar_select %p18, %s19, %s20
      %p24 = pneg %p18
      %p25 = scmp.eq.s32.totalorder %s9, 1
      %p26 = por %p24, %p25
      %p27 = scmp.ne.s32.totalorder %s19, %s22
      %p28 = scmp.eq.s32.totalorder %s9, 0
      %p29 = por %p27, %p28
      %p30 = scmp.ne.s32.totalorder %s19, %s22
      %p31 = scmp.eq.s32.totalorder %s14, 1
      %p32 = por %p30, %p31
      %p33 = scmp.ne.s32.totalorder %s22, %s23
      %p34 = scmp.eq.s32.totalorder %s14, 0
      %p35 = por %p33, %p34
      %p36 = scmp.ne.s32.totalorder %s22, %s23
      %p37 = scmp.eq.s32.totalorder %s15, 1
      %p38 = por %p36, %p37
      %p40 = scmp.ne.s32.totalorder %s23, %s39
      %p41 = scmp.eq.s32.totalorder %s15, 0
      %p42 = por %p40, %p41
      %s44 = sadd.s32 %s43, 1
      %p47 = scmp.eq.s32.totalorder %s9, 1
      %p48 = scmp.ne.s32.totalorder %s43, %s45
      %p49 = scmp.eq.s32.totalorder %s9, 0
      %p50 = por %p48, %p49
      %p51 = scmp.ne.s32.totalorder %s43, %s45
      %p52 = scmp.eq.s32.totalorder %s14, 1
      %p53 = por %p51, %p52
      %p54 = scmp.ne.s32.totalorder %s45, %s46
      %p55 = scmp.eq.s32.totalorder %s14, 0
      %p56 = por %p54, %p55
      %p57 = scmp.ne.s32.totalorder %s45, %s46
      %p58 = scmp.eq.s32.totalorder %s15, 1
      %p59 = por %p57, %p58
      %p61 = scmp.ne.s32.totalorder %s46, %s60
      %p62 = scmp.eq.s32.totalorder %s15, 0
      %p63 = por %p61, %p62
      %s64 = ssub.s32 %s9, %s16
      %p65 = scmp.eq.s32.totalorder %s64, 0
      %s67 = sadd.s32 %s66, 1
      %s68 = scalar_select %p65, %s66, %s67
      %p71 = pneg %p65
      %p72 = scmp.eq.s32.totalorder %s9, 1
      %p73 = por %p71, %p72
      %p74 = scmp.ne.s32.totalorder %s66, %s69
      %p75 = scmp.eq.s32.totalorder %s9, 0
      %p76 = por %p74, %p75
      %p77 = scmp.ne.s32.totalorder %s66, %s69
      %p78 = scmp.eq.s32.totalorder %s14, 1
      %p79 = por %p77, %p78
      %p80 = scmp.ne.s32.totalorder %s69, %s70
      %p81 = scmp.eq.s32.totalorder %s14, 0
      %p82 = por %p80, %p81
      %p83 = scmp.ne.s32.totalorder %s69, %s70
      %p84 = scmp.eq.s32.totalorder %s15, 1
      %p85 = por %p83, %p84
      %p87 = scmp.ne.s32.totalorder %s70, %s86
      %p88 = scmp.eq.s32.totalorder %s15, 0
      %p89 = por %p87, %p88
      %p90 = scmp.le.s32.totalorder 1, %s9
      %p91 = scmp.lt.s32.totalorder %s9, 3
      %p92 = pnand %p90, %p91
      %p93 = pneg %p92
      // Predicated region
      $region9: #{docbert_forward.1} parent=5 // pred_check
        _
      $region10: #{docbert_forward.1} parent=5 // pred_check_branch
        %95 = sbr.rel (%p92) target = $region12
      $region11: #{docbert_forward.1} parent=5 // pred_region
        %s96 = ssub.s32 %s9, 1
        // Predicated region
        $region13: #{docbert_forward.1} parent=11 // pred_check
          %p97 = pneg %p56
        $region14: #{docbert_forward.1} parent=11 // pred_check_branch
          %99 = sbr.rel (%p97) target = $region16
        $region15: #{docbert_forward.1} parent=11 // pred_region
          %s101 = ssub.s32 8064, 8064
          %102 = vsyncadd [#allocation3], %s101
          %s103 = sshll.u32 [#allocation2], 4
          %s104 = int_to_ptr.vmem [resolvable:$true] %s103
          %109 = dma.hbm_to_vmem [thread:$0]  %s1, 8064, %s104, [#allocation3], 128, 128, 8
        $region16: #{docbert_forward.1} parent=11 // pred_fallthru
          _
      $region12: #{docbert_forward.1} parent=5 // pred_fallthru
        _
      %p110 = scmp.lt.s32.totalorder %s9, 2
      // Predicated region
      $region17: #{docbert_forward.1} parent=5 // pred_check
        %p111 = pneg %p110
      $region18: #{docbert_forward.1} parent=5 // pred_check_branch
        %113 = sbr.rel (%p111) target = $region20
      $region19: #{docbert_forward.1} parent=5 // pred_region
        // Predicated region
        $region21: #{docbert_forward.1} parent=19 // pred_check
          %p114 = pneg %p29
        $region22: #{docbert_forward.1} parent=19 // pred_check_branch
          %116 = sbr.rel (%p114) target = $region24
        $region23: #{docbert_forward.1} parent=19 // pred_region
          %p117 = scmp.lt.s32.totalorder %s9, 1
          %s118 = scalar_select %p117, %s9, 1
          %s119 = smul.addr %s118, 5
          %s120 = smul.addr %s119, 8
          %s121 = scalar_lea.vmem %s0, %s120
        $region24: #{docbert_forward.1} parent=19 // pred_fallthru
          _
      $region20: #{docbert_forward.1} parent=5 // pred_fallthru
        _
      %p122 = scmp.le.s32.totalorder 1, %s9
      %p123 = scmp.lt.s32.totalorder %s9, 3
      %p124 = pnand %p122, %p123
      %p125 = pneg %p124
      // Predicated region
      $region25: #{docbert_forward.1} parent=5 // pred_check
        _
      $region26: #{docbert_forward.1} parent=5 // pred_check_branch
        %127 = sbr.rel (%p124) target = $region28
      $region27: #{docbert_forward.1} parent=5 // pred_region
        %s128 = ssub.s32 %s9, 1
        // Predicated region
        $region29: #{docbert_forward.1} parent=27 // pred_check
          %p129 = pneg %p56
        $region30: #{docbert_forward.1} parent=27 // pred_check_branch
          %131 = sbr.rel (%p129) target = $region32
        $region31: #{docbert_forward.1} parent=27 // pred_region
          %132 = dma.done [#allocation3], 8064
        $region32: #{docbert_forward.1} parent=27 // pred_fallthru
          _
        %p133 = scmp.lt.s32.totalorder %s14, 1
        %s134 = scalar_select %p133, %s14, 1
        %s135 = smul.addr %s134, 5
        %s136 = smul.addr %s135, 8
        %s137 = scalar_lea.vmem %s0, %s136
        %p138 = pneg %p35
        %p139 = pneg %p32
        %p140 = pneg %p56
        %p141 = pneg %p53
        %p142 = pneg %p82
        %p143 = pneg %p79
        %p144 = scmp.lt.s32.totalorder %s14, 1
        %s145 = scalar_select %p144, %s14, 1
        %s146 = smul.addr %s145, 8
        %s147 = scalar_lea.vmem %s2, %s146
        %p148 = scmp.lt.s32.totalorder %s14, 1
        %s149 = scalar_select %p148, %s14, 1
        %s150 = smul.addr %s149, 5
        %s151 = smul.addr %s150, 8
        %s152 = scalar_lea.vmem %s0, %s151
        %p153 = scmp.lt.s32.totalorder %s14, 1
        %s154 = scalar_select %p153, %s14, 1
        %s155 = smul.addr %s154, 8
        %s156 = scalar_lea.vmem %s2, %s155
        %v157 = vld [vmem:[%s152] sm:$0xff]
        %v158 = vld [vmem:[%s152 + $0x8] sm:$0xff]
        %v159 = vld [vmem:[%s152 + $0x10] sm:$0xff]
        %v160 = vld [vmem:[%s152 + $0x18] sm:$0xff]
        %v161 = vld [vmem:[%s152 + $0x20] sm:$0x1]
        %v162 = vcvt.s32.f32 %v161
        %v163 = vlaneseq
        %v164 = vand.u32 %v163, 127
        %165 = vset.pattern.permute.xlu0 0
        %166 = vperm.xlu0 %165, %v157
        %v167 = vpop.permute.xlu0 %166
        %168 = vset.pattern.permute.xlu0 0
        %169 = vperm.xlu0 %168, %v158
        %v170 = vpop.permute.xlu0 %169
        %171 = vset.pattern.permute.xlu0 0
        %172 = vperm.xlu0 %171, %v159
        %v173 = vpop.permute.xlu0 %172
        %174 = vset.pattern.permute.xlu0 0
        %175 = vperm.xlu0 %174, %v160
        %v176 = vpop.permute.xlu0 %175
        %vm177 = vcmp.eq.s32.totalorder %v167, %v164
        %vm178 = vcmp.eq.s32.totalorder %v170, %v164
        %vm179 = vcmp.eq.s32.totalorder %v173, %v164
        %vm180 = vcmp.eq.s32.totalorder %v176, %v164
        %v181 = vsel %vm177, 1, 0
        %v182 = vsel %vm178, 1, 0
        %v183 = vsel %vm179, 1, 0
        %v184 = vsel %vm180, 1, 0
        %v185 = vcvt.s32.f32 %v181
        %v186 = vcvt.s32.f32 %v182
        %v187 = vcvt.s32.f32 %v183
        %v188 = vcvt.s32.f32 %v184
        %v189 = vld [vmem:[#allocation2] sm:$0xff]
        %v190 = vld [vmem:[#allocation2 + $0x8] sm:$0xff]
        %v191 = vld [vmem:[#allocation2 + $0x10] sm:$0xff]
        %v192 = vld [vmem:[#allocation2 + $0x18] sm:$0xff]
        %v193 = vld [vmem:[#allocation2 + $0x20] sm:$0xff]
        %v194 = vld [vmem:[#allocation2 + $0x28] sm:$0xff]
        %v195 = vld [vmem:[#allocation2 + $0x30] sm:$0xff]
        %v196 = vld [vmem:[#allocation2 + $0x38] sm:$0xff]
        %v197 = vld [vmem:[#allocation2 + $0x40] sm:$0xff]
        %v198 = vld [vmem:[#allocation2 + $0x48] sm:$0xff]
        %v199 = vld [vmem:[#allocation2 + $0x50] sm:$0xff]
        %v200 = vld [vmem:[#allocation2 + $0x58] sm:$0xff]
        %vm201 = vcmask 523264
        %v203 = vsel %vm201, %v185, 0
        %v206 = vsel %vm201, %v186, 0
        %v209 = vsel %vm201, %v187, 0
        %v212 = vsel %vm201, %v188, 0
        %214 = vmatprep.subr.mxu0 0.0
        %215 = vmatpush1.msra.mxu0 %v189
        %216 = vmatprep.subr.mxu0 0.0
        %217 = vmatpush1.msra.mxu0 %v190
        %218 = vmatprep.subr.mxu0 0.0
        %219 = vmatpush1.msra.mxu0 %v191
        %220 = vmatprep.subr.mxu0 0.0
        %221 = vmatpush1.msra.mxu0 %v192
        %222 = vmatprep.subr.mxu0 0.0
        %223 = vmatpush1.msra.mxu0 %v193
        %224 = vmatprep.subr.mxu0 0.0
        %225 = vmatpush1.msra.mxu0 %v194
        %226 = vmatprep.subr.mxu0 0.0
        %227 = vmatpush1.msra.mxu0 %v195
        %228 = vmatprep.subr.mxu0 0.0
        %229 = vmatpush1.msra.mxu0 %v196
        %230 = vmatprep.subr.mxu0 0.0
        %231 = vmatpush1.msra.mxu0 0.0
        %232 = vmatprep.subr.mxu0 0.0
        %233 = vmatpush1.msra.mxu0 0.0
        %234 = vmatprep.subr.mxu0 0.0
        %235 = vmatpush1.msra.mxu0 0.0
        %236 = vmatprep.subr.mxu0 0.0
        %237 = vmatpush1.msra.mxu0 0.0
        %238 = vmatprep.subr.mxu0 0.0
        %239 = vmatpush1.msra.mxu0 0.0
        %240 = vmatprep.subr.mxu0 0.0
        %241 = vmatpush1.msra.mxu0 0.0
        %242 = vmatprep.subr.mxu0 0.0
        %243 = vmatpush1.msra.mxu0 0.0
        %244 = vmatprep.subr.mxu0 0.0
        %245 = vmatpush1.msra.mxu0 0.0
        %246 = vmatprep.subr.mxu0 0.0
        %247 = vmatpush1.msra.mxu0 0.0
        %248 = vmatprep.subr.mxu0 0.0
        %249 = vmatpush1.msra.mxu0 0.0
        %250 = vmatprep.subr.mxu0 0.0
        %251 = vmatpush1.msra.mxu0 0.0
        %252 = vmatprep.subr.mxu0 0.0
        %253 = vmatpush1.msra.mxu0 0.0
        %254 = vmatprep.subr.mxu0 0.0
        %255 = vmatpush1.msra.mxu0 0.0
        %256 = vmatprep.subr.mxu0 0.0
        %257 = vmatpush1.msra.mxu0 0.0
        %258 = vmatprep.subr.mxu0 0.0
        %259 = vmatpush1.msra.mxu0 0.0
        %260 = vmatprep.subr.mxu0 0.0
        %261 = vmatpush1.msra.mxu0 0.0
        %262 = vmatprep.subr.mxu0 0.0
        %263 = vmatpush1.msra.mxu0 0.0
        %264 = vmatprep.subr.mxu0 0.0
        %265 = vmatpush1.msra.mxu0 0.0
        %266 = vmatprep.subr.mxu0 0.0
        %267 = vmatpush1.msra.mxu0 0.0
        %268 = vmatprep.subr.mxu0 0.0
        %269 = vmatpush1.msra.mxu0 0.0
        %270 = vmatprep.subr.mxu0 0.0
        %271 = vmatpush1.msra.mxu0 0.0
        %272 = vmatprep.subr.mxu0 0.0
        %273 = vmatpush1.msra.mxu0 0.0
        %274 = vmatprep.subr.mxu0 0.0
        %275 = vmatpush1.msra.mxu0 0.0
        %276 = vmatprep.subr.mxu0 0.0
        %277 = vmatpush1.msra.mxu0 0.0
        %278 = vmatprep.mubr.f32.mxu0 0.0
        %279 = vmatmul.mubr.f32.gmra.mrb[0].mxu0 %v203
        %v280 = vpop.f32.mrb[0].mxu0
        %v281 = vadd.f32 %v197, %v280
        %v282 = vpop.f32.mrb[0].mxu0
        %283 = vmatprep.mubr.f32.mxu0 0.0
        %284 = vmatmul.mubr.f32.gmra.mrb[0].mxu0 %v206
        %v285 = vpop.f32.mrb[0].mxu0
        %v286 = vadd.f32 %v198, %v285
        %v287 = vpop.f32.mrb[0].mxu0
        %288 = vmatprep.mubr.f32.mxu0 0.0
        %289 = vmatmul.mubr.f32.gmra.mrb[0].mxu0 %v209
        %v290 = vpop.f32.mrb[0].mxu0
        %v291 = vadd.f32 %v199, %v290
        %v292 = vpop.f32.mrb[0].mxu0
        %293 = vmatprep.mubr.f32.mxu0 0.0
        %294 = vmatmul.mubr.f32.gmra.mrb[0].mxu0 %v212
        %v295 = vpop.f32.mrb[0].mxu0
        %v296 = vadd.f32 %v200, %v295
        %v297 = vpop.f32.mrb[0].mxu0
        %298 = vdwg.mxu0
        %v299 = vld [vmem:[#allocation2 + $0x60] sm:$0xff]
        %vm300 = vcmask 261120
        %v301 = vsel %vm300, %v281, 0.0
        %302 = vadd.xlane.f32.xlu0 %v301
        %v303 = vpop.xlane.xlu0 %302
        %v304 = vsel %vm300, %v286, 0.0
        %305 = vadd.xlane.f32.xlu0 %v304
        %v306 = vpop.xlane.xlu0 %305
        %v307 = vsel %vm300, %v291, 0.0
        %308 = vadd.xlane.f32.xlu0 %v307
        %v309 = vpop.xlane.xlu0 %308
        %v310 = vsel %vm300, %v296, 0.0
        %311 = vadd.xlane.f32.xlu0 %v310
        %v312 = vpop.xlane.xlu0 %311
        %v313 = vrcp.pop 32.0
        %v314 = vmul.f32 %v303, %v313
        %v315 = vmul.f32 %v306, %v313
        %v316 = vmul.f32 %v309, %v313
        %v317 = vmul.f32 %v312, %v313
        %v318 = vsub.f32 %v281, %v314
        %v319 = vsub.f32 %v286, %v315
        %v320 = vsub.f32 %v291, %v316
        %v321 = vsub.f32 %v296, %v317
        %v322 = vmul.f32 %v318, %v318
        %v323 = vmul.f32 %v319, %v319
        %v324 = vmul.f32 %v320, %v320
        %v325 = vmul.f32 %v321, %v321
        %v326 = vsel %vm300, %v322, 0.0
        %327 = vadd.xlane.f32.xlu0 %v326
        %v328 = vpop.xlane.xlu0 %327
        %v329 = vsel %vm300, %v323, 0.0
        %330 = vadd.xlane.f32.xlu0 %v329
        %v331 = vpop.xlane.xlu0 %330
        %v332 = vsel %vm300, %v324, 0.0
        %333 = vadd.xlane.f32.xlu0 %v332
        %v334 = vpop.xlane.xlu0 %333
        %v335 = vsel %vm300, %v325, 0.0
        %336 = vadd.xlane.f32.xlu0 %v335
        %v337 = vpop.xlane.xlu0 %336
        %v338 = vmul.f32 %v328, %v313
        %v339 = vmul.f32 %v331, %v313
        %v340 = vmul.f32 %v334, %v313
        %v341 = vmul.f32 %v337, %v313
        %v342 = vadd.f32 %v338, 1e-12
        %v343 = vadd.f32 %v339, 1e-12
        %v344 = vadd.f32 %v340, 1e-12
        %v345 = vadd.f32 %v341, 1e-12
        %v346 = vrsqrt.pop %v342
        %v347 = vrsqrt.pop %v343
        %v348 = vrsqrt.pop %v344
        %v349 = vrsqrt.pop %v345
        %v350 = vmul.f32 %v318, %v346
        %v351 = vmul.f32 %v319, %v347
        %v352 = vmul.f32 %v320, %v348
        %v353 = vmul.f32 %v321, %v349
        %v354 = vlaneseq
        %v355 = vshrl.u32 %v354, 7
        %v356 = vsub.s32 0, %v355
        %v357 = vrot.slane %v299, %v356
        %v358 = vmul.f32 %v350, %v357
        %v359 = vmul.f32 %v351, %v357
        %v360 = vmul.f32 %v352, %v357
        %v361 = vmul.f32 %v353, %v357
        %v362 = vlaneseq
        %v363 = vshrl.u32 %v362, 7
        %v364 = vsub.s32 1, %v363
        %v365 = vrot.slane %v299, %v364
        %v366 = vadd.f32 %v358, %v365
        %v367 = vadd.f32 %v359, %v365
        %v368 = vadd.f32 %v360, %v365
        %v369 = vadd.f32 %v361, %v365
        %v370 = vlaneseq
        %v371 = vshrl.u32 %v370, 7
        %v372 = vadd.s32 %v371, 8
        %v373 = vadd.s32 %v371, 16
        %v374 = vadd.s32 %v371, 24
        %v375 = vshra.s32 %v371, 3
        %v376 = vshra.s32 %v372, 3
        %v377 = vshra.s32 %v373, 3
        %v378 = vshra.s32 %v374, 3
        %v379 = vshra.s32 %v164, 3
        %vm380 = vcmp.eq.s32.totalorder %v375, %v379
        %vm381 = vcmp.eq.s32.totalorder %v376, %v379
        %vm382 = vcmp.eq.s32.totalorder %v377, %v379
        %vm383 = vcmp.eq.s32.totalorder %v378, %v379
        %v384 = vsub.f32 1.0, %v162
        %v385 = vmul.f32 %v384, -1e+09
        %v386 = vlaneseq
        %v387 = vshrl.u32 %v386, 7
        %v388 = vsub.s32 0, %v387
        %v389 = vrot.slane %v385, %v388
        %v390 = vsel %vm380, %v389, -1e+09
        %v391 = vsel %vm381, %v389, -1e+09
        %v392 = vsel %vm382, %v389, -1e+09
        %v393 = vsel %vm383, %v389, -1e+09
        %v394 = vld [vmem:[#allocation2 + $0x148] sm:$0xff]
        %v395 = vld [vmem:[#allocation2 + $0x68] sm:$0xff]
        %v396 = vld [vmem:[#allocation2 + $0x70] sm:$0xff]
        %v397 = vld [vmem:[#allocation2 + $0x78] sm:$0xff]
        %v398 = vld [vmem:[#allocation2 + $0x80] sm:$0xff]
        %v399 = vlaneseq
        %v400 = vshrl.u32 %v399, 7
        %v401 = vsub.s32 0, %v400
        %v402 = vrot.slane %v394, %v401
        %v404 = vsel %vm300, %v366, 0
        %v407 = vsel %vm300, %v367, 0
        %v410 = vsel %vm300, %v368, 0
        %v413 = vsel %vm300, %v369, 0
        %415 = vmatprep.subr.mxu0 0.0
        %416 = vmatpush1.msra.mxu0 %v395
        %417 = vmatprep.subr.mxu0 0.0
        %418 = vmatpush1.msra.mxu0 %v396
        %419 = vmatprep.subr.mxu0 0.0
        %420 = vmatpush1.msra.mxu0 %v397
        %421 = vmatprep.subr.mxu0 0.0
        %422 = vmatpush1.msra.mxu0 %v398
        %423 = vmatprep.subr.mxu0 0.0
        %424 = vmatpush1.msra.mxu0 0.0
        %425 = vmatprep.subr.mxu0 0.0
        %426 = vmatpush1.msra.mxu0 0.0
        %427 = vmatprep.subr.mxu0 0.0
        %428 = vmatpush1.msra.mxu0 0.0
        %429 = vmatprep.subr.mxu0 0.0
        %430 = vmatpush1.msra.mxu0 0.0
        %431 = vmatprep.subr.mxu0 0.0
        %432 = vmatpush1.msra.mxu0 0.0
        %433 = vmatprep.subr.mxu0 0.0
        %434 = vmatpush1.msra.mxu0 0.0
        %435 = vmatprep.subr.mxu0 0.0
        %436 = vmatpush1.msra.mxu0 0.0
        %437 = vmatprep.subr.mxu0 0.0
        %438 = vmatpush1.msra.mxu0 0.0
        %439 = vmatprep.subr.mxu0 0.0
        %440 = vmatpush1.msra.mxu0 0.0
        %441 = vmatprep.subr.mxu0 0.0
        %442 = vmatpush1.msra.mxu0 0.0
        %443 = vmatprep.subr.mxu0 0.0
        %444 = vmatpush1.msra.mxu0 0.0
        %445 = vmatprep.subr.mxu0 0.0
        %446 = vmatpush1.msra.mxu0 0.0
        %447 = vmatprep.subr.mxu0 0.0
        %448 = vmatpush1.msra.mxu0 0.0
        %449 = vmatprep.subr.mxu0 0.0
        %450 = vmatpush1.msra.mxu0 0.0
        %451 = vmatprep.subr.mxu0 0.0
        %452 = vmatpush1.msra.mxu0 0.0
        %453 = vmatprep.subr.mxu0 0.0
        %454 = vmatpush1.msra.mxu0 0.0
        %455 = vmatprep.subr.mxu0 0.0
        %456 = vmatpush1.msra.mxu0 0.0
        %457 = vmatprep.subr.mxu0 0.0
        %458 = vmatpush1.msra.mxu0 0.0
        %459 = vmatprep.subr.mxu0 0.0
        %460 = vmatpush1.msra.mxu0 0.0
        %461 = vmatprep.subr.mxu0 0.0
        %462 = vmatpush1.msra.mxu0 0.0
        %463 = vmatprep.subr.mxu0 0.0
        %464 = vmatpush1.msra.mxu0 0.0
        %465 = vmatprep.subr.mxu0 0.0
        %466 = vmatpush1.msra.mxu0 0.0
        %467 = vmatprep.subr.mxu0 0.0
        %468 = vmatpush1.msra.mxu0 0.0
        %469 = vmatprep.subr.mxu0 0.0
        %470 = vmatpush1.msra.mxu0 0.0
        %471 = vmatprep.subr.mxu0 0.0
        %472 = vmatpush1.msra.mxu0 0.0
        %473 = vmatprep.subr.mxu0 0.0
        %474 = vmatpush1.msra.mxu0 0.0
        %475 = vmatprep.subr.mxu0 0.0
        %476 = vmatpush1.msra.mxu0 0.0
        %477 = vmatprep.subr.mxu0 0.0
        %478 = vmatpush1.msra.mxu0 0.0
        %479 = vmatprep.mubr.f32.mxu0 0.0
        %480 = vmatmul.mubr.f32.gmra.mrb[0].mxu0 %v404
        %v481 = vpop.f32.mrb[0].mxu0
        %v482 = vadd.f32 %v402, %v481
        %v483 = vpop.f32.mrb[0].mxu0
        %484 = vmatprep.mubr.f32.mxu0 0.0
        %485 = vmatmul.mubr.f32.gmra.mrb[0].mxu0 %v407
        %v486 = vpop.f32.mrb[0].mxu0
        %v487 = vadd.f32 %v402, %v486
        %v488 = vpop.f32.mrb[0].mxu0
        %489 = vmatprep.mubr.f32.mxu0 0.0
        %490 = vmatmul.mubr.f32.gmra.mrb[0].mxu0 %v410
        %v491 = vpop.f32.mrb[0].mxu0
        %v492 = vadd.f32 %v402, %v491
        %v493 = vpop.f32.mrb[0].mxu0
        %494 = vmatprep.mubr.f32.mxu0 0.0
        %495 = vmatmul.mubr.f32.gmra.mrb[0].mxu0 %v413
        %v496 = vpop.f32.mrb[0].mxu0
        %v497 = vadd.f32 %v402, %v496
        %v498 = vpop.f32.mrb[0].mxu0
        %499 = vdwg.mxu0
        %v500 = vld [vmem:[#allocation2 + $0x88] sm:$0xff]
        %v501 = vld [vmem:[#allocation2 + $0x90] sm:$0xff]
        %v502 = vld [vmem:[#allocation2 + $0x98] sm:$0xff]
        %v503 = vld [vmem:[#allocation2 + $0xa0] sm:$0xff]
        %v504 = vlaneseq
        %v505 = vshrl.u32 %v504, 7
        %v506 = vsub.s32 1, %v505
        %v507 = vrot.slane %v394, %v506
        %508 = vmatprep.subr.mxu0 0.0
        %509 = vmatpush1.msra.mxu0 %v500
        %510 = vmatprep.subr.mxu0 0.0
        %511 = vmatpush1.msra.mxu0 %v501
        %512 = vmatprep.subr.mxu0 0.0
        %513 = vmatpush1.msra.mxu0 %v502
        %514 = vmatprep.subr.mxu0 0.0
        %515 = vmatpush1.msra.mxu0 %v503
        %516 = vmatprep.subr.mxu0 0.0
        %517 = vmatpush1.msra.mxu0 0.0
        %518 = vmatprep.subr.mxu0 0.0
        %519 = vmatpush1.msra.mxu0 0.0
        %520 = vmatprep.subr.mxu0 0.0
        %521 = vmatpush1.msra.mxu0 0.0
        %522 = vmatprep.subr.mxu0 0.0
        %523 = vmatpush1.msra.mxu0 0.0
        %524 = vmatprep.subr.mxu0 0.0
        %525 = vmatpush1.msra.mxu0 0.0
        %526 = vmatprep.subr.mxu0 0.0
        %527 = vmatpush1.msra.mxu0 0.0
        %528 = vmatprep.subr.mxu0 0.0
        %529 = vmatpush1.msra.mxu0 0.0
        %530 = vmatprep.subr.mxu0 0.0
        %531 = vmatpush1.msra.mxu0 0.0
        %532 = vmatprep.subr.mxu0 0.0
        %533 = vmatpush1.msra.mxu0 0.0
        %534 = vmatprep.subr.mxu0 0.0
        %535 = vmatpush1.msra.mxu0 0.0
        %536 = vmatprep.subr.mxu0 0.0
        %537 = vmatpush1.msra.mxu0 0.0
        %538 = vmatprep.subr.mxu0 0.0
        %539 = vmatpush1.msra.mxu0 0.0
        %540 = vmatprep.subr.mxu0 0.0
        %541 = vmatpush1.msra.mxu0 0.0
        %542 = vmatprep.subr.mxu0 0.0
        %543 = vmatpush1.msra.mxu0 0.0
        %544 = vmatprep.subr.mxu0 0.0
        %545 = vmatpush1.msra.mxu0 0.0
        %546 = vmatprep.subr.mxu0 0.0
        %547 = vmatpush1.msra.mxu0 0.0
        %548 = vmatprep.subr.mxu0 0.0
        %549 = vmatpush1.msra.mxu0 0.0
        %550 = vmatprep.subr.mxu0 0.0
        %551 = vmatpush1.msra.mxu0 0.0
        %552 = vmatprep.subr.mxu0 0.0
        %553 = vmatpush1.msra.mxu0 0.0
        %554 = vmatprep.subr.mxu0 0.0
        %555 = vmatpush1.msra.mxu0 0.0
        %556 = vmatprep.subr.mxu0 0.0
        %557 = vmatpush1.msra.mxu0 0.0
        %558 = vmatprep.subr.mxu0 0.0
        %559 = vmatpush1.msra.mxu0 0.0
        %560 = vmatprep.subr.mxu0 0.0
        %561 = vmatpush1.msra.mxu0 0.0
        %562 = vmatprep.subr.mxu0 0.0
        %563 = vmatpush1.msra.mxu0 0.0
        %564 = vmatprep.subr.mxu0 0.0
        %565 = vmatpush1.msra.mxu0 0.0
        %566 = vmatprep.subr.mxu0 0.0
        %567 = vmatpush1.msra.mxu0 0.0
        %568 = vmatprep.subr.mxu0 0.0
        %569 = vmatpush1.msra.mxu0 0.0
        %570 = vmatprep.subr.mxu0 0.0
        %571 = vmatpush1.msra.mxu0 0.0
        %572 = vmatprep.mubr.f32.mxu0 0.0
        %573 = vmatmul.mubr.f32.gmra.mrb[0].mxu0 %v404
        %v574 = vpop.f32.mrb[0].mxu0
        %v575 = vadd.f32 %v507, %v574
        %v576 = vpop.f32.mrb[0].mxu0
        %577 = vmatprep.mubr.f32.mxu0 0.0
        %578 = vmatmul.mubr.f32.gmra.mrb[0].mxu0 %v407
        %v579 = vpop.f32.mrb[0].mxu0
        %v580 = vadd.f32 %v507, %v579
        %v581 = vpop.f32.mrb[0].mxu0
        %582 = vmatprep.mubr.f32.mxu0 0.0
        %583 = vmatmul.mubr.f32.gmra.mrb[0].mxu0 %v410
        %v584 = vpop.f32.mrb[0].mxu0
        %v585 = vadd.f32 %v507, %v584
        %v586 = vpop.f32.mrb[0].mxu0
        %587 = vmatprep.mubr.f32.mxu0 0.0
        %588 = vmatmul.mubr.f32.gmra.mrb[0].mxu0 %v413
        %v589 = vpop.f32.mrb[0].mxu0
        %v590 = vadd.f32 %v507, %v589
        %v591 = vpop.f32.mrb[0].mxu0
        %592 = vdwg.mxu0
        %v593 = vld [vmem:[#allocation2 + $0xa8] sm:$0xff]
        %v594 = vld [vmem:[#allocation2 + $0xb0] sm:$0xff]
        %v595 = vld [vmem:[#allocation2 + $0xb8] sm:$0xff]
        %v596 = vld [vmem:[#allocation2 + $0xc0] sm:$0xff]
        %v597 = vlaneseq
        %v598 = vshrl.u32 %v597, 7
        %v599 = vsub.s32 2, %v598
        %v600 = vrot.slane %v394, %v599
        %601 = vmatprep.subr.mxu0 0.0
        %602 = vmatpush1.msra.mxu0 %v593
        %603 = vmatprep.subr.mxu0 0.0
        %604 = vmatpush1.msra.mxu0 %v594
        %605 = vmatprep.subr.mxu0 0.0
        %606 = vmatpush1.msra.mxu0 %v595
        %607 = vmatprep.subr.mxu0 0.0
        %608 = vmatpush1.msra.mxu0 %v596
        %609 = vmatprep.subr.mxu0 0.0
        %610 = vmatpush1.msra.mxu0 0.0
        %611 = vmatprep.subr.mxu0 0.0
        %612 = vmatpush1.msra.mxu0 0.0
        %613 = vmatprep.subr.mxu0 0.0
        %614 = vmatpush1.msra.mxu0 0.0
        %615 = vmatprep.subr.mxu0 0.0
        %616 = vmatpush1.msra.mxu0 0.0
        %617 = vmatprep.subr.mxu0 0.0
        %618 = vmatpush1.msra.mxu0 0.0
        %619 = vmatprep.subr.mxu0 0.0
        %620 = vmatpush1.msra.mxu0 0.0
        %621 = vmatprep.subr.mxu0 0.0
        %622 = vmatpush1.msra.mxu0 0.0
        %623 = vmatprep.subr.mxu0 0.0
        %624 = vmatpush1.msra.mxu0 0.0
        %625 = vmatprep.subr.mxu0 0.0
        %626 = vmatpush1.msra.mxu0 0.0
        %627 = vmatprep.subr.mxu0 0.0
        %628 = vmatpush1.msra.mxu0 0.0
        %629 = vmatprep.subr.mxu0 0.0
        %630 = vmatpush1.msra.mxu0 0.0
        %631 = vmatprep.subr.mxu0 0.0
        %632 = vmatpush1.msra.mxu0 0.0
        %633 = vmatprep.subr.mxu0 0.0
        %634 = vmatpush1.msra.mxu0 0.0
        %635 = vmatprep.subr.mxu0 0.0
        %636 = vmatpush1.msra.mxu0 0.0
        %637 = vmatprep.subr.mxu0 0.0
        %638 = vmatpush1.msra.mxu0 0.0
        %639 = vmatprep.subr.mxu0 0.0
        %640 = vmatpush1.msra.mxu0 0.0
        %641 = vmatprep.subr.mxu0 0.0
        %642 = vmatpush1.msra.mxu0 0.0
        %643 = vmatprep.subr.mxu0 0.0
        %644 = vmatpush1.msra.mxu0 0.0
        %645 = vmatprep.subr.mxu0 0.0
        %646 = vmatpush1.msra.mxu0 0.0
        %647 = vmatprep.subr.mxu0 0.0
        %648 = vmatpush1.msra.mxu0 0.0
        %649 = vmatprep.subr.mxu0 0.0
        %650 = vmatpush1.msra.mxu0 0.0
        %651 = vmatprep.subr.mxu0 0.0
        %652 = vmatpush1.msra.mxu0 0.0
        %653 = vmatprep.subr.mxu0 0.0
        %654 = vmatpush1.msra.mxu0 0.0
        %655 = vmatprep.subr.mxu0 0.0
        %656 = vmatpush1.msra.mxu0 0.0
        %657 = vmatprep.subr.mxu0 0.0
        %658 = vmatpush1.msra.mxu0 0.0
        %659 = vmatprep.subr.mxu0 0.0
        %660 = vmatpush1.msra.mxu0 0.0
        %661 = vmatprep.subr.mxu0 0.0
        %662 = vmatpush1.msra.mxu0 0.0
        %663 = vmatprep.subr.mxu0 0.0
        %664 = vmatpush1.msra.mxu0 0.0
        %665 = vmatprep.mubr.f32.mxu0 0.0
        %666 = vmatmul.mubr.f32.gmra.mrb[0].mxu0 %v404
        %v667 = vpop.f32.mrb[0].mxu0
        %v668 = vadd.f32 %v600, %v667
        %v669 = vpop.f32.mrb[0].mxu0
        %670 = vmatprep.mubr.f32.mxu0 0.0
        %671 = vmatmul.mubr.f32.gmra.mrb[0].mxu0 %v407
        %v672 = vpop.f32.mrb[0].mxu0
        %v673 = vadd.f32 %v600, %v672
        %v674 = vpop.f32.mrb[0].mxu0
        %675 = vmatprep.mubr.f32.mxu0 0.0
        %676 = vmatmul.mubr.f32.gmra.mrb[0].mxu0 %v410
        %v677 = vpop.f32.mrb[0].mxu0
        %v678 = vadd.f32 %v600, %v677
        %v679 = vpop.f32.mrb[0].mxu0
        %680 = vmatprep.mubr.f32.mxu0 0.0
        %681 = vmatmul.mubr.f32.gmra.mrb[0].mxu0 %v413
        %v682 = vpop.f32.mrb[0].mxu0
        %v683 = vadd.f32 %v600, %v682
        %v684 = vpop.f32.mrb[0].mxu0
        %685 = vdwg.mxu0
        %vm686 = vcmask 130048
        %v688 = vsel %vm686, %v482, 0
        %v691 = vsel %vm686, %v487, 0
        %v694 = vsel %vm686, %v492, 0
        %v697 = vsel %vm686, %v497, 0
        %v700 = vsel %vm686, %v575, 0
        %v703 = vsel %vm686, %v580, 0
        %v706 = vsel %vm686, %v585, 0
        %v709 = vsel %vm686, %v590, 0
        %711 = vmatprep.subr.mxu0 0.0
        %712 = vmatpush1.xpose.msra.mxu0 %v700
        %713 = vmatprep.subr.mxu0 0.0
        %714 = vmatpush1.xpose.msra.mxu0 %v703
        %715 = vmatprep.subr.mxu0 0.0
        %716 = vmatpush1.xpose.msra.mxu0 %v706
        %717 = vmatprep.subr.mxu0 0.0
        %718 = vmatpush1.xpose.msra.mxu0 %v709
        %719 = vmatprep.subr.mxu0 0.0
        %720 = vmatpush1.xpose.msra.mxu0 0.0
        %721 = vmatprep.subr.mxu0 0.0
        %722 = vmatpush1.xpose.msra.mxu0 0.0
        %723 = vmatprep.subr.mxu0 0.0
        %724 = vmatpush1.xpose.msra.mxu0 0.0
        %725 = vmatprep.subr.mxu0 0.0
        %726 = vmatpush1.xpose.msra.mxu0 0.0
        %727 = vmatprep.subr.mxu0 0.0
        %728 = vmatpush1.xpose.msra.mxu0 0.0
        %729 = vmatprep.subr.mxu0 0.0
        %730 = vmatpush1.xpose.msra.mxu0 0.0
        %731 = vmatprep.subr.mxu0 0.0
        %732 = vmatpush1.xpose.msra.mxu0 0.0
        %733 = vmatprep.subr.mxu0 0.0
        %734 = vmatpush1.xpose.msra.mxu0 0.0
        %735 = vmatprep.subr.mxu0 0.0
        %736 = vmatpush1.xpose.msra.mxu0 0.0
        %737 = vmatprep.subr.mxu0 0.0
        %738 = vmatpush1.xpose.msra.mxu0 0.0
        %739 = vmatprep.subr.mxu0 0.0
        %740 = vmatpush1.xpose.msra.mxu0 0.0
        %741 = vmatprep.subr.mxu0 0.0
        %742 = vmatpush1.xpose.msra.mxu0 0.0
        %743 = vmatprep.subr.mxu0 0.0
        %744 = vmatpush1.xpose.msra.mxu0 0.0
        %745 = vmatprep.subr.mxu0 0.0
        %746 = vmatpush1.xpose.msra.mxu0 0.0
        %747 = vmatprep.subr.mxu0 0.0
        %748 = vmatpush1.xpose.msra.mxu0 0.0
        %749 = vmatprep.subr.mxu0 0.0
        %750 = vmatpush1.xpose.msra.mxu0 0.0
        %751 = vmatprep.subr.mxu0 0.0
        %752 = vmatpush1.xpose.msra.mxu0 0.0
        %753 = vmatprep.subr.mxu0 0.0
        %754 = vmatpush1.xpose.msra.mxu0 0.0
        %755 = vmatprep.subr.mxu0 0.0
        %756 = vmatpush1.xpose.msra.mxu0 0.0
        %757 = vmatprep.subr.mxu0 0.0
        %758 = vmatpush1.xpose.msra.mxu0 0.0
        %759 = vmatprep.subr.mxu0 0.0
        %760 = vmatpush1.xpose.msra.mxu0 0.0
        %761 = vmatprep.subr.mxu0 0.0
        %762 = vmatpush1.xpose.msra.mxu0 0.0
        %763 = vmatprep.subr.mxu0 0.0
        %764 = vmatpush1.xpose.msra.mxu0 0.0
        %765 = vmatprep.subr.mxu0 0.0
        %766 = vmatpush1.xpose.msra.mxu0 0.0
        %767 = vmatprep.subr.mxu0 0.0
        %768 = vmatpush1.xpose.msra.mxu0 0.0
        %769 = vmatprep.subr.mxu0 0.0
        %770 = vmatpush1.xpose.msra.mxu0 0.0
        %771 = vmatprep.subr.mxu0 0.0
        %772 = vmatpush1.xpose.msra.mxu0 0.0
        %773 = vmatprep.subr.mxu0 0.0
        %774 = vmatpush1.xpose.msra.mxu0 0.0
        %775 = vmatprep.mubr.f32.mxu0 0.0
        %776 = vmatmul.mubr.f32.gmra.mrb[0].mxu0 %v688
        %v777 = vpop.f32.mrb[0].mxu0
        %v778 = vadd.f32 0.0, %v777
        %v779 = vpop.f32.mrb[0].mxu0
        %780 = vmatprep.mubr.f32.mxu0 0.0
        %781 = vmatmul.mubr.f32.gmra.mrb[0].mxu0 %v691
        %v782 = vpop.f32.mrb[0].mxu0
        %v783 = vadd.f32 0.0, %v782
        %v784 = vpop.f32.mrb[0].mxu0
        %785 = vmatprep.mubr.f32.mxu0 0.0
        %786 = vmatmul.mubr.f32.gmra.mrb[0].mxu0 %v694
        %v787 = vpop.f32.mrb[0].mxu0
        %v788 = vadd.f32 0.0, %v787
        %v789 = vpop.f32.mrb[0].mxu0
        %790 = vmatprep.mubr.f32.mxu0 0.0
        %791 = vmatmul.mubr.f32.gmra.mrb[0].mxu0 %v697
        %v792 = vpop.f32.mrb[0].mxu0
        %v793 = vadd.f32 0.0, %v792
        %v794 = vpop.f32.mrb[0].mxu0
        %795 = vdwg.mxu0
        %v796 = vmul.f32 %v778, 0.25
        %v797 = vmul.f32 %v783, 0.25
        %v798 = vmul.f32 %v788, 0.25
        %v799 = vmul.f32 %v793, 0.25
        %v800 = vadd.f32 %v796, %v390
        %v801 = vadd.f32 %v797, %v391
        %v802 = vadd.f32 %v798, %v392
        %v803 = vadd.f32 %v799, %v393
        %v804 = vsel %vm300, %v800, -inf
        %805 = vmax.xlane.f32.xlu0 %v804
        %v806 = vpop.xlane.xlu0 %805
        %v807 = vsel %vm300, %v801, -inf
        %808 = vmax.xlane.f32.xlu0 %v807
        %v809 = vpop.xlane.xlu0 %808
        %v810 = vsel %vm300, %v802, -inf
        %811 = vmax.xlane.f32.xlu0 %v810
        %v812 = vpop.xlane.xlu0 %811
        %v813 = vsel %vm300, %v803, -inf
        %814 = vmax.xlane.f32.xlu0 %v813
        %v815 = vpop.xlane.xlu0 %814
        %v816 = vsub.f32 %v800, %v806
        %v817 = vsub.f32 %v801, %v809
        %v818 = vsub.f32 %v802, %v812
        %v819 = vsub.f32 %v803, %v815
        %v820 = vmul.f32 %v816, 1.442695
        %v821 = vpow.pop %v820
        %v822 = vmul.f32 %v817, 1.442695
        %v823 = vpow.pop %v822
        %v824 = vmul.f32 %v818, 1.442695
        %v825 = vpow.pop %v824
        %v826 = vmul.f32 %v819, 1.442695
        %v827 = vpow.pop %v826
        %v828 = vsel %vm300, %v821, 0.0
        %829 = vadd.xlane.f32.xlu0 %v828
        %v830 = vpop.xlane.xlu0 %829
        %v831 = vsel %vm300, %v823, 0.0
        %832 = vadd.xlane.f32.xlu0 %v831
        %v833 = vpop.xlane.xlu0 %832
        %v834 = vsel %vm300, %v825, 0.0
        %835 = vadd.xlane.f32.xlu0 %v834
        %v836 = vpop.xlane.xlu0 %835
        %v837 = vsel %vm300, %v827, 0.0
        %838 = vadd.xlane.f32.xlu0 %v837
        %v839 = vpop.xlane.xlu0 %838
        %v840 = vrcp.pop %v830
        %v841 = vmul.f32 %v821, %v840
        %v842 = vrcp.pop %v833
        %v843 = vmul.f32 %v823, %v842
        %v844 = vrcp.pop %v836
        %v845 = vmul.f32 %v825, %v844
        %v846 = vrcp.pop %v839
        %v847 = vmul.f32 %v827, %v846
        %v849 = vsel %vm300, %v841, 0
        %v852 = vsel %vm300, %v843, 0
        %v855 = vsel %vm300, %v845, 0
        %v858 = vsel %vm300, %v847, 0
        %860 = vmatprep.subr.mxu0 0.0
        %861 = vmatpush1.msra.mxu0 %v668
        %862 = vmatprep.subr.mxu0 0.0
        %863 = vmatpush1.msra.mxu0 %v673
        %864 = vmatprep.subr.mxu0 0.0
        %865 = vmatpush1.msra.mxu0 %v678
        %866 = vmatprep.subr.mxu0 0.0
        %867 = vmatpush1.msra.mxu0 %v683
        %868 = vmatprep.subr.mxu0 0.0
        %869 = vmatpush1.msra.mxu0 0.0
        %870 = vmatprep.subr.mxu0 0.0
        %871 = vmatpush1.msra.mxu0 0.0
        %872 = vmatprep.subr.mxu0 0.0
        %873 = vmatpush1.msra.mxu0 0.0
        %874 = vmatprep.subr.mxu0 0.0
        %875 = vmatpush1.msra.mxu0 0.0
        %876 = vmatprep.subr.mxu0 0.0
        %877 = vmatpush1.msra.mxu0 0.0
        %878 = vmatprep.subr.mxu0 0.0
        %879 = vmatpush1.msra.mxu0 0.0
        %880 = vmatprep.subr.mxu0 0.0
        %881 = vmatpush1.msra.mxu0 0.0
        %882 = vmatprep.subr.mxu0 0.0
        %883 = vmatpush1.msra.mxu0 0.0
        %884 = vmatprep.subr.mxu0 0.0
        %885 = vmatpush1.msra.mxu0 0.0
        %886 = vmatprep.subr.mxu0 0.0
        %887 = vmatpush1.msra.mxu0 0.0
        %888 = vmatprep.subr.mxu0 0.0
        %889 = vmatpush1.msra.mxu0 0.0
        %890 = vmatprep.subr.mxu0 0.0
        %891 = vmatpush1.msra.mxu0 0.0
        %892 = vmatprep.subr.mxu0 0.0
        %893 = vmatpush1.msra.mxu0 0.0
        %894 = vmatprep.subr.mxu0 0.0
        %895 = vmatpush1.msra.mxu0 0.0
        %896 = vmatprep.subr.mxu0 0.0
        %897 = vmatpush1.msra.mxu0 0.0
        %898 = vmatprep.subr.mxu0 0.0
        %899 = vmatpush1.msra.mxu0 0.0
        %900 = vmatprep.subr.mxu0 0.0
        %901 = vmatpush1.msra.mxu0 0.0
        %902 = vmatprep.subr.mxu0 0.0
        %903 = vmatpush1.msra.mxu0 0.0
        %904 = vmatprep.subr.mxu0 0.0
        %905 = vmatpush1.msra.mxu0 0.0
        %906 = vmatprep.subr.mxu0 0.0
        %907 = vmatpush1.msra.mxu0 0.0
        %908 = vmatprep.subr.mxu0 0.0
        %909 = vmatpush1.msra.mxu0 0.0
        %910 = vmatprep.subr.mxu0 0.0
        %911 = vmatpush1.msra.mxu0 0.0
        %912 = vmatprep.subr.mxu0 0.0
        %913 = vmatpush1.msra.mxu0 0.0
        %914 = vmatprep.subr.mxu0 0.0
        %915 = vmatpush1.msra.mxu0 0.0
        %916 = vmatprep.subr.mxu0 0.0
        %917 = vmatpush1.msra.mxu0 0.0
        %918 = vmatprep.subr.mxu0 0.0
        %919 = vmatpush1.msra.mxu0 0.0
        %920 = vmatprep.subr.mxu0 0.0
        %921 = vmatpush1.msra.mxu0 0.0
        %922 = vmatprep.subr.mxu0 0.0
        %923 = vmatpush1.msra.mxu0 0.0
        %924 = vmatprep.mubr.f32.mxu0 0.0
        %925 = vmatmul.mubr.f32.gmra.mrb[0].mxu0 %v849
        %v926 = vpop.f32.mrb[0].mxu0
        %v927 = vadd.f32 0.0, %v926
        %v928 = vpop.f32.mrb[0].mxu0
        %929 = vmatprep.mubr.f32.mxu0 0.0
        %930 = vmatmul.mubr.f32.gmra.mrb[0].mxu0 %v852
        %v931 = vpop.f32.mrb[0].mxu0
        %v932 = vadd.f32 0.0, %v931
        %v933 = vpop.f32.mrb[0].mxu0
        %934 = vmatprep.mubr.f32.mxu0 0.0
        %935 = vmatmul.mubr.f32.gmra.mrb[0].mxu0 %v855
        %v936 = vpop.f32.mrb[0].mxu0
        %v937 = vadd.f32 0.0, %v936
        %v938 = vpop.f32.mrb[0].mxu0
        %939 = vmatprep.mubr.f32.mxu0 0.0
        %940 = vmatmul.mubr.f32.gmra.mrb[0].mxu0 %v858
        %v941 = vpop.f32.mrb[0].mxu0
        %v942 = vadd.f32 0.0, %v941
        %v943 = vpop.f32.mrb[0].mxu0
        %944 = vdwg.mxu0
        %v945 = vld [vmem:[#allocation2 + $0xc8] sm:$0xff]
        %v946 = vld [vmem:[#allocation2 + $0xd0] sm:$0xff]
        %v947 = vld [vmem:[#allocation2 + $0xd8] sm:$0xff]
        %v948 = vld [vmem:[#allocation2 + $0xe0] sm:$0xff]
        %v949 = vld [vmem:[#allocation2 + $0xe8] sm:$0xff]
        %v950 = vld [vmem:[#allocation2 + $0xf0] sm:$0xff]
        %v951 = vlaneseq
        %v952 = vshrl.u32 %v951, 7
        %v953 = vsub.s32 3, %v952
        %v954 = vrot.slane %v394, %v953
        %955 = vmatprep.subr.mxu0 0.0
        %956 = vmatpush1.msra.mxu0 %v947
        %957 = vmatprep.subr.mxu0 0.0
        %958 = vmatpush1.msra.mxu0 %v948
        %959 = vmatprep.subr.mxu0 0.0
        %960 = vmatpush1.msra.mxu0 %v949
        %961 = vmatprep.subr.mxu0 0.0
        %962 = vmatpush1.msra.mxu0 %v950
        %963 = vmatprep.subr.mxu0 0.0
        %964 = vmatpush1.msra.mxu0 0.0
        %965 = vmatprep.subr.mxu0 0.0
        %966 = vmatpush1.msra.mxu0 0.0
        %967 = vmatprep.subr.mxu0 0.0
        %968 = vmatpush1.msra.mxu0 0.0
        %969 = vmatprep.subr.mxu0 0.0
        %970 = vmatpush1.msra.mxu0 0.0
        %971 = vmatprep.subr.mxu0 0.0
        %972 = vmatpush1.msra.mxu0 0.0
        %973 = vmatprep.subr.mxu0 0.0
        %974 = vmatpush1.msra.mxu0 0.0
        %975 = vmatprep.subr.mxu0 0.0
        %976 = vmatpush1.msra.mxu0 0.0
        %977 = vmatprep.subr.mxu0 0.0
        %978 = vmatpush1.msra.mxu0 0.0
        %979 = vmatprep.subr.mxu0 0.0
        %980 = vmatpush1.msra.mxu0 0.0
        %981 = vmatprep.subr.mxu0 0.0
        %982 = vmatpush1.msra.mxu0 0.0
        %983 = vmatprep.subr.mxu0 0.0
        %984 = vmatpush1.msra.mxu0 0.0
        %985 = vmatprep.subr.mxu0 0.0
        %986 = vmatpush1.msra.mxu0 0.0
        %987 = vmatprep.subr.mxu0 0.0
        %988 = vmatpush1.msra.mxu0 0.0
        %989 = vmatprep.subr.mxu0 0.0
        %990 = vmatpush1.msra.mxu0 0.0
        %991 = vmatprep.subr.mxu0 0.0
        %992 = vmatpush1.msra.mxu0 0.0
        %993 = vmatprep.subr.mxu0 0.0
        %994 = vmatpush1.msra.mxu0 0.0
        %995 = vmatprep.subr.mxu0 0.0
        %996 = vmatpush1.msra.mxu0 0.0
        %997 = vmatprep.subr.mxu0 0.0
        %998 = vmatpush1.msra.mxu0 0.0
        %999 = vmatprep.subr.mxu0 0.0
        %1000 = vmatpush1.msra.mxu0 0.0
        %1001 = vmatprep.subr.mxu0 0.0
        %1002 = vmatpush1.msra.mxu0 0.0
        %1003 = vmatprep.subr.mxu0 0.0
        %1004 = vmatpush1.msra.mxu0 0.0
        %1005 = vmatprep.subr.mxu0 0.0
        %1006 = vmatpush1.msra.mxu0 0.0
        %1007 = vmatprep.subr.mxu0 0.0
        %1008 = vmatpush1.msra.mxu0 0.0
        %1009 = vmatprep.subr.mxu0 0.0
        %1010 = vmatpush1.msra.mxu0 0.0
        %1011 = vmatprep.subr.mxu0 0.0
        %1012 = vmatpush1.msra.mxu0 0.0
        %1013 = vmatprep.subr.mxu0 0.0
        %1014 = vmatpush1.msra.mxu0 0.0
        %1015 = vmatprep.subr.mxu0 0.0
        %1016 = vmatpush1.msra.mxu0 0.0
        %1017 = vmatprep.subr.mxu0 0.0
        %1018 = vmatpush1.msra.mxu0 0.0
        %1019 = vmatprep.mubr.f32.mxu0 0.0
        %1020 = vmatmul.mubr.f32.gmra.mrb[0].mxu0 %v404
        %v1021 = vpop.f32.mrb[0].mxu0
        %v1022 = vadd.f32 %v954, %v1021
        %v1023 = vpop.f32.mrb[0].mxu0
        %1024 = vmatprep.mubr.f32.mxu0 0.0
        %1025 = vmatmul.mubr.f32.gmra.mrb[0].mxu0 %v407
        %v1026 = vpop.f32.mrb[0].mxu0
        %v1027 = vadd.f32 %v954, %v1026
        %v1028 = vpop.f32.mrb[0].mxu0
        %1029 = vmatprep.mubr.f32.mxu0 0.0
        %1030 = vmatmul.mubr.f32.gmra.mrb[0].mxu0 %v410
        %v1031 = vpop.f32.mrb[0].mxu0
        %v1032 = vadd.f32 %v954, %v1031
        %v1033 = vpop.f32.mrb[0].mxu0
        %1034 = vmatprep.mubr.f32.mxu0 0.0
        %1035 = vmatmul.mubr.f32.gmra.mrb[0].mxu0 %v413
        %v1036 = vpop.f32.mrb[0].mxu0
        %v1037 = vadd.f32 %v954, %v1036
        %v1038 = vpop.f32.mrb[0].mxu0
        %1039 = vdwg.mxu0
        %v1040 = vld [vmem:[#allocation2 + $0xf8] sm:$0xff]
        %v1041 = vld [vmem:[#allocation2 + $0x100] sm:$0xff]
        %v1042 = vld [vmem:[#allocation2 + $0x108] sm:$0xff]
        %v1043 = vld [vmem:[#allocation2 + $0x110] sm:$0xff]
        %v1044 = vlaneseq
        %v1045 = vshrl.u32 %v1044, 7
        %v1046 = vsub.s32 4, %v1045
        %v1047 = vrot.slane %v394, %v1046
        %1048 = vmatprep.subr.mxu0 0.0
        %1049 = vmatpush1.msra.mxu0 %v1040
        %1050 = vmatprep.subr.mxu0 0.0
        %1051 = vmatpush1.msra.mxu0 %v1041
        %1052 = vmatprep.subr.mxu0 0.0
        %1053 = vmatpush1.msra.mxu0 %v1042
        %1054 = vmatprep.subr.mxu0 0.0
        %1055 = vmatpush1.msra.mxu0 %v1043
        %1056 = vmatprep.subr.mxu0 0.0
        %1057 = vmatpush1.msra.mxu0 0.0
        %1058 = vmatprep.subr.mxu0 0.0
        %1059 = vmatpush1.msra.mxu0 0.0
        %1060 = vmatprep.subr.mxu0 0.0
        %1061 = vmatpush1.msra.mxu0 0.0
        %1062 = vmatprep.subr.mxu0 0.0
        %1063 = vmatpush1.msra.mxu0 0.0
        %1064 = vmatprep.subr.mxu0 0.0
        %1065 = vmatpush1.msra.mxu0 0.0
        %1066 = vmatprep.subr.mxu0 0.0
        %1067 = vmatpush1.msra.mxu0 0.0
        %1068 = vmatprep.subr.mxu0 0.0
        %1069 = vmatpush1.msra.mxu0 0.0
        %1070 = vmatprep.subr.mxu0 0.0
        %1071 = vmatpush1.msra.mxu0 0.0
        %1072 = vmatprep.subr.mxu0 0.0
        %1073 = vmatpush1.msra.mxu0 0.0
        %1074 = vmatprep.subr.mxu0 0.0
        %1075 = vmatpush1.msra.mxu0 0.0
        %1076 = vmatprep.subr.mxu0 0.0
        %1077 = vmatpush1.msra.mxu0 0.0
        %1078 = vmatprep.subr.mxu0 0.0
        %1079 = vmatpush1.msra.mxu0 0.0
        %1080 = vmatprep.subr.mxu0 0.0
        %1081 = vmatpush1.msra.mxu0 0.0
        %1082 = vmatprep.subr.mxu0 0.0
        %1083 = vmatpush1.msra.mxu0 0.0
        %1084 = vmatprep.subr.mxu0 0.0
        %1085 = vmatpush1.msra.mxu0 0.0
        %1086 = vmatprep.subr.mxu0 0.0
        %1087 = vmatpush1.msra.mxu0 0.0
        %1088 = vmatprep.subr.mxu0 0.0
        %1089 = vmatpush1.msra.mxu0 0.0
        %1090 = vmatprep.subr.mxu0 0.0
        %1091 = vmatpush1.msra.mxu0 0.0
        %1092 = vmatprep.subr.mxu0 0.0
        %1093 = vmatpush1.msra.mxu0 0.0
        %1094 = vmatprep.subr.mxu0 0.0
        %1095 = vmatpush1.msra.mxu0 0.0
        %1096 = vmatprep.subr.mxu0 0.0
        %1097 = vmatpush1.msra.mxu0 0.0
        %1098 = vmatprep.subr.mxu0 0.0
        %1099 = vmatpush1.msra.mxu0 0.0
        %1100 = vmatprep.subr.mxu0 0.0
        %1101 = vmatpush1.msra.mxu0 0.0
        %1102 = vmatprep.subr.mxu0 0.0
        %1103 = vmatpush1.msra.mxu0 0.0
        %1104 = vmatprep.subr.mxu0 0.0
        %1105 = vmatpush1.msra.mxu0 0.0
        %1106 = vmatprep.subr.mxu0 0.0
        %1107 = vmatpush1.msra.mxu0 0.0
        %1108 = vmatprep.subr.mxu0 0.0
        %1109 = vmatpush1.msra.mxu0 0.0
        %1110 = vmatprep.subr.mxu0 0.0
        %1111 = vmatpush1.msra.mxu0 0.0
        %1112 = vmatprep.mubr.f32.mxu0 0.0
        %1113 = vmatmul.mubr.f32.gmra.mrb[0].mxu0 %v404
        %v1114 = vpop.f32.mrb[0].mxu0
        %v1115 = vadd.f32 %v1047, %v1114
        %v1116 = vpop.f32.mrb[0].mxu0
        %1117 = vmatprep.mubr.f32.mxu0 0.0
        %1118 = vmatmul.mubr.f32.gmra.mrb[0].mxu0 %v407
        %v1119 = vpop.f32.mrb[0].mxu0
        %v1120 = vadd.f32 %v1047, %v1119
        %v1121 = vpop.f32.mrb[0].mxu0
        %1122 = vmatprep.mubr.f32.mxu0 0.0
        %1123 = vmatmul.mubr.f32.gmra.mrb[0].mxu0 %v410
        %v1124 = vpop.f32.mrb[0].mxu0
        %v1125 = vadd.f32 %v1047, %v1124
        %v1126 = vpop.f32.mrb[0].mxu0
        %1127 = vmatprep.mubr.f32.mxu0 0.0
        %1128 = vmatmul.mubr.f32.gmra.mrb[0].mxu0 %v413
        %v1129 = vpop.f32.mrb[0].mxu0
        %v1130 = vadd.f32 %v1047, %v1129
        %v1131 = vpop.f32.mrb[0].mxu0
        %1132 = vdwg.mxu0
        %v1133 = vld [vmem:[#allocation2 + $0x118] sm:$0xff]
        %v1134 = vld [vmem:[#allocation2 + $0x120] sm:$0xff]
        %v1135 = vld [vmem:[#allocation2 + $0x128] sm:$0xff]
        %v1136 = vld [vmem:[#allocation2 + $0x130] sm:$0xff]
        %v1137 = vlaneseq
        %v1138 = vshrl.u32 %v1137, 7
        %v1139 = vsub.s32 5, %v1138
        %v1140 = vrot.slane %v394, %v1139
        %1141 = vmatprep.subr.mxu0 0.0
        %1142 = vmatpush1.msra.mxu0 %v1133
        %1143 = vmatprep.subr.mxu0 0.0
        %1144 = vmatpush1.msra.mxu0 %v1134
        %1145 = vmatprep.subr.mxu0 0.0
        %1146 = vmatpush1.msra.mxu0 %v1135
        %1147 = vmatprep.subr.mxu0 0.0
        %1148 = vmatpush1.msra.mxu0 %v1136
        %1149 = vmatprep.subr.mxu0 0.0
        %1150 = vmatpush1.msra.mxu0 0.0
        %1151 = vmatprep.subr.mxu0 0.0
        %1152 = vmatpush1.msra.mxu0 0.0
        %1153 = vmatprep.subr.mxu0 0.0
        %1154 = vmatpush1.msra.mxu0 0.0
        %1155 = vmatprep.subr.mxu0 0.0
        %1156 = vmatpush1.msra.mxu0 0.0
        %1157 = vmatprep.subr.mxu0 0.0
        %1158 = vmatpush1.msra.mxu0 0.0
        %1159 = vmatprep.subr.mxu0 0.0
        %1160 = vmatpush1.msra.mxu0 0.0
        %1161 = vmatprep.subr.mxu0 0.0
        %1162 = vmatpush1.msra.mxu0 0.0
        %1163 = vmatprep.subr.mxu0 0.0
        %1164 = vmatpush1.msra.mxu0 0.0
        %1165 = vmatprep.subr.mxu0 0.0
        %1166 = vmatpush1.msra.mxu0 0.0
        %1167 = vmatprep.subr.mxu0 0.0
        %1168 = vmatpush1.msra.mxu0 0.0
        %1169 = vmatprep.subr.mxu0 0.0
        %1170 = vmatpush1.msra.mxu0 0.0
        %1171 = vmatprep.subr.mxu0 0.0
        %1172 = vmatpush1.msra.mxu0 0.0
        %1173 = vmatprep.subr.mxu0 0.0
        %1174 = vmatpush1.msra.mxu0 0.0
        %1175 = vmatprep.subr.mxu0 0.0
        %1176 = vmatpush1.msra.mxu0 0.0
        %1177 = vmatprep.subr.mxu0 0.0
        %1178 = vmatpush1.msra.mxu0 0.0
        %1179 = vmatprep.subr.mxu0 0.0
        %1180 = vmatpush1.msra.mxu0 0.0
        %1181 = vmatprep.subr.mxu0 0.0
        %1182 = vmatpush1.msra.mxu0 0.0
        %1183 = vmatprep.subr.mxu0 0.0
        %1184 = vmatpush1.msra.mxu0 0.0
        %1185 = vmatprep.subr.mxu0 0.0
        %1186 = vmatpush1.msra.mxu0 0.0
        %1187 = vmatprep.subr.mxu0 0.0
        %1188 = vmatpush1.msra.mxu0 0.0
        %1189 = vmatprep.subr.mxu0 0.0
        %1190 = vmatpush1.msra.mxu0 0.0
        %1191 = vmatprep.subr.mxu0 0.0
        %1192 = vmatpush1.msra.mxu0 0.0
        %1193 = vmatprep.subr.mxu0 0.0
        %1194 = vmatpush1.msra.mxu0 0.0
        %1195 = vmatprep.subr.mxu0 0.0
        %1196 = vmatpush1.msra.mxu0 0.0
        %1197 = vmatprep.subr.mxu0 0.0
        %1198 = vmatpush1.msra.mxu0 0.0
        %1199 = vmatprep.subr.mxu0 0.0
        %1200 = vmatpush1.msra.mxu0 0.0
        %1201 = vmatprep.subr.mxu0 0.0
        %1202 = vmatpush1.msra.mxu0 0.0
        %1203 = vmatprep.subr.mxu0 0.0
        %1204 = vmatpush1.msra.mxu0 0.0
        %1205 = vmatprep.mubr.f32.mxu0 0.0
        %1206 = vmatmul.mubr.f32.gmra.mrb[0].mxu0 %v404
        %v1207 = vpop.f32.mrb[0].mxu0
        %v1208 = vadd.f32 %v1140, %v1207
        %v1209 = vpop.f32.mrb[0].mxu0
        %1210 = vmatprep.mubr.f32.mxu0 0.0
        %1211 = vmatmul.mubr.f32.gmra.mrb[0].mxu0 %v407
        %v1212 = vpop.f32.mrb[0].mxu0
        %v1213 = vadd.f32 %v1140, %v1212
        %v1214 = vpop.f32.mrb[0].mxu0
        %1215 = vmatprep.mubr.f32.mxu0 0.0
        %1216 = vmatmul.mubr.f32.gmra.mrb[0].mxu0 %v410
        %v1217 = vpop.f32.mrb[0].mxu0
        %v1218 = vadd.f32 %v1140, %v1217
        %v1219 = vpop.f32.mrb[0].mxu0
        %1220 = vmatprep.mubr.f32.mxu0 0.0
        %1221 = vmatmul.mubr.f32.gmra.mrb[0].mxu0 %v413
        %v1222 = vpop.f32.mrb[0].mxu0
        %v1223 = vadd.f32 %v1140, %v1222
        %v1224 = vpop.f32.mrb[0].mxu0
        %1225 = vdwg.mxu0
        %v1227 = vsel %vm686, %v1022, 0
        %v1230 = vsel %vm686, %v1027, 0
        %v1233 = vsel %vm686, %v1032, 0
        %v1236 = vsel %vm686, %v1037, 0
        %v1239 = vsel %vm686, %v1115, 0
        %v1242 = vsel %vm686, %v1120, 0
        %v1245 = vsel %vm686, %v1125, 0
        %v1248 = vsel %vm686, %v1130, 0
        %1250 = vmatprep.subr.mxu0 0.0
        %1251 = vmatpush1.xpose.msra.mxu0 %v1239
        %1252 = vmatprep.subr.mxu0 0.0
        %1253 = vmatpush1.xpose.msra.mxu0 %v1242
        %1254 = vmatprep.subr.mxu0 0.0
        %1255 = vmatpush1.xpose.msra.mxu0 %v1245
        %1256 = vmatprep.subr.mxu0 0.0
        %1257 = vmatpush1.xpose.msra.mxu0 %v1248
        %1258 = vmatprep.subr.mxu0 0.0
        %1259 = vmatpush1.xpose.msra.mxu0 0.0
        %1260 = vmatprep.subr.mxu0 0.0
        %1261 = vmatpush1.xpose.msra.mxu0 0.0
        %1262 = vmatprep.subr.mxu0 0.0
        %1263 = vmatpush1.xpose.msra.mxu0 0.0
        %1264 = vmatprep.subr.mxu0 0.0
        %1265 = vmatpush1.xpose.msra.mxu0 0.0
        %1266 = vmatprep.subr.mxu0 0.0
        %1267 = vmatpush1.xpose.msra.mxu0 0.0
        %1268 = vmatprep.subr.mxu0 0.0
        %1269 = vmatpush1.xpose.msra.mxu0 0.0
        %1270 = vmatprep.subr.mxu0 0.0
        %1271 = vmatpush1.xpose.msra.mxu0 0.0
        %1272 = vmatprep.subr.mxu0 0.0
        %1273 = vmatpush1.xpose.msra.mxu0 0.0
        %1274 = vmatprep.subr.mxu0 0.0
        %1275 = vmatpush1.xpose.msra.mxu0 0.0
        %1276 = vmatprep.subr.mxu0 0.0
        %1277 = vmatpush1.xpose.msra.mxu0 0.0
        %1278 = vmatprep.subr.mxu0 0.0
        %1279 = vmatpush1.xpose.msra.mxu0 0.0
        %1280 = vmatprep.subr.mxu0 0.0
        %1281 = vmatpush1.xpose.msra.mxu0 0.0
        %1282 = vmatprep.subr.mxu0 0.0
        %1283 = vmatpush1.xpose.msra.mxu0 0.0
        %1284 = vmatprep.subr.mxu0 0.0
        %1285 = vmatpush1.xpose.msra.mxu0 0.0
        %1286 = vmatprep.subr.mxu0 0.0
        %1287 = vmatpush1.xpose.msra.mxu0 0.0
        %1288 = vmatprep.subr.mxu0 0.0
        %1289 = vmatpush1.xpose.msra.mxu0 0.0
        %1290 = vmatprep.subr.mxu0 0.0
        %1291 = vmatpush1.xpose.msra.mxu0 0.0
        %1292 = vmatprep.subr.mxu0 0.0
        %1293 = vmatpush1.xpose.msra.mxu0 0.0
        %1294 = vmatprep.subr.mxu0 0.0
        %1295 = vmatpush1.xpose.msra.mxu0 0.0
        %1296 = vmatprep.subr.mxu0 0.0
        %1297 = vmatpush1.xpose.msra.mxu0 0.0
        %1298 = vmatprep.subr.mxu0 0.0
        %1299 = vmatpush1.xpose.msra.mxu0 0.0
        %1300 = vmatprep.subr.mxu0 0.0
        %1301 = vmatpush1.xpose.msra.mxu0 0.0
        %1302 = vmatprep.subr.mxu0 0.0
        %1303 = vmatpush1.xpose.msra.mxu0 0.0
        %1304 = vmatprep.subr.mxu0 0.0
        %1305 = vmatpush1.xpose.msra.mxu0 0.0
        %1306 = vmatprep.subr.mxu0 0.0
        %1307 = vmatpush1.xpose.msra.mxu0 0.0
        %1308 = vmatprep.subr.mxu0 0.0
        %1309 = vmatpush1.xpose.msra.mxu0 0.0
        %1310 = vmatprep.subr.mxu0 0.0
        %1311 = vmatpush1.xpose.msra.mxu0 0.0
        %1312 = vmatprep.subr.mxu0 0.0
        %1313 = vmatpush1.xpose.msra.mxu0 0.0
        %1314 = vmatprep.mubr.f32.mxu0 0.0
        %1315 = vmatmul.mubr.f32.gmra.mrb[0].mxu0 %v1227
        %v1316 = vpop.f32.mrb[0].mxu0
        %v1317 = vadd.f32 0.0, %v1316
        %v1318 = vpop.f32.mrb[0].mxu0
        %1319 = vmatprep.mubr.f32.mxu0 0.0
        %1320 = vmatmul.mubr.f32.gmra.mrb[0].mxu0 %v1230
        %v1321 = vpop.f32.mrb[0].mxu0
        %v1322 = vadd.f32 0.0, %v1321
        %v1323 = vpop.f32.mrb[0].mxu0
        %1324 = vmatprep.mubr.f32.mxu0 0.0
        %1325 = vmatmul.mubr.f32.gmra.mrb[0].mxu0 %v1233
        %v1326 = vpop.f32.mrb[0].mxu0
        %v1327 = vadd.f32 0.0, %v1326
        %v1328 = vpop.f32.mrb[0].mxu0
        %1329 = vmatprep.mubr.f32.mxu0 0.0
        %1330 = vmatmul.mubr.f32.gmra.mrb[0].mxu0 %v1236
        %v1331 = vpop.f32.mrb[0].mxu0
        %v1332 = vadd.f32 0.0, %v1331
        %v1333 = vpop.f32.mrb[0].mxu0
        %1334 = vdwg.mxu0
        %v1335 = vmul.f32 %v1317, 0.25
        %v1336 = vmul.f32 %v1322, 0.25
        %v1337 = vmul.f32 %v1327, 0.25
        %v1338 = vmul.f32 %v1332, 0.25
        %v1339 = vadd.f32 %v1335, %v390
        %v1340 = vadd.f32 %v1336, %v391
        %v1341 = vadd.f32 %v1337, %v392
        %v1342 = vadd.f32 %v1338, %v393
        %v1343 = vsel %vm300, %v1339, -inf
        %1344 = vmax.xlane.f32.xlu0 %v1343
        %v1345 = vpop.xlane.xlu0 %1344
        %v1346 = vsel %vm300, %v1340, -inf
        %1347 = vmax.xlane.f32.xlu0 %v1346
        %v1348 = vpop.xlane.xlu0 %1347
        %v1349 = vsel %vm300, %v1341, -inf
        %1350 = vmax.xlane.f32.xlu0 %v1349
        %v1351 = vpop.xlane.xlu0 %1350
        %v1352 = vsel %vm300, %v1342, -inf
        %1353 = vmax.xlane.f32.xlu0 %v1352
        %v1354 = vpop.xlane.xlu0 %1353
        %v1355 = vsub.f32 %v1339, %v1345
        %v1356 = vsub.f32 %v1340, %v1348
        %v1357 = vsub.f32 %v1341, %v1351
        %v1358 = vsub.f32 %v1342, %v1354
        %v1359 = vmul.f32 %v1355, 1.442695
        %v1360 = vpow.pop %v1359
        %v1361 = vmul.f32 %v1356, 1.442695
        %v1362 = vpow.pop %v1361
        %v1363 = vmul.f32 %v1357, 1.442695
        %v1364 = vpow.pop %v1363
        %v1365 = vmul.f32 %v1358, 1.442695
        %v1366 = vpow.pop %v1365
        %v1367 = vsel %vm300, %v1360, 0.0
        %1368 = vadd.xlane.f32.xlu0 %v1367
        %v1369 = vpop.xlane.xlu0 %1368
        %v1370 = vsel %vm300, %v1362, 0.0
        %1371 = vadd.xlane.f32.xlu0 %v1370
        %v1372 = vpop.xlane.xlu0 %1371
        %v1373 = vsel %vm300, %v1364, 0.0
        %1374 = vadd.xlane.f32.xlu0 %v1373
        %v1375 = vpop.xlane.xlu0 %1374
        %v1376 = vsel %vm300, %v1366, 0.0
        %1377 = vadd.xlane.f32.xlu0 %v1376
        %v1378 = vpop.xlane.xlu0 %1377
        %v1379 = vrcp.pop %v1369
        %v1380 = vmul.f32 %v1360, %v1379
        %v1381 = vrcp.pop %v1372
        %v1382 = vmul.f32 %v1362, %v1381
        %v1383 = vrcp.pop %v1375
        %v1384 = vmul.f32 %v1364, %v1383
        %v1385 = vrcp.pop %v1378
        %v1386 = vmul.f32 %v1366, %v1385
        %v1388 = vsel %vm300, %v1380, 0
        %v1391 = vsel %vm300, %v1382, 0
        %v1394 = vsel %vm300, %v1384, 0
        %v1397 = vsel %vm300, %v1386, 0
        %1399 = vmatprep.subr.mxu0 0.0
        %1400 = vmatpush1.msra.mxu0 %v1208
        %1401 = vmatprep.subr.mxu0 0.0
        %1402 = vmatpush1.msra.mxu0 %v1213
        %1403 = vmatprep.subr.mxu0 0.0
        %1404 = vmatpush1.msra.mxu0 %v1218
        %1405 = vmatprep.subr.mxu0 0.0
        %1406 = vmatpush1.msra.mxu0 %v1223
        %1407 = vmatprep.subr.mxu0 0.0
        %1408 = vmatpush1.msra.mxu0 0.0
        %1409 = vmatprep.subr.mxu0 0.0
        %1410 = vmatpush1.msra.mxu0 0.0
        %1411 = vmatprep.subr.mxu0 0.0
        %1412 = vmatpush1.msra.mxu0 0.0
        %1413 = vmatprep.subr.mxu0 0.0
        %1414 = vmatpush1.msra.mxu0 0.0
        %1415 = vmatprep.subr.mxu0 0.0
        %1416 = vmatpush1.msra.mxu0 0.0
        %1417 = vmatprep.subr.mxu0 0.0
        %1418 = vmatpush1.msra.mxu0 0.0
        %1419 = vmatprep.subr.mxu0 0.0
        %1420 = vmatpush1.msra.mxu0 0.0
        %1421 = vmatprep.subr.mxu0 0.0
        %1422 = vmatpush1.msra.mxu0 0.0
        %1423 = vmatprep.subr.mxu0 0.0
        %1424 = vmatpush1.msra.mxu0 0.0
        %1425 = vmatprep.subr.mxu0 0.0
        %1426 = vmatpush1.msra.mxu0 0.0
        %1427 = vmatprep.subr.mxu0 0.0
        %1428 = vmatpush1.msra.mxu0 0.0
        %1429 = vmatprep.subr.mxu0 0.0
        %1430 = vmatpush1.msra.mxu0 0.0
        %1431 = vmatprep.subr.mxu0 0.0
        %1432 = vmatpush1.msra.mxu0 0.0
        %1433 = vmatprep.subr.mxu0 0.0
        %1434 = vmatpush1.msra.mxu0 0.0
        %1435 = vmatprep.subr.mxu0 0.0
        %1436 = vmatpush1.msra.mxu0 0.0
        %1437 = vmatprep.subr.mxu0 0.0
        %1438 = vmatpush1.msra.mxu0 0.0
        %1439 = vmatprep.subr.mxu0 0.0
        %1440 = vmatpush1.msra.mxu0 0.0
        %1441 = vmatprep.subr.mxu0 0.0
        %1442 = vmatpush1.msra.mxu0 0.0
        %1443 = vmatprep.subr.mxu0 0.0
        %1444 = vmatpush1.msra.mxu0 0.0
        %1445 = vmatprep.subr.mxu0 0.0
        %1446 = vmatpush1.msra.mxu0 0.0
        %1447 = vmatprep.subr.mxu0 0.0
        %1448 = vmatpush1.msra.mxu0 0.0
        %1449 = vmatprep.subr.mxu0 0.0
        %1450 = vmatpush1.msra.mxu0 0.0
        %1451 = vmatprep.subr.mxu0 0.0
        %1452 = vmatpush1.msra.mxu0 0.0
        %1453 = vmatprep.subr.mxu0 0.0
        %1454 = vmatpush1.msra.mxu0 0.0
        %1455 = vmatprep.subr.mxu0 0.0
        %1456 = vmatpush1.msra.mxu0 0.0
        %1457 = vmatprep.subr.mxu0 0.0
        %1458 = vmatpush1.msra.mxu0 0.0
        %1459 = vmatprep.subr.mxu0 0.0
        %1460 = vmatpush1.msra.mxu0 0.0
        %1461 = vmatprep.subr.mxu0 0.0
        %1462 = vmatpush1.msra.mxu0 0.0
        %1463 = vmatprep.mubr.f32.mxu0 0.0
        %1464 = vmatmul.mubr.f32.gmra.mrb[0].mxu0 %v1388
        %v1465 = vpop.f32.mrb[0].mxu0
        %v1466 = vadd.f32 0.0, %v1465
        %v1467 = vpop.f32.mrb[0].mxu0
        %1468 = vmatprep.mubr.f32.mxu0 0.0
        %1469 = vmatmul.mubr.f32.gmra.mrb[0].mxu0 %v1391
        %v1470 = vpop.f32.mrb[0].mxu0
        %v1471 = vadd.f32 0.0, %v1470
        %v1472 = vpop.f32.mrb[0].mxu0
        %1473 = vmatprep.mubr.f32.mxu0 0.0
        %1474 = vmatmul.mubr.f32.gmra.mrb[0].mxu0 %v1394
        %v1475 = vpop.f32.mrb[0].mxu0
        %v1476 = vadd.f32 0.0, %v1475
        %v1477 = vpop.f32.mrb[0].mxu0
        %1478 = vmatprep.mubr.f32.mxu0 0.0
        %1479 = vmatmul.mubr.f32.gmra.mrb[0].mxu0 %v1397
        %v1480 = vpop.f32.mrb[0].mxu0
        %v1481 = vadd.f32 0.0, %v1480
        %v1482 = vpop.f32.mrb[0].mxu0
        %1483 = vdwg.mxu0
        %v1484 = vld [vmem:[#allocation2 + $0x138] sm:$0xff]
        %v1485 = vld [vmem:[#allocation2 + $0x140] sm:$0xff]
        %v1487 = vsel %vm686, %v1466, 0
        %v1490 = vsel %vm686, %v1471, 0
        %v1493 = vsel %vm686, %v1476, 0
        %v1496 = vsel %vm686, %v1481, 0
        %1498 = vmatprep.subr.mxu0 0.0
        %1499 = vmatpush1.msra.mxu0 %v1484
        %1500 = vmatprep.subr.mxu0 0.0
        %1501 = vmatpush1.msra.mxu0 %v1485
        %1502 = vmatprep.subr.mxu0 0.0
        %1503 = vmatpush1.msra.mxu0 0.0
        %1504 = vmatprep.subr.mxu0 0.0
        %1505 = vmatpush1.msra.mxu0 0.0
        %1506 = vmatprep.subr.mxu0 0.0
        %1507 = vmatpush1.msra.mxu0 0.0
        %1508 = vmatprep.subr.mxu0 0.0
        %1509 = vmatpush1.msra.mxu0 0.0
        %1510 = vmatprep.subr.mxu0 0.0
        %1511 = vmatpush1.msra.mxu0 0.0
        %1512 = vmatprep.subr.mxu0 0.0
        %1513 = vmatpush1.msra.mxu0 0.0
        %1514 = vmatprep.subr.mxu0 0.0
        %1515 = vmatpush1.msra.mxu0 0.0
        %1516 = vmatprep.subr.mxu0 0.0
        %1517 = vmatpush1.msra.mxu0 0.0
        %1518 = vmatprep.subr.mxu0 0.0
        %1519 = vmatpush1.msra.mxu0 0.0
        %1520 = vmatprep.subr.mxu0 0.0
        %1521 = vmatpush1.msra.mxu0 0.0
        %1522 = vmatprep.subr.mxu0 0.0
        %1523 = vmatpush1.msra.mxu0 0.0
        %1524 = vmatprep.subr.mxu0 0.0
        %1525 = vmatpush1.msra.mxu0 0.0
        %1526 = vmatprep.subr.mxu0 0.0
        %1527 = vmatpush1.msra.mxu0 0.0
        %1528 = vmatprep.subr.mxu0 0.0
        %1529 = vmatpush1.msra.mxu0 0.0
        %1530 = vmatprep.subr.mxu0 0.0
        %1531 = vmatpush1.msra.mxu0 0.0
        %1532 = vmatprep.subr.mxu0 0.0
        %1533 = vmatpush1.msra.mxu0 0.0
        %1534 = vmatprep.subr.mxu0 0.0
        %1535 = vmatpush1.msra.mxu0 0.0
        %1536 = vmatprep.subr.mxu0 0.0
        %1537 = vmatpush1.msra.mxu0 0.0
        %1538 = vmatprep.subr.mxu0 0.0
        %1539 = vmatpush1.msra.mxu0 0.0
        %1540 = vmatprep.subr.mxu0 0.0
        %1541 = vmatpush1.msra.mxu0 0.0
        %1542 = vmatprep.subr.mxu0 0.0
        %1543 = vmatpush1.msra.mxu0 0.0
        %1544 = vmatprep.subr.mxu0 0.0
        %1545 = vmatpush1.msra.mxu0 0.0
        %1546 = vmatprep.subr.mxu0 0.0
        %1547 = vmatpush1.msra.mxu0 0.0
        %1548 = vmatprep.subr.mxu0 0.0
        %1549 = vmatpush1.msra.mxu0 0.0
        %1550 = vmatprep.subr.mxu0 0.0
        %1551 = vmatpush1.msra.mxu0 0.0
        %1552 = vmatprep.subr.mxu0 0.0
        %1553 = vmatpush1.msra.mxu0 0.0
        %1554 = vmatprep.subr.mxu0 0.0
        %1555 = vmatpush1.msra.mxu0 0.0
        %1556 = vmatprep.subr.mxu0 0.0
        %1557 = vmatpush1.msra.mxu0 0.0
        %1558 = vmatprep.subr.mxu0 0.0
        %1559 = vmatpush1.msra.mxu0 0.0
        %1560 = vmatprep.subr.mxu0 0.0
        %1561 = vmatpush1.msra.mxu0 0.0
        %1562 = vmatprep.mubr.f32.mxu0 0.0
        %1563 = vmatmul.mubr.f32.gmra.mrb[0].mxu0 %v1487
        %v1564 = vpop.f32.mrb[0].mxu0
        %v1565 = vadd.f32 0.0, %v1564
        %v1566 = vpop.f32.mrb[0].mxu0
        %1567 = vmatprep.mubr.f32.mxu0 0.0
        %1568 = vmatmul.mubr.f32.gmra.mrb[0].mxu0 %v1490
        %v1569 = vpop.f32.mrb[0].mxu0
        %v1570 = vadd.f32 0.0, %v1569
        %v1571 = vpop.f32.mrb[0].mxu0
        %1572 = vmatprep.mubr.f32.mxu0 0.0
        %1573 = vmatmul.mubr.f32.gmra.mrb[0].mxu0 %v1493
        %v1574 = vpop.f32.mrb[0].mxu0
        %v1575 = vadd.f32 0.0, %v1574
        %v1576 = vpop.f32.mrb[0].mxu0
        %1577 = vmatprep.mubr.f32.mxu0 0.0
        %1578 = vmatmul.mubr.f32.gmra.mrb[0].mxu0 %v1496
        %v1579 = vpop.f32.mrb[0].mxu0
        %v1580 = vadd.f32 0.0, %v1579
        %v1581 = vpop.f32.mrb[0].mxu0
        %1582 = vdwg.mxu0
        %v1584 = vsel %vm686, %v927, 0
        %v1587 = vsel %vm686, %v932, 0
        %v1590 = vsel %vm686, %v937, 0
        %v1593 = vsel %vm686, %v942, 0
        %1595 = vmatprep.subr.mxu0 0.0
        %1596 = vmatpush1.msra.mxu0 %v945
        %1597 = vmatprep.subr.mxu0 0.0
        %1598 = vmatpush1.msra.mxu0 %v946
        %1599 = vmatprep.subr.mxu0 0.0
        %1600 = vmatpush1.msra.mxu0 0.0
        %1601 = vmatprep.subr.mxu0 0.0
        %1602 = vmatpush1.msra.mxu0 0.0
        %1603 = vmatprep.subr.mxu0 0.0
        %1604 = vmatpush1.msra.mxu0 0.0
        %1605 = vmatprep.subr.mxu0 0.0
        %1606 = vmatpush1.msra.mxu0 0.0
        %1607 = vmatprep.subr.mxu0 0.0
        %1608 = vmatpush1.msra.mxu0 0.0
        %1609 = vmatprep.subr.mxu0 0.0
        %1610 = vmatpush1.msra.mxu0 0.0
        %1611 = vmatprep.subr.mxu0 0.0
        %1612 = vmatpush1.msra.mxu0 0.0
        %1613 = vmatprep.subr.mxu0 0.0
        %1614 = vmatpush1.msra.mxu0 0.0
        %1615 = vmatprep.subr.mxu0 0.0
        %1616 = vmatpush1.msra.mxu0 0.0
        %1617 = vmatprep.subr.mxu0 0.0
        %1618 = vmatpush1.msra.mxu0 0.0
        %1619 = vmatprep.subr.mxu0 0.0
        %1620 = vmatpush1.msra.mxu0 0.0
        %1621 = vmatprep.subr.mxu0 0.0
        %1622 = vmatpush1.msra.mxu0 0.0
        %1623 = vmatprep.subr.mxu0 0.0
        %1624 = vmatpush1.msra.mxu0 0.0
        %1625 = vmatprep.subr.mxu0 0.0
        %1626 = vmatpush1.msra.mxu0 0.0
        %1627 = vmatprep.subr.mxu0 0.0
        %1628 = vmatpush1.msra.mxu0 0.0
        %1629 = vmatprep.subr.mxu0 0.0
        %1630 = vmatpush1.msra.mxu0 0.0
        %1631 = vmatprep.subr.mxu0 0.0
        %1632 = vmatpush1.msra.mxu0 0.0
        %1633 = vmatprep.subr.mxu0 0.0
        %1634 = vmatpush1.msra.mxu0 0.0
        %1635 = vmatprep.subr.mxu0 0.0
        %1636 = vmatpush1.msra.mxu0 0.0
        %1637 = vmatprep.subr.mxu0 0.0
        %1638 = vmatpush1.msra.mxu0 0.0
        %1639 = vmatprep.subr.mxu0 0.0
        %1640 = vmatpush1.msra.mxu0 0.0
        %1641 = vmatprep.subr.mxu0 0.0
        %1642 = vmatpush1.msra.mxu0 0.0
        %1643 = vmatprep.subr.mxu0 0.0
        %1644 = vmatpush1.msra.mxu0 0.0
        %1645 = vmatprep.subr.mxu0 0.0
        %1646 = vmatpush1.msra.mxu0 0.0
        %1647 = vmatprep.subr.mxu0 0.0
        %1648 = vmatpush1.msra.mxu0 0.0
        %1649 = vmatprep.subr.mxu0 0.0
        %1650 = vmatpush1.msra.mxu0 0.0
        %1651 = vmatprep.subr.mxu0 0.0
        %1652 = vmatpush1.msra.mxu0 0.0
        %1653 = vmatprep.subr.mxu0 0.0
        %1654 = vmatpush1.msra.mxu0 0.0
        %1655 = vmatprep.subr.mxu0 0.0
        %1656 = vmatpush1.msra.mxu0 0.0
        %1657 = vmatprep.subr.mxu0 0.0
        %1658 = vmatpush1.msra.mxu0 0.0
        %1659 = vmatprep.mubr.f32.mxu0 0.0
        %1660 = vmatmul.mubr.f32.gmra.mrb[0].mxu0 %v1584
        %v1661 = vpop.f32.mrb[0].mxu0
        %v1662 = vadd.f32 %v1565, %v1661
        %v1663 = vpop.f32.mrb[0].mxu0
        %1664 = vmatprep.mubr.f32.mxu0 0.0
        %1665 = vmatmul.mubr.f32.gmra.mrb[0].mxu0 %v1587
        %v1666 = vpop.f32.mrb[0].mxu0
        %v1667 = vadd.f32 %v1570, %v1666
        %v1668 = vpop.f32.mrb[0].mxu0
        %1669 = vmatprep.mubr.f32.mxu0 0.0
        %1670 = vmatmul.mubr.f32.gmra.mrb[0].mxu0 %v1590
        %v1671 = vpop.f32.mrb[0].mxu0
        %v1672 = vadd.f32 %v1575, %v1671
        %v1673 = vpop.f32.mrb[0].mxu0
        %1674 = vmatprep.mubr.f32.mxu0 0.0
        %1675 = vmatmul.mubr.f32.gmra.mrb[0].mxu0 %v1593
        %v1676 = vpop.f32.mrb[0].mxu0
        %v1677 = vadd.f32 %v1580, %v1676
        %v1678 = vpop.f32.mrb[0].mxu0
        %1679 = vdwg.mxu0
        %v1680 = vlaneseq
        %v1681 = vshrl.u32 %v1680, 7
        %v1682 = vsub.s32 6, %v1681
        %v1683 = vrot.slane %v394, %v1682
        %v1684 = vadd.f32 %v1662, %v1683
        %v1685 = vadd.f32 %v1667, %v1683
        %v1686 = vadd.f32 %v1672, %v1683
        %v1687 = vadd.f32 %v1677, %v1683
        %v1688 = vadd.f32 %v366, %v1684
        %v1689 = vadd.f32 %v367, %v1685
        %v1690 = vadd.f32 %v368, %v1686
        %v1691 = vadd.f32 %v369, %v1687
        %v1692 = vsel %vm300, %v1688, 0.0
        %1693 = vadd.xlane.f32.xlu0 %v1692
        %v1694 = vpop.xlane.xlu0 %1693
        %v1695 = vsel %vm300, %v1689, 0.0
        %1696 = vadd.xlane.f32.xlu0 %v1695
        %v1697 = vpop.xlane.xlu0 %1696
        %v1698 = vsel %vm300, %v1690, 0.0
        %1699 = vadd.xlane.f32.xlu0 %v1698
        %v1700 = vpop.xlane.xlu0 %1699
        %v1701 = vsel %vm300, %v1691, 0.0
        %1702 = vadd.xlane.f32.xlu0 %v1701
        %v1703 = vpop.xlane.xlu0 %1702
        %v1704 = vmul.f32 %v1694, %v313
        %v1705 = vmul.f32 %v1697, %v313
        %v1706 = vmul.f32 %v1700, %v313
        %v1707 = vmul.f32 %v1703, %v313
        %v1708 = vsub.f32 %v1688, %v1704
        %v1709 = vsub.f32 %v1689, %v1705
        %v1710 = vsub.f32 %v1690, %v1706
        %v1711 = vsub.f32 %v1691, %v1707
        %v1712 = vmul.f32 %v1708, %v1708
        %v1713 = vmul.f32 %v1709, %v1709
        %v1714 = vmul.f32 %v1710, %v1710
        %v1715 = vmul.f32 %v1711, %v1711
        %v1716 = vsel %vm300, %v1712, 0.0
        %1717 = vadd.xlane.f32.xlu0 %v1716
        %v1718 = vpop.xlane.xlu0 %1717
        %v1719 = vsel %vm300, %v1713, 0.0
        %1720 = vadd.xlane.f32.xlu0 %v1719
        %v1721 = vpop.xlane.xlu0 %1720
        %v1722 = vsel %vm300, %v1714, 0.0
        %1723 = vadd.xlane.f32.xlu0 %v1722
        %v1724 = vpop.xlane.xlu0 %1723
        %v1725 = vsel %vm300, %v1715, 0.0
        %1726 = vadd.xlane.f32.xlu0 %v1725
        %v1727 = vpop.xlane.xlu0 %1726
        %v1728 = vmul.f32 %v1718, %v313
        %v1729 = vmul.f32 %v1721, %v313
        %v1730 = vmul.f32 %v1724, %v313
        %v1731 = vmul.f32 %v1727, %v313
        %v1732 = vadd.f32 %v1728, 1e-12
        %v1733 = vadd.f32 %v1729, 1e-12
        %v1734 = vadd.f32 %v1730, 1e-12
        %v1735 = vadd.f32 %v1731, 1e-12
        %v1736 = vrsqrt.pop %v1732
        %v1737 = vrsqrt.pop %v1733
        %v1738 = vrsqrt.pop %v1734
        %v1739 = vrsqrt.pop %v1735
        %v1740 = vmul.f32 %v1708, %v1736
        %v1741 = vmul.f32 %v1709, %v1737
        %v1742 = vmul.f32 %v1710, %v1738
        %v1743 = vmul.f32 %v1711, %v1739
        %v1744 = vlaneseq
        %v1745 = vshrl.u32 %v1744, 7
        %v1746 = vsub.s32 2, %v1745
        %v1747 = vrot.slane %v299, %v1746
        %v1748 = vmul.f32 %v1740, %v1747
        %v1749 = vmul.f32 %v1741, %v1747
        %v1750 = vmul.f32 %v1742, %v1747
        %v1751 = vmul.f32 %v1743, %v1747
        %v1752 = vlaneseq
        %v1753 = vshrl.u32 %v1752, 7
        %v1754 = vsub.s32 3, %v1753
        %v1755 = vrot.slane %v299, %v1754
        %v1756 = vadd.f32 %v1748, %v1755
        %v1757 = vadd.f32 %v1749, %v1755
        %v1758 = vadd.f32 %v1750, %v1755
        %v1759 = vadd.f32 %v1751, %v1755
        %v1760 = vld [vmem:[#allocation2 + $0x1f0] sm:$0xff]
        %v1761 = vld [vmem:[#allocation2 + $0x150] sm:$0xff]
        %v1762 = vld [vmem:[#allocation2 + $0x158] sm:$0xff]
        %v1763 = vld [vmem:[#allocation2 + $0x160] sm:$0xff]
        %v1764 = vld [vmem:[#allocation2 + $0x168] sm:$0xff]
        %v1765 = vlaneseq
        %v1766 = vshrl.u32 %v1765, 7
        %v1767 = vsub.s32 0, %v1766
        %v1768 = vrot.slane %v1760, %v1767
        %v1770 = vsel %vm300, %v1756, 0
        %v1773 = vsel %vm300, %v1757, 0
        %v1776 = vsel %vm300, %v1758, 0
        %v1779 = vsel %vm300, %v1759, 0
        %1781 = vmatprep.subr.mxu0 0.0
        %1782 = vmatpush1.msra.mxu0 %v1761
        %1783 = vmatprep.subr.mxu0 0.0
        %1784 = vmatpush1.msra.mxu0 %v1762
        %1785 = vmatprep.subr.mxu0 0.0
        %1786 = vmatpush1.msra.mxu0 %v1763
        %1787 = vmatprep.subr.mxu0 0.0
        %1788 = vmatpush1.msra.mxu0 %v1764
        %1789 = vmatprep.subr.mxu0 0.0
        %1790 = vmatpush1.msra.mxu0 0.0
        %1791 = vmatprep.subr.mxu0 0.0
        %1792 = vmatpush1.msra.mxu0 0.0
        %1793 = vmatprep.subr.mxu0 0.0
        %1794 = vmatpush1.msra.mxu0 0.0
        %1795 = vmatprep.subr.mxu0 0.0
        %1796 = vmatpush1.msra.mxu0 0.0
        %1797 = vmatprep.subr.mxu0 0.0
        %1798 = vmatpush1.msra.mxu0 0.0
        %1799 = vmatprep.subr.mxu0 0.0
        %1800 = vmatpush1.msra.mxu0 0.0
        %1801 = vmatprep.subr.mxu0 0.0
        %1802 = vmatpush1.msra.mxu0 0.0
        %1803 = vmatprep.subr.mxu0 0.0
        %1804 = vmatpush1.msra.mxu0 0.0
        %1805 = vmatprep.subr.mxu0 0.0
        %1806 = vmatpush1.msra.mxu0 0.0
        %1807 = vmatprep.subr.mxu0 0.0
        %1808 = vmatpush1.msra.mxu0 0.0
        %1809 = vmatprep.subr.mxu0 0.0
        %1810 = vmatpush1.msra.mxu0 0.0
        %1811 = vmatprep.subr.mxu0 0.0
        %1812 = vmatpush1.msra.mxu0 0.0
        %1813 = vmatprep.subr.mxu0 0.0
        %1814 = vmatpush1.msra.mxu0 0.0
        %1815 = vmatprep.subr.mxu0 0.0
        %1816 = vmatpush1.msra.mxu0 0.0
        %1817 = vmatprep.subr.mxu0 0.0
        %1818 = vmatpush1.msra.mxu0 0.0
        %1819 = vmatprep.subr.mxu0 0.0
        %1820 = vmatpush1.msra.mxu0 0.0
        %1821 = vmatprep.subr.mxu0 0.0
        %1822 = vmatpush1.msra.mxu0 0.0
        %1823 = vmatprep.subr.mxu0 0.0
        %1824 = vmatpush1.msra.mxu0 0.0
        %1825 = vmatprep.subr.mxu0 0.0
        %1826 = vmatpush1.msra.mxu0 0.0
        %1827 = vmatprep.subr.mxu0 0.0
        %1828 = vmatpush1.msra.mxu0 0.0
        %1829 = vmatprep.subr.mxu0 0.0
        %1830 = vmatpush1.msra.mxu0 0.0
        %1831 = vmatprep.subr.mxu0 0.0
        %1832 = vmatpush1.msra.mxu0 0.0
        %1833 = vmatprep.subr.mxu0 0.0
        %1834 = vmatpush1.msra.mxu0 0.0
        %1835 = vmatprep.subr.mxu0 0.0
        %1836 = vmatpush1.msra.mxu0 0.0
        %1837 = vmatprep.subr.mxu0 0.0
        %1838 = vmatpush1.msra.mxu0 0.0
        %1839 = vmatprep.subr.mxu0 0.0
        %1840 = vmatpush1.msra.mxu0 0.0
        %1841 = vmatprep.subr.mxu0 0.0
        %1842 = vmatpush1.msra.mxu0 0.0
        %1843 = vmatprep.subr.mxu0 0.0
        %1844 = vmatpush1.msra.mxu0 0.0
        %1845 = vmatprep.mubr.f32.mxu0 0.0
        %1846 = vmatmul.mubr.f32.gmra.mrb[0].mxu0 %v1770
        %v1847 = vpop.f32.mrb[0].mxu0
        %v1848 = vadd.f32 %v1768, %v1847
        %v1849 = vpop.f32.mrb[0].mxu0
        %1850 = vmatprep.mubr.f32.mxu0 0.0
        %1851 = vmatmul.mubr.f32.gmra.mrb[0].mxu0 %v1773
        %v1852 = vpop.f32.mrb[0].mxu0
        %v1853 = vadd.f32 %v1768, %v1852
        %v1854 = vpop.f32.mrb[0].mxu0
        %1855 = vmatprep.mubr.f32.mxu0 0.0
        %1856 = vmatmul.mubr.f32.gmra.mrb[0].mxu0 %v1776
        %v1857 = vpop.f32.mrb[0].mxu0
        %v1858 = vadd.f32 %v1768, %v1857
        %v1859 = vpop.f32.mrb[0].mxu0
        %1860 = vmatprep.mubr.f32.mxu0 0.0
        %1861 = vmatmul.mubr.f32.gmra.mrb[0].mxu0 %v1779
        %v1862 = vpop.f32.mrb[0].mxu0
        %v1863 = vadd.f32 %v1768, %v1862
        %v1864 = vpop.f32.mrb[0].mxu0
        %1865 = vdwg.mxu0
        %v1866 = vmul.f32 %v1848, %v1848
        %v1867 = vmul.f32 %v1853, %v1853
        %v1868 = vmul.f32 %v1858, %v1858
        %v1869 = vmul.f32 %v1863, %v1863
        %v1870 = vmul.f32 %v1848, %v1866
        %v1871 = vmul.f32 %v1853, %v1867
        %v1872 = vmul.f32 %v1858, %v1868
        %v1873 = vmul.f32 %v1863, %v1869
        %v1874 = vmul.f32 %v1870, 0.044715
        %v1875 = vmul.f32 %v1871, 0.044715
        %v1876 = vmul.f32 %v1872, 0.044715
        %v1877 = vmul.f32 %v1873, 0.044715
        %v1878 = vadd.f32 %v1848, %v1874
        %v1879 = vadd.f32 %v1853, %v1875
        %v1880 = vadd.f32 %v1858, %v1876
        %v1881 = vadd.f32 %v1863, %v1877
        %v1882 = vmul.f32 %v1878, 0.7978846
        %v1883 = vmul.f32 %v1879, 0.7978846
        %v1884 = vmul.f32 %v1880, 0.7978846
        %v1885 = vmul.f32 %v1881, 0.7978846
        %v1886 = vtanh.pop %v1882
        %v1887 = vtanh.pop %v1883
        %v1888 = vtanh.pop %v1884
        %v1889 = vtanh.pop %v1885
        %v1890 = vadd.f32 %v1886, 1.0
        %v1891 = vadd.f32 %v1887, 1.0
        %v1892 = vadd.f32 %v1888, 1.0
        %v1893 = vadd.f32 %v1889, 1.0
        %v1894 = vmul.f32 %v1890, 0.5
        %v1895 = vmul.f32 %v1891, 0.5
        %v1896 = vmul.f32 %v1892, 0.5
        %v1897 = vmul.f32 %v1893, 0.5
        %v1898 = vmul.f32 %v1848, %v1894
        %v1899 = vmul.f32 %v1853, %v1895
        %v1900 = vmul.f32 %v1858, %v1896
        %v1901 = vmul.f32 %v1863, %v1897
        %v1902 = vld [vmem:[#allocation2 + $0x170] sm:$0xff]
        %v1903 = vld [vmem:[#allocation2 + $0x178] sm:$0xff]
        %v1904 = vld [vmem:[#allocation2 + $0x180] sm:$0xff]
        %v1905 = vld [vmem:[#allocation2 + $0x188] sm:$0xff]
        %v1906 = vld [vmem:[#allocation2 + $0x190] sm:$0xff]
        %v1907 = vld [vmem:[#allocation2 + $0x198] sm:$0xff]
        %v1908 = vld [vmem:[#allocation2 + $0x1a0] sm:$0xff]
        %v1909 = vld [vmem:[#allocation2 + $0x1a8] sm:$0xff]
        %v1910 = vlaneseq
        %v1911 = vshrl.u32 %v1910, 7
        %v1912 = vsub.s32 1, %v1911
        %v1913 = vrot.slane %v1760, %v1912
        %v1915 = vsel %vm201, %v1898, 0
        %v1918 = vsel %vm201, %v1899, 0
        %v1921 = vsel %vm201, %v1900, 0
        %v1924 = vsel %vm201, %v1901, 0
        %1926 = vmatprep.subr.mxu0 0.0
        %1927 = vmatpush1.msra.mxu0 %v1902
        %1928 = vmatprep.subr.mxu0 0.0
        %1929 = vmatpush1.msra.mxu0 %v1903
        %1930 = vmatprep.subr.mxu0 0.0
        %1931 = vmatpush1.msra.mxu0 %v1904
        %1932 = vmatprep.subr.mxu0 0.0
        %1933 = vmatpush1.msra.mxu0 %v1905
        %1934 = vmatprep.subr.mxu0 0.0
        %1935 = vmatpush1.msra.mxu0 %v1906
        %1936 = vmatprep.subr.mxu0 0.0
        %1937 = vmatpush1.msra.mxu0 %v1907
        %1938 = vmatprep.subr.mxu0 0.0
        %1939 = vmatpush1.msra.mxu0 %v1908
        %1940 = vmatprep.subr.mxu0 0.0
        %1941 = vmatpush1.msra.mxu0 %v1909
        %1942 = vmatprep.subr.mxu0 0.0
        %1943 = vmatpush1.msra.mxu0 0.0
        %1944 = vmatprep.subr.mxu0 0.0
        %1945 = vmatpush1.msra.mxu0 0.0
        %1946 = vmatprep.subr.mxu0 0.0
        %1947 = vmatpush1.msra.mxu0 0.0
        %1948 = vmatprep.subr.mxu0 0.0
        %1949 = vmatpush1.msra.mxu0 0.0
        %1950 = vmatprep.subr.mxu0 0.0
        %1951 = vmatpush1.msra.mxu0 0.0
        %1952 = vmatprep.subr.mxu0 0.0
        %1953 = vmatpush1.msra.mxu0 0.0
        %1954 = vmatprep.subr.mxu0 0.0
        %1955 = vmatpush1.msra.mxu0 0.0
        %1956 = vmatprep.subr.mxu0 0.0
        %1957 = vmatpush1.msra.mxu0 0.0
        %1958 = vmatprep.subr.mxu0 0.0
        %1959 = vmatpush1.msra.mxu0 0.0
        %1960 = vmatprep.subr.mxu0 0.0
        %1961 = vmatpush1.msra.mxu0 0.0
        %1962 = vmatprep.subr.mxu0 0.0
        %1963 = vmatpush1.msra.mxu0 0.0
        %1964 = vmatprep.subr.mxu0 0.0
        %1965 = vmatpush1.msra.mxu0 0.0
        %1966 = vmatprep.subr.mxu0 0.0
        %1967 = vmatpush1.msra.mxu0 0.0
        %1968 = vmatprep.subr.mxu0 0.0
        %1969 = vmatpush1.msra.mxu0 0.0
        %1970 = vmatprep.subr.mxu0 0.0
        %1971 = vmatpush1.msra.mxu0 0.0
        %1972 = vmatprep.subr.mxu0 0.0
        %1973 = vmatpush1.msra.mxu0 0.0
        %1974 = vmatprep.subr.mxu0 0.0
        %1975 = vmatpush1.msra.mxu0 0.0
        %1976 = vmatprep.subr.mxu0 0.0
        %1977 = vmatpush1.msra.mxu0 0.0
        %1978 = vmatprep.subr.mxu0 0.0
        %1979 = vmatpush1.msra.mxu0 0.0
        %1980 = vmatprep.subr.mxu0 0.0
        %1981 = vmatpush1.msra.mxu0 0.0
        %1982 = vmatprep.subr.mxu0 0.0
        %1983 = vmatpush1.msra.mxu0 0.0
        %1984 = vmatprep.subr.mxu0 0.0
        %1985 = vmatpush1.msra.mxu0 0.0
        %1986 = vmatprep.subr.mxu0 0.0
        %1987 = vmatpush1.msra.mxu0 0.0
        %1988 = vmatprep.subr.mxu0 0.0
        %1989 = vmatpush1.msra.mxu0 0.0
        %1990 = vmatprep.mubr.f32.mxu0 0.0
        %1991 = vmatmul.mubr.f32.gmra.mrb[0].mxu0 %v1915
        %v1992 = vpop.f32.mrb[0].mxu0
        %v1993 = vadd.f32 %v1913, %v1992
        %v1994 = vpop.f32.mrb[0].mxu0
        %1995 = vmatprep.mubr.f32.mxu0 0.0
        %1996 = vmatmul.mubr.f32.gmra.mrb[0].mxu0 %v1918
        %v1997 = vpop.f32.mrb[0].mxu0
        %v1998 = vadd.f32 %v1913, %v1997
        %v1999 = vpop.f32.mrb[0].mxu0
        %2000 = vmatprep.mubr.f32.mxu0 0.0
        %2001 = vmatmul.mubr.f32.gmra.mrb[0].mxu0 %v1921
        %v2002 = vpop.f32.mrb[0].mxu0
        %v2003 = vadd.f32 %v1913, %v2002
        %v2004 = vpop.f32.mrb[0].mxu0
        %2005 = vmatprep.mubr.f32.mxu0 0.0
        %2006 = vmatmul.mubr.f32.gmra.mrb[0].mxu0 %v1924
        %v2007 = vpop.f32.mrb[0].mxu0
        %v2008 = vadd.f32 %v1913, %v2007
        %v2009 = vpop.f32.mrb[0].mxu0
        %2010 = vdwg.mxu0
        %v2011 = vadd.f32 %v1756, %v1993
        %v2012 = vadd.f32 %v1757, %v1998
        %v2013 = vadd.f32 %v1758, %v2003
        %v2014 = vadd.f32 %v1759, %v2008
        %v2015 = vsel %vm300, %v2011, 0.0
        %2016 = vadd.xlane.f32.xlu0 %v2015
        %v2017 = vpop.xlane.xlu0 %2016
        %v2018 = vsel %vm300, %v2012, 0.0
        %2019 = vadd.xlane.f32.xlu0 %v2018
        %v2020 = vpop.xlane.xlu0 %2019
        %v2021 = vsel %vm300, %v2013, 0.0
        %2022 = vadd.xlane.f32.xlu0 %v2021
        %v2023 = vpop.xlane.xlu0 %2022
        %v2024 = vsel %vm300, %v2014, 0.0
        %2025 = vadd.xlane.f32.xlu0 %v2024
        %v2026 = vpop.xlane.xlu0 %2025
        %v2027 = vmul.f32 %v2017, %v313
        %v2028 = vmul.f32 %v2020, %v313
        %v2029 = vmul.f32 %v2023, %v313
        %v2030 = vmul.f32 %v2026, %v313
        %v2031 = vsub.f32 %v2011, %v2027
        %v2032 = vsub.f32 %v2012, %v2028
        %v2033 = vsub.f32 %v2013, %v2029
        %v2034 = vsub.f32 %v2014, %v2030
        %v2035 = vmul.f32 %v2031, %v2031
        %v2036 = vmul.f32 %v2032, %v2032
        %v2037 = vmul.f32 %v2033, %v2033
        %v2038 = vmul.f32 %v2034, %v2034
        %v2039 = vsel %vm300, %v2035, 0.0
        %2040 = vadd.xlane.f32.xlu0 %v2039
        %v2041 = vpop.xlane.xlu0 %2040
        %v2042 = vsel %vm300, %v2036, 0.0
        %2043 = vadd.xlane.f32.xlu0 %v2042
        %v2044 = vpop.xlane.xlu0 %2043
        %v2045 = vsel %vm300, %v2037, 0.0
        %2046 = vadd.xlane.f32.xlu0 %v2045
        %v2047 = vpop.xlane.xlu0 %2046
        %v2048 = vsel %vm300, %v2038, 0.0
        %2049 = vadd.xlane.f32.xlu0 %v2048
        %v2050 = vpop.xlane.xlu0 %2049
        %v2051 = vmul.f32 %v2041, %v313
        %v2052 = vmul.f32 %v2044, %v313
        %v2053 = vmul.f32 %v2047, %v313
        %v2054 = vmul.f32 %v2050, %v313
        %v2055 = vadd.f32 %v2051, 1e-12
        %v2056 = vadd.f32 %v2052, 1e-12
        %v2057 = vadd.f32 %v2053, 1e-12
        %v2058 = vadd.f32 %v2054, 1e-12
        %v2059 = vrsqrt.pop %v2055
        %v2060 = vrsqrt.pop %v2056
        %v2061 = vrsqrt.pop %v2057
        %v2062 = vrsqrt.pop %v2058
        %v2063 = vmul.f32 %v2031, %v2059
        %v2064 = vmul.f32 %v2032, %v2060
        %v2065 = vmul.f32 %v2033, %v2061
        %v2066 = vmul.f32 %v2034, %v2062
        %v2067 = vlaneseq
        %v2068 = vshrl.u32 %v2067, 7
        %v2069 = vsub.s32 4, %v2068
        %v2070 = vrot.slane %v299, %v2069
        %v2071 = vmul.f32 %v2063, %v2070
        %v2072 = vmul.f32 %v2064, %v2070
        %v2073 = vmul.f32 %v2065, %v2070
        %v2074 = vmul.f32 %v2066, %v2070
        %v2075 = vlaneseq
        %v2076 = vshrl.u32 %v2075, 7
        %v2077 = vsub.s32 5, %v2076
        %v2078 = vrot.slane %v299, %v2077
        %v2079 = vadd.f32 %v2071, %v2078
        %v2080 = vadd.f32 %v2072, %v2078
        %v2081 = vadd.f32 %v2073, %v2078
        %v2082 = vadd.f32 %v2074, %v2078
        %v2083 = vmul.u32 %v371, 8
        %vm2084 = vcmp.eq.s32.totalorder %v164, %v2083
        %v2085 = vsel %vm2084, 1, 0
        %v2086 = vcvt.s32.f32 %v2085
        %v2088 = vsel %vm300, %v2086, 0
        %2090 = vmatprep.subr.mxu0 0.0
        %2091 = vmatpush1.msra.mxu0 %v2079
        %2092 = vmatprep.subr.mxu0 0.0
        %2093 = vmatpush1.msra.mxu0 %v2080
        %2094 = vmatprep.subr.mxu0 0.0
        %2095 = vmatpush1.msra.mxu0 %v2081
        %2096 = vmatprep.subr.mxu0 0.0
        %2097 = vmatpush1.msra.mxu0 %v2082
        %2098 = vmatprep.subr.mxu0 0.0
        %2099 = vmatpush1.msra.mxu0 0.0
        %2100 = vmatprep.subr.mxu0 0.0
        %2101 = vmatpush1.msra.mxu0 0.0
        %2102 = vmatprep.subr.mxu0 0.0
        %2103 = vmatpush1.msra.mxu0 0.0
        %2104 = vmatprep.subr.mxu0 0.0
        %2105 = vmatpush1.msra.mxu0 0.0
        %2106 = vmatprep.subr.mxu0 0.0
        %2107 = vmatpush1.msra.mxu0 0.0
        %2108 = vmatprep.subr.mxu0 0.0
        %2109 = vmatpush1.msra.mxu0 0.0
        %2110 = vmatprep.subr.mxu0 0.0
        %2111 = vmatpush1.msra.mxu0 0.0
        %2112 = vmatprep.subr.mxu0 0.0
        %2113 = vmatpush1.msra.mxu0 0.0
        %2114 = vmatprep.subr.mxu0 0.0
        %2115 = vmatpush1.msra.mxu0 0.0
        %2116 = vmatprep.subr.mxu0 0.0
        %2117 = vmatpush1.msra.mxu0 0.0
        %2118 = vmatprep.subr.mxu0 0.0
        %2119 = vmatpush1.msra.mxu0 0.0
        %2120 = vmatprep.subr.mxu0 0.0
        %2121 = vmatpush1.msra.mxu0 0.0
        %2122 = vmatprep.subr.mxu0 0.0
        %2123 = vmatpush1.msra.mxu0 0.0
        %2124 = vmatprep.subr.mxu0 0.0
        %2125 = vmatpush1.msra.mxu0 0.0
        %2126 = vmatprep.subr.mxu0 0.0
        %2127 = vmatpush1.msra.mxu0 0.0
        %2128 = vmatprep.subr.mxu0 0.0
        %2129 = vmatpush1.msra.mxu0 0.0
        %2130 = vmatprep.subr.mxu0 0.0
        %2131 = vmatpush1.msra.mxu0 0.0
        %2132 = vmatprep.subr.mxu0 0.0
        %2133 = vmatpush1.msra.mxu0 0.0
        %2134 = vmatprep.subr.mxu0 0.0
        %2135 = vmatpush1.msra.mxu0 0.0
        %2136 = vmatprep.subr.mxu0 0.0
        %2137 = vmatpush1.msra.mxu0 0.0
        %2138 = vmatprep.subr.mxu0 0.0
        %2139 = vmatpush1.msra.mxu0 0.0
        %2140 = vmatprep.subr.mxu0 0.0
        %2141 = vmatpush1.msra.mxu0 0.0
        %2142 = vmatprep.subr.mxu0 0.0
        %2143 = vmatpush1.msra.mxu0 0.0
        %2144 = vmatprep.subr.mxu0 0.0
        %2145 = vmatpush1.msra.mxu0 0.0
        %2146 = vmatprep.subr.mxu0 0.0
        %2147 = vmatpush1.msra.mxu0 0.0
        %2148 = vmatprep.subr.mxu0 0.0
        %2149 = vmatpush1.msra.mxu0 0.0
        %2150 = vmatprep.subr.mxu0 0.0
        %2151 = vmatpush1.msra.mxu0 0.0
        %2152 = vmatprep.subr.mxu0 0.0
        %2153 = vmatpush1.msra.mxu0 0.0
        %2154 = vmatprep.mubr.f32.mxu0 0.0
        %2155 = vmatmul.mubr.f32.gmra.mrb[0].mxu0 %v2088
        %v2156 = vpop.f32.mrb[0].mxu0
        %v2157 = vadd.f32 0.0, %v2156
        %v2158 = vpop.f32.mrb[0].mxu0
        %2159 = vdwg.mxu0
        %v2160 = vld [vmem:[#allocation2 + $0x1b0] sm:$0xff]
        %v2161 = vld [vmem:[#allocation2 + $0x1b8] sm:$0xff]
        %v2162 = vld [vmem:[#allocation2 + $0x1c0] sm:$0xff]
        %v2163 = vld [vmem:[#allocation2 + $0x1c8] sm:$0xff]
        %v2164 = vlaneseq
        %v2165 = vshrl.u32 %v2164, 7
        %v2166 = vsub.s32 2, %v2165
        %v2167 = vrot.slane %v1760, %v2166
        %v2169 = vsel %vm300, %v2157, 0
        %2171 = vmatprep.subr.mxu0 0.0
        %2172 = vmatpush1.msra.mxu0 %v2160
        %2173 = vmatprep.subr.mxu0 0.0
        %2174 = vmatpush1.msra.mxu0 %v2161
        %2175 = vmatprep.subr.mxu0 0.0
        %2176 = vmatpush1.msra.mxu0 %v2162
        %2177 = vmatprep.subr.mxu0 0.0
        %2178 = vmatpush1.msra.mxu0 %v2163
        %2179 = vmatprep.subr.mxu0 0.0
        %2180 = vmatpush1.msra.mxu0 0.0
        %2181 = vmatprep.subr.mxu0 0.0
        %2182 = vmatpush1.msra.mxu0 0.0
        %2183 = vmatprep.subr.mxu0 0.0
        %2184 = vmatpush1.msra.mxu0 0.0
        %2185 = vmatprep.subr.mxu0 0.0
        %2186 = vmatpush1.msra.mxu0 0.0
        %2187 = vmatprep.subr.mxu0 0.0
        %2188 = vmatpush1.msra.mxu0 0.0
        %2189 = vmatprep.subr.mxu0 0.0
        %2190 = vmatpush1.msra.mxu0 0.0
        %2191 = vmatprep.subr.mxu0 0.0
        %2192 = vmatpush1.msra.mxu0 0.0
        %2193 = vmatprep.subr.mxu0 0.0
        %2194 = vmatpush1.msra.mxu0 0.0
        %2195 = vmatprep.subr.mxu0 0.0
        %2196 = vmatpush1.msra.mxu0 0.0
        %2197 = vmatprep.subr.mxu0 0.0
        %2198 = vmatpush1.msra.mxu0 0.0
        %2199 = vmatprep.subr.mxu0 0.0
        %2200 = vmatpush1.msra.mxu0 0.0
        %2201 = vmatprep.subr.mxu0 0.0
        %2202 = vmatpush1.msra.mxu0 0.0
        %2203 = vmatprep.subr.mxu0 0.0
        %2204 = vmatpush1.msra.mxu0 0.0
        %2205 = vmatprep.subr.mxu0 0.0
        %2206 = vmatpush1.msra.mxu0 0.0
        %2207 = vmatprep.subr.mxu0 0.0
        %2208 = vmatpush1.msra.mxu0 0.0
        %2209 = vmatprep.subr.mxu0 0.0
        %2210 = vmatpush1.msra.mxu0 0.0
        %2211 = vmatprep.subr.mxu0 0.0
        %2212 = vmatpush1.msra.mxu0 0.0
        %2213 = vmatprep.subr.mxu0 0.0
        %2214 = vmatpush1.msra.mxu0 0.0
        %2215 = vmatprep.subr.mxu0 0.0
        %2216 = vmatpush1.msra.mxu0 0.0
        %2217 = vmatprep.subr.mxu0 0.0
        %2218 = vmatpush1.msra.mxu0 0.0
        %2219 = vmatprep.subr.mxu0 0.0
        %2220 = vmatpush1.msra.mxu0 0.0
        %2221 = vmatprep.subr.mxu0 0.0
        %2222 = vmatpush1.msra.mxu0 0.0
        %2223 = vmatprep.subr.mxu0 0.0
        %2224 = vmatpush1.msra.mxu0 0.0
        %2225 = vmatprep.subr.mxu0 0.0
        %2226 = vmatpush1.msra.mxu0 0.0
        %2227 = vmatprep.subr.mxu0 0.0
        %2228 = vmatpush1.msra.mxu0 0.0
        %2229 = vmatprep.subr.mxu0 0.0
        %2230 = vmatpush1.msra.mxu0 0.0
        %2231 = vmatprep.subr.mxu0 0.0
        %2232 = vmatpush1.msra.mxu0 0.0
        %2233 = vmatprep.subr.mxu0 0.0
        %2234 = vmatpush1.msra.mxu0 0.0
        %2235 = vmatprep.mubr.f32.mxu0 0.0
        %2236 = vmatmul.mubr.f32.gmra.mrb[0].mxu0 %v2169
        %v2237 = vpop.f32.mrb[0].mxu0
        %v2238 = vadd.f32 %v2167, %v2237
        %v2239 = vpop.f32.mrb[0].mxu0
        %2240 = vdwg.mxu0
        %v2241 = vld [vmem:[#allocation2 + $0x1d0] sm:$0xff]
        %v2242 = vld [vmem:[#allocation2 + $0x1d8] sm:$0xff]
        %v2244 = vsel %vm686, 0.0, 0
        %2246 = vmatprep.subr.mxu0 0.0
        %2247 = vmatpush1.msra.mxu0 %v2241
        %2248 = vmatprep.subr.mxu0 0.0
        %2249 = vmatpush1.msra.mxu0 %v2242
        %2250 = vmatprep.subr.mxu0 0.0
        %2251 = vmatpush1.msra.mxu0 0.0
        %2252 = vmatprep.subr.mxu0 0.0
        %2253 = vmatpush1.msra.mxu0 0.0
        %2254 = vmatprep.subr.mxu0 0.0
        %2255 = vmatpush1.msra.mxu0 0.0
        %2256 = vmatprep.subr.mxu0 0.0
        %2257 = vmatpush1.msra.mxu0 0.0
        %2258 = vmatprep.subr.mxu0 0.0
        %2259 = vmatpush1.msra.mxu0 0.0
        %2260 = vmatprep.subr.mxu0 0.0
        %2261 = vmatpush1.msra.mxu0 0.0
        %2262 = vmatprep.subr.mxu0 0.0
        %2263 = vmatpush1.msra.mxu0 0.0
        %2264 = vmatprep.subr.mxu0 0.0
        %2265 = vmatpush1.msra.mxu0 0.0
        %2266 = vmatprep.subr.mxu0 0.0
        %2267 = vmatpush1.msra.mxu0 0.0
        %2268 = vmatprep.subr.mxu0 0.0
        %2269 = vmatpush1.msra.mxu0 0.0
        %2270 = vmatprep.subr.mxu0 0.0
        %2271 = vmatpush1.msra.mxu0 0.0
        %2272 = vmatprep.subr.mxu0 0.0
        %2273 = vmatpush1.msra.mxu0 0.0
        %2274 = vmatprep.subr.mxu0 0.0
        %2275 = vmatpush1.msra.mxu0 0.0
        %2276 = vmatprep.subr.mxu0 0.0
        %2277 = vmatpush1.msra.mxu0 0.0
        %2278 = vmatprep.subr.mxu0 0.0
        %2279 = vmatpush1.msra.mxu0 0.0
        %2280 = vmatprep.subr.mxu0 0.0
        %2281 = vmatpush1.msra.mxu0 0.0
        %2282 = vmatprep.subr.mxu0 0.0
        %2283 = vmatpush1.msra.mxu0 0.0
        %2284 = vmatprep.subr.mxu0 0.0
        %2285 = vmatpush1.msra.mxu0 0.0
        %2286 = vmatprep.subr.mxu0 0.0
        %2287 = vmatpush1.msra.mxu0 0.0
        %2288 = vmatprep.subr.mxu0 0.0
        %2289 = vmatpush1.msra.mxu0 0.0
        %2290 = vmatprep.subr.mxu0 0.0
        %2291 = vmatpush1.msra.mxu0 0.0
        %2292 = vmatprep.subr.mxu0 0.0
        %2293 = vmatpush1.msra.mxu0 0.0
        %2294 = vmatprep.subr.mxu0 0.0
        %2295 = vmatpush1.msra.mxu0 0.0
        %2296 = vmatprep.subr.mxu0 0.0
        %2297 = vmatpush1.msra.mxu0 0.0
        %2298 = vmatprep.subr.mxu0 0.0
        %2299 = vmatpush1.msra.mxu0 0.0
        %2300 = vmatprep.subr.mxu0 0.0
        %2301 = vmatpush1.msra.mxu0 0.0
        %2302 = vmatprep.subr.mxu0 0.0
        %2303 = vmatpush1.msra.mxu0 0.0
        %2304 = vmatprep.subr.mxu0 0.0
        %2305 = vmatpush1.msra.mxu0 0.0
        %2306 = vmatprep.subr.mxu0 0.0
        %2307 = vmatpush1.msra.mxu0 0.0
        %2308 = vmatprep.subr.mxu0 0.0
        %2309 = vmatpush1.msra.mxu0 0.0
        %2310 = vmatprep.mubr.f32.mxu0 0.0
        %2311 = vmatmul.mubr.f32.gmra.mrb[0].mxu0 %v2244
        %v2312 = vpop.f32.mrb[0].mxu0
        %v2313 = vadd.f32 0.0, %v2312
        %v2314 = vpop.f32.mrb[0].mxu0
        %2315 = vdwg.mxu0
        %v2316 = vadd.f32 %v2238, %v2313
        %v2317 = vtanh.pop %v2316
        %v2318 = vadd.f32 %v2317, 1.0
        %v2319 = vmul.f32 %v2318, 0.5
        %v2320 = vmul.f32 %v2319, 0.0
        %2322 = vrot.lane.b32.xlu0 %v2317, 96
        %v2323 = vpop.permute.xlu0 %2322
        %v2325 = vmul.f32 %v2319, %v2323
        %2327 = vrot.lane.b32.xlu0 %v2325, 16
        %v2328 = vpop.permute.xlu0 %2327
        %v2330 = vadd.f32 %v2320, %v2328
        %v2331 = vtanh.pop %v2330
        %2333 = vrot.lane.b32.xlu0 %v2331, 32
        %v2334 = vpop.permute.xlu0 %2333
        %v2336 = vmul.f32 %v2319, %v2334
        %2338 = vrot.lane.b32.xlu0 %v2336, 80
        %v2339 = vpop.permute.xlu0 %2338
        %v2340 = vsel %vm686, %v2339, 0
        %2342 = vmatprep.subr.mxu0 0.0
        %2343 = vmatpush1.msra.mxu0 %v2241
        %2344 = vmatprep.subr.mxu0 0.0
        %2345 = vmatpush1.msra.mxu0 %v2242
        %2346 = vmatprep.subr.mxu0 0.0
        %2347 = vmatpush1.msra.mxu0 0.0
        %2348 = vmatprep.subr.mxu0 0.0
        %2349 = vmatpush1.msra.mxu0 0.0
        %2350 = vmatprep.subr.mxu0 0.0
        %2351 = vmatpush1.msra.mxu0 0.0
        %2352 = vmatprep.subr.mxu0 0.0
        %2353 = vmatpush1.msra.mxu0 0.0
        %2354 = vmatprep.subr.mxu0 0.0
        %2355 = vmatpush1.msra.mxu0 0.0
        %2356 = vmatprep.subr.mxu0 0.0
        %2357 = vmatpush1.msra.mxu0 0.0
        %2358 = vmatprep.subr.mxu0 0.0
        %2359 = vmatpush1.msra.mxu0 0.0
        %2360 = vmatprep.subr.mxu0 0.0
        %2361 = vmatpush1.msra.mxu0 0.0
        %2362 = vmatprep.subr.mxu0 0.0
        %2363 = vmatpush1.msra.mxu0 0.0
        %2364 = vmatprep.subr.mxu0 0.0
        %2365 = vmatpush1.msra.mxu0 0.0
        %2366 = vmatprep.subr.mxu0 0.0
        %2367 = vmatpush1.msra.mxu0 0.0
        %2368 = vmatprep.subr.mxu0 0.0
        %2369 = vmatpush1.msra.mxu0 0.0
        %2370 = vmatprep.subr.mxu0 0.0
        %2371 = vmatpush1.msra.mxu0 0.0
        %2372 = vmatprep.subr.mxu0 0.0
        %2373 = vmatpush1.msra.mxu0 0.0
        %2374 = vmatprep.subr.mxu0 0.0
        %2375 = vmatpush1.msra.mxu0 0.0
        %2376 = vmatprep.subr.mxu0 0.0
        %2377 = vmatpush1.msra.mxu0 0.0
        %2378 = vmatprep.subr.mxu0 0.0
        %2379 = vmatpush1.msra.mxu0 0.0
        %2380 = vmatprep.subr.mxu0 0.0
        %2381 = vmatpush1.msra.mxu0 0.0
        %2382 = vmatprep.subr.mxu0 0.0
        %2383 = vmatpush1.msra.mxu0 0.0
        %2384 = vmatprep.subr.mxu0 0.0
        %2385 = vmatpush1.msra.mxu0 0.0
        %2386 = vmatprep.subr.mxu0 0.0
        %2387 = vmatpush1.msra.mxu0 0.0
        %2388 = vmatprep.subr.mxu0 0.0
        %2389 = vmatpush1.msra.mxu0 0.0
        %2390 = vmatprep.subr.mxu0 0.0
        %2391 = vmatpush1.msra.mxu0 0.0
        %2392 = vmatprep.subr.mxu0 0.0
        %2393 = vmatpush1.msra.mxu0 0.0
        %2394 = vmatprep.subr.mxu0 0.0
        %2395 = vmatpush1.msra.mxu0 0.0
        %2396 = vmatprep.subr.mxu0 0.0
        %2397 = vmatpush1.msra.mxu0 0.0
        %2398 = vmatprep.subr.mxu0 0.0
        %2399 = vmatpush1.msra.mxu0 0.0
        %2400 = vmatprep.subr.mxu0 0.0
        %2401 = vmatpush1.msra.mxu0 0.0
        %2402 = vmatprep.subr.mxu0 0.0
        %2403 = vmatpush1.msra.mxu0 0.0
        %2404 = vmatprep.subr.mxu0 0.0
        %2405 = vmatpush1.msra.mxu0 0.0
        %2406 = vmatprep.mubr.f32.mxu0 0.0
        %2407 = vmatmul.mubr.f32.gmra.mrb[0].mxu0 %v2340
        %v2408 = vpop.f32.mrb[0].mxu0
        %v2409 = vadd.f32 0.0, %v2408
        %v2410 = vpop.f32.mrb[0].mxu0
        %2411 = vdwg.mxu0
        %v2413 = vrot.slane %v2409, 7
        %v2415 = vadd.f32 %v2238, %v2413
        %v2416 = vtanh.pop %v2415
        %v2417 = vadd.f32 %v2416, 1.0
        %v2418 = vmul.f32 %v2417, 0.5
        %v2420 = vrot.slane %v2330, 7
        %v2422 = vmul.f32 %v2418, %v2420
        %2424 = vrot.lane.b32.xlu0 %v2416, 96
        %v2425 = vpop.permute.xlu0 %2424
        %v2427 = vmul.f32 %v2418, %v2425
        %2429 = vrot.lane.b32.xlu0 %v2427, 16
        %v2430 = vpop.permute.xlu0 %2429
        %v2432 = vadd.f32 %v2422, %v2430
        %v2433 = vtanh.pop %v2432
        %2435 = vrot.lane.b32.xlu0 %v2433, 32
        %v2436 = vpop.permute.xlu0 %2435
        %v2438 = vmul.f32 %v2418, %v2436
        %v2440 = vrot.slane %v2438, 1
        %2441 = vrot.lane.b32.xlu0 %v2440, 80
        %v2442 = vpop.permute.xlu0 %2441
        %v2443 = vsel %vm686, %v2442, 0
        %2445 = vmatprep.subr.mxu0 0.0
        %2446 = vmatpush1.msra.mxu0 %v2241
        %2447 = vmatprep.subr.mxu0 0.0
        %2448 = vmatpush1.msra.mxu0 %v2242
        %2449 = vmatprep.subr.mxu0 0.0
        %2450 = vmatpush1.msra.mxu0 0.0
        %2451 = vmatprep.subr.mxu0 0.0
        %2452 = vmatpush1.msra.mxu0 0.0
        %2453 = vmatprep.subr.mxu0 0.0
        %2454 = vmatpush1.msra.mxu0 0.0
        %2455 = vmatprep.subr.mxu0 0.0
        %2456 = vmatpush1.msra.mxu0 0.0
        %2457 = vmatprep.subr.mxu0 0.0
        %2458 = vmatpush1.msra.mxu0 0.0
        %2459 = vmatprep.subr.mxu0 0.0
        %2460 = vmatpush1.msra.mxu0 0.0
        %2461 = vmatprep.subr.mxu0 0.0
        %2462 = vmatpush1.msra.mxu0 0.0
        %2463 = vmatprep.subr.mxu0 0.0
        %2464 = vmatpush1.msra.mxu0 0.0
        %2465 = vmatprep.subr.mxu0 0.0
        %2466 = vmatpush1.msra.mxu0 0.0
        %2467 = vmatprep.subr.mxu0 0.0
        %2468 = vmatpush1.msra.mxu0 0.0
        %2469 = vmatprep.subr.mxu0 0.0
        %2470 = vmatpush1.msra.mxu0 0.0
        %2471 = vmatprep.subr.mxu0 0.0
        %2472 = vmatpush1.msra.mxu0 0.0
        %2473 = vmatprep.subr.mxu0 0.0
        %2474 = vmatpush1.msra.mxu0 0.0
        %2475 = vmatprep.subr.mxu0 0.0
        %2476 = vmatpush1.msra.mxu0 0.0
        %2477 = vmatprep.subr.mxu0 0.0
        %2478 = vmatpush1.msra.mxu0 0.0
        %2479 = vmatprep.subr.mxu0 0.0
        %2480 = vmatpush1.msra.mxu0 0.0
        %2481 = vmatprep.subr.mxu0 0.0
        %2482 = vmatpush1.msra.mxu0 0.0
        %2483 = vmatprep.subr.mxu0 0.0
        %2484 = vmatpush1.msra.mxu0 0.0
        %2485 = vmatprep.subr.mxu0 0.0
        %2486 = vmatpush1.msra.mxu0 0.0
        %2487 = vmatprep.subr.mxu0 0.0
        %2488 = vmatpush1.msra.mxu0 0.0
        %2489 = vmatprep.subr.mxu0 0.0
        %2490 = vmatpush1.msra.mxu0 0.0
        %2491 = vmatprep.subr.mxu0 0.0
        %2492 = vmatpush1.msra.mxu0 0.0
        %2493 = vmatprep.subr.mxu0 0.0
        %2494 = vmatpush1.msra.mxu0 0.0
        %2495 = vmatprep.subr.mxu0 0.0
        %2496 = vmatpush1.msra.mxu0 0.0
        %2497 = vmatprep.subr.mxu0 0.0
        %2498 = vmatpush1.msra.mxu0 0.0
        %2499 = vmatprep.subr.mxu0 0.0
        %2500 = vmatpush1.msra.mxu0 0.0
        %2501 = vmatprep.subr.mxu0 0.0
        %2502 = vmatpush1.msra.mxu0 0.0
        %2503 = vmatprep.subr.mxu0 0.0
        %2504 = vmatpush1.msra.mxu0 0.0
        %2505 = vmatprep.subr.mxu0 0.0
        %2506 = vmatpush1.msra.mxu0 0.0
        %2507 = vmatprep.subr.mxu0 0.0
        %2508 = vmatpush1.msra.mxu0 0.0
        %2509 = vmatprep.mubr.f32.mxu0 0.0
        %2510 = vmatmul.mubr.f32.gmra.mrb[0].mxu0 %v2443
        %v2511 = vpop.f32.mrb[0].mxu0
        %v2512 = vadd.f32 0.0, %v2511
        %v2513 = vpop.f32.mrb[0].mxu0
        %2514 = vdwg.mxu0
        %v2516 = vrot.slane %v2512, 6
        %v2518 = vadd.f32 %v2238, %v2516
        %v2519 = vtanh.pop %v2518
        %v2520 = vadd.f32 %v2519, 1.0
        %v2521 = vmul.f32 %v2520, 0.5
        %v2523 = vrot.slane %v2432, 7
        %v2525 = vmul.f32 %v2521, %v2523
        %2527 = vrot.lane.b32.xlu0 %v2519, 96
        %v2528 = vpop.permute.xlu0 %2527
        %v2530 = vmul.f32 %v2521, %v2528
        %2532 = vrot.lane.b32.xlu0 %v2530, 16
        %v2533 = vpop.permute.xlu0 %2532
        %v2535 = vadd.f32 %v2525, %v2533
        %v2536 = vtanh.pop %v2535
        %2538 = vrot.lane.b32.xlu0 %v2536, 32
        %v2539 = vpop.permute.xlu0 %2538
        %v2541 = vmul.f32 %v2521, %v2539
        %v2543 = vrot.slane %v2541, 2
        %2544 = vrot.lane.b32.xlu0 %v2543, 80
        %v2545 = vpop.permute.xlu0 %2544
        %v2546 = vsel %vm686, %v2545, 0
        %2548 = vmatprep.subr.mxu0 0.0
        %2549 = vmatpush1.msra.mxu0 %v2241
        %2550 = vmatprep.subr.mxu0 0.0
        %2551 = vmatpush1.msra.mxu0 %v2242
        %2552 = vmatprep.subr.mxu0 0.0
        %2553 = vmatpush1.msra.mxu0 0.0
        %2554 = vmatprep.subr.mxu0 0.0
        %2555 = vmatpush1.msra.mxu0 0.0
        %2556 = vmatprep.subr.mxu0 0.0
        %2557 = vmatpush1.msra.mxu0 0.0
        %2558 = vmatprep.subr.mxu0 0.0
        %2559 = vmatpush1.msra.mxu0 0.0
        %2560 = vmatprep.subr.mxu0 0.0
        %2561 = vmatpush1.msra.mxu0 0.0
        %2562 = vmatprep.subr.mxu0 0.0
        %2563 = vmatpush1.msra.mxu0 0.0
        %2564 = vmatprep.subr.mxu0 0.0
        %2565 = vmatpush1.msra.mxu0 0.0
        %2566 = vmatprep.subr.mxu0 0.0
        %2567 = vmatpush1.msra.mxu0 0.0
        %2568 = vmatprep.subr.mxu0 0.0
        %2569 = vmatpush1.msra.mxu0 0.0
        %2570 = vmatprep.subr.mxu0 0.0
        %2571 = vmatpush1.msra.mxu0 0.0
        %2572 = vmatprep.subr.mxu0 0.0
        %2573 = vmatpush1.msra.mxu0 0.0
        %2574 = vmatprep.subr.mxu0 0.0
        %2575 = vmatpush1.msra.mxu0 0.0
        %2576 = vmatprep.subr.mxu0 0.0
        %2577 = vmatpush1.msra.mxu0 0.0
        %2578 = vmatprep.subr.mxu0 0.0
        %2579 = vmatpush1.msra.mxu0 0.0
        %2580 = vmatprep.subr.mxu0 0.0
        %2581 = vmatpush1.msra.mxu0 0.0
        %2582 = vmatprep.subr.mxu0 0.0
        %2583 = vmatpush1.msra.mxu0 0.0
        %2584 = vmatprep.subr.mxu0 0.0
        %2585 = vmatpush1.msra.mxu0 0.0
        %2586 = vmatprep.subr.mxu0 0.0
        %2587 = vmatpush1.msra.mxu0 0.0
        %2588 = vmatprep.subr.mxu0 0.0
        %2589 = vmatpush1.msra.mxu0 0.0
        %2590 = vmatprep.subr.mxu0 0.0
        %2591 = vmatpush1.msra.mxu0 0.0
        %2592 = vmatprep.subr.mxu0 0.0
        %2593 = vmatpush1.msra.mxu0 0.0
        %2594 = vmatprep.subr.mxu0 0.0
        %2595 = vmatpush1.msra.mxu0 0.0
        %2596 = vmatprep.subr.mxu0 0.0
        %2597 = vmatpush1.msra.mxu0 0.0
        %2598 = vmatprep.subr.mxu0 0.0
        %2599 = vmatpush1.msra.mxu0 0.0
        %2600 = vmatprep.subr.mxu0 0.0
        %2601 = vmatpush1.msra.mxu0 0.0
        %2602 = vmatprep.subr.mxu0 0.0
        %2603 = vmatpush1.msra.mxu0 0.0
        %2604 = vmatprep.subr.mxu0 0.0
        %2605 = vmatpush1.msra.mxu0 0.0
        %2606 = vmatprep.subr.mxu0 0.0
        %2607 = vmatpush1.msra.mxu0 0.0
        %2608 = vmatprep.subr.mxu0 0.0
        %2609 = vmatpush1.msra.mxu0 0.0
        %2610 = vmatprep.subr.mxu0 0.0
        %2611 = vmatpush1.msra.mxu0 0.0
        %2612 = vmatprep.mubr.f32.mxu0 0.0
        %2613 = vmatmul.mubr.f32.gmra.mrb[0].mxu0 %v2546
        %v2614 = vpop.f32.mrb[0].mxu0
        %v2615 = vadd.f32 0.0, %v2614
        %v2616 = vpop.f32.mrb[0].mxu0
        %2617 = vdwg.mxu0
        %v2619 = vrot.slane %v2615, 5
        %v2621 = vadd.f32 %v2238, %v2619
        %v2622 = vtanh.pop %v2621
        %v2623 = vadd.f32 %v2622, 1.0
        %v2624 = vmul.f32 %v2623, 0.5
        %v2626 = vrot.slane %v2535, 7
        %v2628 = vmul.f32 %v2624, %v2626
        %2630 = vrot.lane.b32.xlu0 %v2622, 96
        %v2631 = vpop.permute.xlu0 %2630
        %v2633 = vmul.f32 %v2624, %v2631
        %2635 = vrot.lane.b32.xlu0 %v2633, 16
        %v2636 = vpop.permute.xlu0 %2635
        %v2638 = vadd.f32 %v2628, %v2636
        %v2639 = vtanh.pop %v2638
        %2641 = vrot.lane.b32.xlu0 %v2639, 32
        %v2642 = vpop.permute.xlu0 %2641
        %v2644 = vmul.f32 %v2624, %v2642
        %v2645 = vmax.f32 %v2644, 0.0
        %v2646 = vld [vmem:[#allocation2 + $0x1e0] sm:$0xff]
        %v2647 = vld [vmem:[#allocation2 + $0x1e8] sm:$0xff]
        %v2649 = vrot.slane %v2645, 3
        %2650 = vrot.lane.b32.xlu0 %v2649, 80
        %v2651 = vpop.permute.xlu0 %2650
        %v2653 = vrot.slane %v1760, 3
        %v2655 = vsel %vm686, %v2651, 0
        %2657 = vmatprep.subr.mxu0 0.0
        %2658 = vmatpush1.msra.mxu0 %v2646
        %2659 = vmatprep.subr.mxu0 0.0
        %2660 = vmatpush1.msra.mxu0 %v2647
        %2661 = vmatprep.subr.mxu0 0.0
        %2662 = vmatpush1.msra.mxu0 0.0
        %2663 = vmatprep.subr.mxu0 0.0
        %2664 = vmatpush1.msra.mxu0 0.0
        %2665 = vmatprep.subr.mxu0 0.0
        %2666 = vmatpush1.msra.mxu0 0.0
        %2667 = vmatprep.subr.mxu0 0.0
        %2668 = vmatpush1.msra.mxu0 0.0
        %2669 = vmatprep.subr.mxu0 0.0
        %2670 = vmatpush1.msra.mxu0 0.0
        %2671 = vmatprep.subr.mxu0 0.0
        %2672 = vmatpush1.msra.mxu0 0.0
        %2673 = vmatprep.subr.mxu0 0.0
        %2674 = vmatpush1.msra.mxu0 0.0
        %2675 = vmatprep.subr.mxu0 0.0
        %2676 = vmatpush1.msra.mxu0 0.0
        %2677 = vmatprep.subr.mxu0 0.0
        %2678 = vmatpush1.msra.mxu0 0.0
        %2679 = vmatprep.subr.mxu0 0.0
        %2680 = vmatpush1.msra.mxu0 0.0
        %2681 = vmatprep.subr.mxu0 0.0
        %2682 = vmatpush1.msra.mxu0 0.0
        %2683 = vmatprep.subr.mxu0 0.0
        %2684 = vmatpush1.msra.mxu0 0.0
        %2685 = vmatprep.subr.mxu0 0.0
        %2686 = vmatpush1.msra.mxu0 0.0
        %2687 = vmatprep.subr.mxu0 0.0
        %2688 = vmatpush1.msra.mxu0 0.0
        %2689 = vmatprep.subr.mxu0 0.0
        %2690 = vmatpush1.msra.mxu0 0.0
        %2691 = vmatprep.subr.mxu0 0.0
        %2692 = vmatpush1.msra.mxu0 0.0
        %2693 = vmatprep.subr.mxu0 0.0
        %2694 = vmatpush1.msra.mxu0 0.0
        %2695 = vmatprep.subr.mxu0 0.0
        %2696 = vmatpush1.msra.mxu0 0.0
        %2697 = vmatprep.subr.mxu0 0.0
        %2698 = vmatpush1.msra.mxu0 0.0
        %2699 = vmatprep.subr.mxu0 0.0
        %2700 = vmatpush1.msra.mxu0 0.0
        %2701 = vmatprep.subr.mxu0 0.0
        %2702 = vmatpush1.msra.mxu0 0.0
        %2703 = vmatprep.subr.mxu0 0.0
        %2704 = vmatpush1.msra.mxu0 0.0
        %2705 = vmatprep.subr.mxu0 0.0
        %2706 = vmatpush1.msra.mxu0 0.0
        %2707 = vmatprep.subr.mxu0 0.0
        %2708 = vmatpush1.msra.mxu0 0.0
        %2709 = vmatprep.subr.mxu0 0.0
        %2710 = vmatpush1.msra.mxu0 0.0
        %2711 = vmatprep.subr.mxu0 0.0
        %2712 = vmatpush1.msra.mxu0 0.0
        %2713 = vmatprep.subr.mxu0 0.0
        %2714 = vmatpush1.msra.mxu0 0.0
        %2715 = vmatprep.subr.mxu0 0.0
        %2716 = vmatpush1.msra.mxu0 0.0
        %2717 = vmatprep.subr.mxu0 0.0
        %2718 = vmatpush1.msra.mxu0 0.0
        %2719 = vmatprep.subr.mxu0 0.0
        %2720 = vmatpush1.msra.mxu0 0.0
        %2721 = vmatprep.mubr.f32.mxu0 0.0
        %2722 = vmatmul.mubr.f32.gmra.mrb[0].mxu0 %v2655
        %v2723 = vpop.f32.mrb[0].mxu0
        %v2724 = vadd.f32 %v2653, %v2723
        %v2725 = vpop.f32.mrb[0].mxu0
        %2726 = vdwg.mxu0
        %v2727 = vlaneseq
        %v2728 = vshrl.u32 %v2727, 7
        %v2729 = vsub.s32 0, %v2728
        %v2730 = vrot.slane %v2724, %v2729
        %2731 = vst [vmem:[%s156] sm:$0xff] %v2730
        %p2732 = scmp.lt.s32.totalorder %s14, 1
        %s2733 = scalar_select %p2732, %s14, 1
        %s2734 = smul.addr %s2733, 8
        %s2735 = scalar_lea.vmem %s2, %s2734
        // Predicated region
        $region33: #{docbert_forward.1} parent=27 // pred_check
          %p2736 = pneg %p79
        $region34: #{docbert_forward.1} parent=27 // pred_check_branch
          %2738 = sbr.rel (%p2736) target = $region36
        $region35: #{docbert_forward.1} parent=27 // pred_region
          _
        $region36: #{docbert_forward.1} parent=27 // pred_fallthru
          _
      $region28: #{docbert_forward.1} parent=5 // pred_fallthru
        _
      %p2739 = scmp.le.s32.totalorder 2, %s9
      // Predicated region
      $region37: #{docbert_forward.1} parent=5 // pred_check
        %p2740 = pneg %p2739
      $region38: #{docbert_forward.1} parent=5 // pred_check_branch
        %2742 = sbr.rel (%p2740) target = $region40
      $region39: #{docbert_forward.1} parent=5 // pred_region
        %s2743 = ssub.s32 %s9, 2
        // Predicated region
        $region41: #{docbert_forward.1} parent=39 // pred_check
          %p2744 = pneg %p85
        $region42: #{docbert_forward.1} parent=39 // pred_check_branch
          %2746 = sbr.rel (%p2744) target = $region44
        $region43: #{docbert_forward.1} parent=39 // pred_region
          %p2747 = scmp.lt.s32.totalorder %s15, 1
          %s2748 = scalar_select %p2747, %s15, 1
          %s2749 = smul.addr %s2748, 8
          %s2750 = scalar_lea.vmem %s2, %s2749
        $region44: #{docbert_forward.1} parent=39 // pred_fallthru
          _
      $region40: #{docbert_forward.1} parent=5 // pred_fallthru
        _
    $region6: #{docbert_forward.1} parent=1 // loop_footer
      %s13 = sadd.s32 1, %s9
    $region7: #{docbert_forward.1} parent=1 // loop_footer_branch
      %8 = sbr.rel target = $region3
    $region8: #{docbert_forward.1} parent=1 // loop_exit
      _
    %2751 = vsyncpa [#allocation3], 1
    %s2752 = scalar_lea.sflag [#allocation3], 1
    %2753 = vsyncpa %s2752, 1

</llo_original>
